<compile_context>
chip_gen: v7x
topology: tpu7x:2x2x1
jax: 0.10.0
libtpu: 0.0.40
codegen_flags: <defaults>
</compile_context>

<pallas_src>
import functools

import jax
import jax.numpy as jnp
from jax.experimental import pallas as pl
from jax.experimental.pallas import tpu as pltpu


_VMEM_LIMIT_BYTES = 40 * 1024 * 1024  # <= ~40 MiB so the same tiling fits v7x
_BN_EPS = 1e-5


# ----------------------------------------------------------------------------
# Fused ConvBlock kernel: one grid step == one batch image.
# ----------------------------------------------------------------------------
def _convblock_kernel(H, W, Cin, Cmid, Cout,
                      x_ref, w1_ref, w2_ref, s1_ref, t1_ref, s2_ref, t2_ref,
                      b2_ref, o_ref, a1_ref, h_ref):
    # x_ref : (1, H, W, Cin)     bf16   input image
    # w1_ref: (9*Cin, Cmid)      bf16   conv1 weights, rows = (dy, dx, ci)
    # w2_ref: (9*Cmid, Cout)     bf16   conv2 weights
    # s1/t1 : (1, Cin)           f32    folded BN1 scale / shift
    # s2/t2 : (1, Cmid)          f32    folded BN2 scale / shift (+conv1 bias)
    # b2    : (1, Cout)          f32    conv2 bias
    # o_ref : (1, H, W, Cout)    f32    block output
    # a1_ref: (H+2, W+2, Cin)    f32    scratch: padded activated input
    # h_ref : (H+2, W+2, Cmid)   f32    scratch: padded activated conv1 output
    f32 = jnp.float32

    # Zero-fill the padded scratches every step: the untouched 1-pixel border
    # provides the convs' "SAME" zero padding (and stays correct under
    # megacore "parallel" sharding of the batch grid axis).
    a1_ref[...] = jnp.zeros_like(a1_ref)
    h_ref[...] = jnp.zeros_like(h_ref)

    # ---- BN1 + ReLU prologue (folded scale/shift), written to the interior.
    x = x_ref[0].astype(f32)                                    # (H, W, Cin)
    a1 = jnp.maximum(x * s1_ref[...].reshape(1, 1, Cin)
                     + t1_ref[...].reshape(1, 1, Cin), 0.0)
    a1_ref[1:H + 1, 1:W + 1, :] = a1

    def conv3x3(src_ref, w_ref, cin):
        # im2col with K = 9*cin: 9 shifted taps of the zero-padded scratch,
        # concatenated on the contraction dim -> a single MXU matmul.
        taps = [src_ref[dy:dy + H, dx:dx + W, :]
                for dy in range(3) for dx in range(3)]
        patches = jnp.concatenate(taps, axis=-1).reshape(H * W, 9 * cin)
        return jnp.dot(patches.astype(jnp.bfloat16), w_ref[...],
                       preferred_element_type=f32)              # (H*W, Cout)

    # ---- conv1 (bias folded into t2) + BN2 + ReLU, kept in VMEM.
    c1 = conv3x3(a1_ref, w1_ref, Cin).reshape(H, W, Cmid)
    a2 = jnp.maximum(c1 * s2_ref[...].reshape(1, 1, Cmid)
                     + t2_ref[...].reshape(1, 1, Cmid), 0.0)
    h_ref[1:H + 1, 1:W + 1, :] = a2

    # ---- conv2 + bias.
    c2 = conv3x3(h_ref, w2_ref, Cmid) + b2_ref[...]             # (H*W, Cout)
    o_ref[0] = c2.reshape(H, W, Cout).astype(o_ref.dtype)


# ----------------------------------------------------------------------------
# Rough VMEM footprint guard (layout-padded: lanes->128, sublanes->32/itemsize)
# ----------------------------------------------------------------------------
def _vmem_block_bytes(shape, dtype):
    itemsize = jnp.dtype(dtype).itemsize
    sub = 32 // itemsize
    s = list(shape)
    if len(s) < 2:
        s = [1] * (2 - len(s)) + s
    lead = 1
    for d in s[:-2]:
        lead *= d
    rows = -(-s[-2] // sub) * sub
    cols = -(-s[-1] // 128) * 128
    return lead * rows * cols * itemsize


def _estimate_vmem_bytes(H, W, Cin, Cmid, Cout):
    bf16, f32 = jnp.bfloat16, jnp.float32
    dbuf = 2  # auto double-buffering of pipelined blocks
    blocks = dbuf * (_vmem_block_bytes((1, H, W, Cin), bf16)
                     + _vmem_block_bytes((1, H, W, Cout), f32)
                     + _vmem_block_bytes((9 * Cin, Cmid), bf16)
                     + _vmem_block_bytes((9 * Cmid, Cout), bf16)
                     + 2 * _vmem_block_bytes((1, Cin), f32)
                     + 2 * _vmem_block_bytes((1, Cmid), f32)
                     + _vmem_block_bytes((1, Cout), f32))
    scratch = (_vmem_block_bytes((H + 2, W + 2, Cin), f32)
               + _vmem_block_bytes((H + 2, W + 2, Cmid), f32))
    return blocks + scratch


# ----------------------------------------------------------------------------
# Public wrapper: NCHW in / NCHW out, matching the PyTorch module.
# ----------------------------------------------------------------------------
@jax.jit
def convblock_forward(x_nchw, params):
    w1 = params["w1"]                        # HWIO (3, 3, Cin,  Cmid)
    w2 = params["w2"]                        # HWIO (3, 3, Cmid, Cout)
    N, Cin, H, W = x_nchw.shape
    Cmid, Cout = w1.shape[-1], w2.shape[-1]

    est = _estimate_vmem_bytes(H, W, Cin, Cmid, Cout)
    assert est <= _VMEM_LIMIT_BYTES, (
        f"per-image tile needs ~{est} B VMEM > {_VMEM_LIMIT_BYTES} B; "
        "add H-band tiling (see TODO) for this shape")

    # NCHW -> NHWC once; bf16 storage for the matmul operands.
    x = jnp.transpose(x_nchw, (0, 2, 3, 1)).astype(jnp.bfloat16)
    w1_r = w1.reshape(9 * Cin, Cmid).astype(jnp.bfloat16)
    w2_r = w2.reshape(9 * Cmid, Cout).astype(jnp.bfloat16)

    # Fold BatchNorm (inference running stats); conv1 bias folds into t2.
    s1 = params["gamma1"] * jax.lax.rsqrt(params["var1"] + _BN_EPS)
    t1 = params["beta1"] - params["mean1"] * s1
    s2 = params["gamma2"] * jax.lax.rsqrt(params["var2"] + _BN_EPS)
    t2 = params["beta2"] + (params["bias1"] - params["mean2"]) * s2
    b2 = params["bias2"]

    kernel = functools.partial(_convblock_kernel, H, W, Cin, Cmid, Cout)

    out_nhwc = pl.pallas_call(
        kernel,
        out_shape=jax.ShapeDtypeStruct((N, H, W, Cout), jnp.float32),
        grid=(N,),
        in_specs=[
            pl.BlockSpec((1, H, W, Cin), lambda n: (n, 0, 0, 0)),
            pl.BlockSpec((9 * Cin, Cmid), lambda n: (0, 0)),
            pl.BlockSpec((9 * Cmid, Cout), lambda n: (0, 0)),
            pl.BlockSpec((1, Cin), lambda n: (0, 0)),
            pl.BlockSpec((1, Cin), lambda n: (0, 0)),
            pl.BlockSpec((1, Cmid), lambda n: (0, 0)),
            pl.BlockSpec((1, Cmid), lambda n: (0, 0)),
            pl.BlockSpec((1, Cout), lambda n: (0, 0)),
        ],
        out_specs=pl.BlockSpec((1, H, W, Cout), lambda n: (n, 0, 0, 0)),
        scratch_shapes=[
            pltpu.VMEM((H + 2, W + 2, Cin), jnp.float32),
            pltpu.VMEM((H + 2, W + 2, Cmid), jnp.float32),
        ],
        compiler_params=pltpu.CompilerParams(
            dimension_semantics=("parallel",),
            vmem_limit_bytes=_VMEM_LIMIT_BYTES,
        ),
    )(x, w1_r, w2_r,
      s1.reshape(1, Cin), t1.reshape(1, Cin),
      s2.reshape(1, Cmid), t2.reshape(1, Cmid),
      b2.reshape(1, Cout))

    return jnp.transpose(out_nhwc, (0, 3, 1, 2))   # NHWC -> NCHW


# ----------------------------------------------------------------------------
# Deterministic synthetic parameters (nn.Conv2d / nn.BatchNorm2d shapes)
# ----------------------------------------------------------------------------
def init_params(key, inplanes, planes):
    ks = jax.random.split(key, 12)
    norm = jax.random.normal
    # conv weights in PyTorch OIHW, converted to HWIO for the kernel/reference.
    w1 = 0.1 * norm(ks[0], (planes, inplanes, 3, 3), jnp.float32)
    b1 = 0.1 * norm(ks[1], (planes,), jnp.float32)
    w2 = 0.1 * norm(ks[2], (planes, planes, 3, 3), jnp.float32)
    b2 = 0.1 * norm(ks[3], (planes,), jnp.float32)
    # BatchNorm2d(inplanes) and BatchNorm2d(planes) with non-trivial stats.
    g1 = 1.0 + 0.1 * norm(ks[4], (inplanes,), jnp.float32)
    be1 = 0.1 * norm(ks[5], (inplanes,), jnp.float32)
    m1 = 0.1 * norm(ks[6], (inplanes,), jnp.float32)
    v1 = 0.5 + jax.random.uniform(ks[7], (inplanes,), jnp.float32)
    g2 = 1.0 + 0.1 * norm(ks[8], (planes,), jnp.float32)
    be2 = 0.1 * norm(ks[9], (planes,), jnp.float32)
    m2 = 0.1 * norm(ks[10], (planes,), jnp.float32)
    v2 = 0.5 + jax.random.uniform(ks[11], (planes,), jnp.float32)
    return {
        "w1": jnp.transpose(w1, (2, 3, 1, 0)), "bias1": b1,
        "w2": jnp.transpose(w2, (2, 3, 1, 0)), "bias2": b2,
        "gamma1": g1, "beta1": be1, "mean1": m1, "var1": v1,
        "gamma2": g2, "beta2": be2, "mean2": m2, "var2": v2,
    }


# ----------------------------------------------------------------------------
# Pure-JAX reference (same bf16 cast points as the kernel, unfolded BN)
# ----------------------------------------------------------------------------
def reference_forward(x_nchw, params):
    dn = ("NHWC", "HWIO", "NHWC")
    x = jnp.transpose(x_nchw, (0, 2, 3, 1)).astype(jnp.bfloat16).astype(jnp.float32)

    def conv(a, w):
        return jax.lax.conv_general_dilated(
            a.astype(jnp.bfloat16), w.astype(jnp.bfloat16), (1, 1), "SAME",
            dimension_numbers=dn, preferred_element_type=jnp.float32)

    a1 = jnp.maximum((x - params["mean1"]) * params["gamma1"]
                     / jnp.sqrt(params["var1"] + _BN_EPS) + params["beta1"], 0.0)
    c1 = conv(a1, params["w1"]) + params["bias1"]
    a2 = jnp.maximum((c1 - params["mean2"]) * params["gamma2"]
                     / jnp.sqrt(params["var2"] + _BN_EPS) + params["beta2"], 0.0)
    y = conv(a2, params["w2"]) + params["bias2"]
    return jnp.transpose(y, (0, 3, 1, 2))


if __name__ == "__main__":
    key = jax.random.PRNGKey(0)
    k_x, k_p = jax.random.split(key)

    N, C, H, W = 2, 4, 16, 16          # inplanes = planes = 4, stride = 1
    x = jax.random.normal(k_x, (N, C, H, W), jnp.float32)
    params = init_params(k_p, inplanes=C, planes=C)

    out = jax.block_until_ready(convblock_forward(x, params))
    ref = reference_forward(x, params)

    assert out.shape == (N, C, H, W)
    assert jnp.allclose(out, ref, atol=1e-2, rtol=1e-2), (
        "mismatch vs reference, max abs diff = "
        f"{float(jnp.max(jnp.abs(out - ref)))}")

    print("KERNEL_OK")
</pallas_src>

<mosaic_0001>
module attributes {stable_mosaic.version = 11 : i64} {
  func.func @_convblock_kernel(%arg0: i32, %arg1: memref<1x16x16x4xbf16, #tpu.memory_space<vmem>>, %arg2: memref<36x4xbf16, #tpu.memory_space<vmem>>, %arg3: memref<36x4xbf16, #tpu.memory_space<vmem>>, %arg4: memref<1x4xf32, #tpu.memory_space<vmem>>, %arg5: memref<1x4xf32, #tpu.memory_space<vmem>>, %arg6: memref<1x4xf32, #tpu.memory_space<vmem>>, %arg7: memref<1x4xf32, #tpu.memory_space<vmem>>, %arg8: memref<1x4xf32, #tpu.memory_space<vmem>>, %arg9: memref<1x16x16x4xf32, #tpu.memory_space<vmem>>, %arg10: memref<18x18x4xf32, #tpu.memory_space<vmem>>, %arg11: memref<18x18x4xf32, #tpu.memory_space<vmem>>) attributes {dimension_semantics = [#tpu.dimension_semantics<parallel>], iteration_bounds = array<i64: 2>, scalar_prefetch = 0 : i64, scratch_operands = 2 : i64, tpu.core_type = #tpu.core_type<tc>, window_params = [{transform_indices = @transform_0, window_bounds = array<i64: 1, 16, 16, 4>}, {pipeline_mode = #tpu.pipeline_mode<synchronous>, transform_indices = @transform_1, window_bounds = array<i64: 36, 4>}, {pipeline_mode = #tpu.pipeline_mode<synchronous>, transform_indices = @transform_2, window_bounds = array<i64: 36, 4>}, {pipeline_mode = #tpu.pipeline_mode<synchronous>, transform_indices = @transform_3, window_bounds = array<i64: 1, 4>}, {pipeline_mode = #tpu.pipeline_mode<synchronous>, transform_indices = @transform_4, window_bounds = array<i64: 1, 4>}, {pipeline_mode = #tpu.pipeline_mode<synchronous>, transform_indices = @transform_5, window_bounds = array<i64: 1, 4>}, {pipeline_mode = #tpu.pipeline_mode<synchronous>, transform_indices = @transform_6, window_bounds = array<i64: 1, 4>}, {pipeline_mode = #tpu.pipeline_mode<synchronous>, transform_indices = @transform_7, window_bounds = array<i64: 1, 4>}, {transform_indices = @transform_8, window_bounds = array<i64: 1, 16, 16, 4>}]} {
    %cst = arith.constant 0.000000e+00 : f32
    %0 = vector.broadcast %cst : f32 to vector<18x18x4xf32>
    %c0 = arith.constant 0 : index
    %c0_0 = arith.constant 0 : index
    %c0_1 = arith.constant 0 : index
    %1 = vector.load %arg10[%c0, %c0_0, %c0_1] : memref<18x18x4xf32, #tpu.memory_space<vmem>>, vector<18x18x4xf32>
    tpu.vector_store %arg10[%c0, %c0_0, %c0_1], %0 {strides = array<i32>} : memref<18x18x4xf32, #tpu.memory_space<vmem>>, vector<18x18x4xf32>,
    %cst_2 = arith.constant 0.000000e+00 : f32
    %2 = vector.broadcast %cst_2 : f32 to vector<18x18x4xf32>
    %c0_3 = arith.constant 0 : index
    %c0_4 = arith.constant 0 : index
    %c0_5 = arith.constant 0 : index
    %3 = vector.load %arg11[%c0_3, %c0_4, %c0_5] : memref<18x18x4xf32, #tpu.memory_space<vmem>>, vector<18x18x4xf32>
    tpu.vector_store %arg11[%c0_3, %c0_4, %c0_5], %2 {strides = array<i32>} : memref<18x18x4xf32, #tpu.memory_space<vmem>>, vector<18x18x4xf32>,
    %c0_6 = arith.constant 0 : index
    %c0_7 = arith.constant 0 : index
    %c0_8 = arith.constant 0 : index
    %c0_9 = arith.constant 0 : index
    %4 = vector.load %arg1[%c0_6, %c0_7, %c0_8, %c0_9] : memref<1x16x16x4xbf16, #tpu.memory_space<vmem>>, vector<1x16x16x4xbf16>
    %5 = vector.shape_cast %4 : vector<1x16x16x4xbf16> to vector<16x16x4xbf16>
    %6 = arith.extf %5 : vector<16x16x4xbf16> to vector<16x16x4xf32>
    %c0_10 = arith.constant 0 : index
    %c0_11 = arith.constant 0 : index
    %7 = vector.load %arg4[%c0_10, %c0_11] : memref<1x4xf32, #tpu.memory_space<vmem>>, vector<1x4xf32>
    %8 = vector.shape_cast %7 : vector<1x4xf32> to vector<1x1x4xf32>
    %9 = vector.broadcast %8 : vector<1x1x4xf32> to vector<16x16x4xf32>
    %10 = arith.mulf %6, %9 : vector<16x16x4xf32>
    %c0_12 = arith.constant 0 : index
    %c0_13 = arith.constant 0 : index
    %11 = vector.load %arg5[%c0_12, %c0_13] : memref<1x4xf32, #tpu.memory_space<vmem>>, vector<1x4xf32>
    %12 = vector.shape_cast %11 : vector<1x4xf32> to vector<1x1x4xf32>
    %13 = vector.broadcast %12 : vector<1x1x4xf32> to vector<16x16x4xf32>
    %14 = arith.addf %10, %13 : vector<16x16x4xf32>
    %cst_14 = arith.constant 0.000000e+00 : f32
    %15 = vector.broadcast %cst_14 : f32 to vector<16x16x4xf32>
    %16 = arith.maximumf %14, %15 : vector<16x16x4xf32>
    %c1 = arith.constant 1 : index
    %c1_15 = arith.constant 1 : index
    %c0_16 = arith.constant 0 : index
    %17 = vector.load %arg10[%c1, %c1_15, %c0_16] : memref<18x18x4xf32, #tpu.memory_space<vmem>>, vector<16x16x4xf32>
    tpu.vector_store %arg10[%c1, %c1_15, %c0_16], %16 {strides = array<i32>} : memref<18x18x4xf32, #tpu.memory_space<vmem>>, vector<16x16x4xf32>,
    %c0_17 = arith.constant 0 : index
    %c0_18 = arith.constant 0 : index
    %c0_19 = arith.constant 0 : index
    %18 = vector.load %arg10[%c0_17, %c0_18, %c0_19] : memref<18x18x4xf32, #tpu.memory_space<vmem>>, vector<16x16x4xf32>
    %c0_20 = arith.constant 0 : index
    %c1_21 = arith.constant 1 : index
    %c0_22 = arith.constant 0 : index
    %19 = vector.load %arg10[%c0_20, %c1_21, %c0_22] : memref<18x18x4xf32, #tpu.memory_space<vmem>>, vector<16x16x4xf32>
    %c0_23 = arith.constant 0 : index
    %c2 = arith.constant 2 : index
    %c0_24 = arith.constant 0 : index
    %20 = vector.load %arg10[%c0_23, %c2, %c0_24] : memref<18x18x4xf32, #tpu.memory_space<vmem>>, vector<16x16x4xf32>
    %c1_25 = arith.constant 1 : index
    %c0_26 = arith.constant 0 : index
    %c0_27 = arith.constant 0 : index
    %21 = vector.load %arg10[%c1_25, %c0_26, %c0_27] : memref<18x18x4xf32, #tpu.memory_space<vmem>>, vector<16x16x4xf32>
    %c1_28 = arith.constant 1 : index
    %c1_29 = arith.constant 1 : index
    %c0_30 = arith.constant 0 : index
    %22 = vector.load %arg10[%c1_28, %c1_29, %c0_30] : memref<18x18x4xf32, #tpu.memory_space<vmem>>, vector<16x16x4xf32>
    %c1_31 = arith.constant 1 : index
    %c2_32 = arith.constant 2 : index
    %c0_33 = arith.constant 0 : index
    %23 = vector.load %arg10[%c1_31, %c2_32, %c0_33] : memref<18x18x4xf32, #tpu.memory_space<vmem>>, vector<16x16x4xf32>
    %c2_34 = arith.constant 2 : index
    %c0_35 = arith.constant 0 : index
    %c0_36 = arith.constant 0 : index
    %24 = vector.load %arg10[%c2_34, %c0_35, %c0_36] : memref<18x18x4xf32, #tpu.memory_space<vmem>>, vector<16x16x4xf32>
    %c2_37 = arith.constant 2 : index
    %c1_38 = arith.constant 1 : index
    %c0_39 = arith.constant 0 : index
    %25 = vector.load %arg10[%c2_37, %c1_38, %c0_39] : memref<18x18x4xf32, #tpu.memory_space<vmem>>, vector<16x16x4xf32>
    %c2_40 = arith.constant 2 : index
    %c2_41 = arith.constant 2 : index
    %c0_42 = arith.constant 0 : index
    %26 = vector.load %arg10[%c2_40, %c2_41, %c0_42] : memref<18x18x4xf32, #tpu.memory_space<vmem>>, vector<16x16x4xf32>
    %27 = tpu.concatenate %18, %19, %20, %21, %22, %23, %24, %25, %26 in 2 : vector<16x16x4xf32>, vector<16x16x4xf32>, vector<16x16x4xf32>, vector<16x16x4xf32>, vector<16x16x4xf32>, vector<16x16x4xf32>, vector<16x16x4xf32>, vector<16x16x4xf32>, vector<16x16x4xf32> -> vector<16x16x36xf32>
    %28 = vector.shape_cast %27 : vector<16x16x36xf32> to vector<256x36xf32>
    %29 = arith.truncf %28 : vector<256x36xf32> to vector<256x36xbf16>
    %c0_43 = arith.constant 0 : index
    %c0_44 = arith.constant 0 : index
    %30 = vector.load %arg2[%c0_43, %c0_44] : memref<36x4xbf16, #tpu.memory_space<vmem>>, vector<36x4xbf16>
    %cst_45 = arith.constant dense<0.000000e+00> : vector<256x4xf32>
    %31 = tpu.matmul %29, %30, %cst_45 {dimension_numbers = #tpu.dot_dimension_numbers<[1], [0], [0], [1], [0, 0, 1, 1], [], []>} : vector<256x36xbf16>, vector<36x4xbf16>, vector<256x4xf32> -> vector<256x4xf32>
    %32 = vector.shape_cast %31 : vector<256x4xf32> to vector<16x16x4xf32>
    %c0_46 = arith.constant 0 : index
    %c0_47 = arith.constant 0 : index
    %33 = vector.load %arg6[%c0_46, %c0_47] : memref<1x4xf32, #tpu.memory_space<vmem>>, vector<1x4xf32>
    %34 = vector.shape_cast %33 : vector<1x4xf32> to vector<1x1x4xf32>
    %35 = vector.broadcast %34 : vector<1x1x4xf32> to vector<16x16x4xf32>
    %36 = arith.mulf %32, %35 : vector<16x16x4xf32>
    %c0_48 = arith.constant 0 : index
    %c0_49 = arith.constant 0 : index
    %37 = vector.load %arg7[%c0_48, %c0_49] : memref<1x4xf32, #tpu.memory_space<vmem>>, vector<1x4xf32>
    %38 = vector.shape_cast %37 : vector<1x4xf32> to vector<1x1x4xf32>
    %39 = vector.broadcast %38 : vector<1x1x4xf32> to vector<16x16x4xf32>
    %40 = arith.addf %36, %39 : vector<16x16x4xf32>
    %cst_50 = arith.constant 0.000000e+00 : f32
    %41 = vector.broadcast %cst_50 : f32 to vector<16x16x4xf32>
    %42 = arith.maximumf %40, %41 : vector<16x16x4xf32>
    %c1_51 = arith.constant 1 : index
    %c1_52 = arith.constant 1 : index
    %c0_53 = arith.constant 0 : index
    %43 = vector.load %arg11[%c1_51, %c1_52, %c0_53] : memref<18x18x4xf32, #tpu.memory_space<vmem>>, vector<16x16x4xf32>
    tpu.vector_store %arg11[%c1_51, %c1_52, %c0_53], %42 {strides = array<i32>} : memref<18x18x4xf32, #tpu.memory_space<vmem>>, vector<16x16x4xf32>,
    %c0_54 = arith.constant 0 : index
    %c0_55 = arith.constant 0 : index
    %c0_56 = arith.constant 0 : index
    %44 = vector.load %arg11[%c0_54, %c0_55, %c0_56] : memref<18x18x4xf32, #tpu.memory_space<vmem>>, vector<16x16x4xf32>
    %c0_57 = arith.constant 0 : index
    %c1_58 = arith.constant 1 : index
    %c0_59 = arith.constant 0 : index
    %45 = vector.load %arg11[%c0_57, %c1_58, %c0_59] : memref<18x18x4xf32, #tpu.memory_space<vmem>>, vector<16x16x4xf32>
    %c0_60 = arith.constant 0 : index
    %c2_61 = arith.constant 2 : index
    %c0_62 = arith.constant 0 : index
    %46 = vector.load %arg11[%c0_60, %c2_61, %c0_62] : memref<18x18x4xf32, #tpu.memory_space<vmem>>, vector<16x16x4xf32>
    %c1_63 = arith.constant 1 : index
    %c0_64 = arith.constant 0 : index
    %c0_65 = arith.constant 0 : index
    %47 = vector.load %arg11[%c1_63, %c0_64, %c0_65] : memref<18x18x4xf32, #tpu.memory_space<vmem>>, vector<16x16x4xf32>
    %c1_66 = arith.constant 1 : index
    %c1_67 = arith.constant 1 : index
    %c0_68 = arith.constant 0 : index
    %48 = vector.load %arg11[%c1_66, %c1_67, %c0_68] : memref<18x18x4xf32, #tpu.memory_space<vmem>>, vector<16x16x4xf32>
    %c1_69 = arith.constant 1 : index
    %c2_70 = arith.constant 2 : index
    %c0_71 = arith.constant 0 : index
    %49 = vector.load %arg11[%c1_69, %c2_70, %c0_71] : memref<18x18x4xf32, #tpu.memory_space<vmem>>, vector<16x16x4xf32>
    %c2_72 = arith.constant 2 : index
    %c0_73 = arith.constant 0 : index
    %c0_74 = arith.constant 0 : index
    %50 = vector.load %arg11[%c2_72, %c0_73, %c0_74] : memref<18x18x4xf32, #tpu.memory_space<vmem>>, vector<16x16x4xf32>
    %c2_75 = arith.constant 2 : index
    %c1_76 = arith.constant 1 : index
    %c0_77 = arith.constant 0 : index
    %51 = vector.load %arg11[%c2_75, %c1_76, %c0_77] : memref<18x18x4xf32, #tpu.memory_space<vmem>>, vector<16x16x4xf32>
    %c2_78 = arith.constant 2 : index
    %c2_79 = arith.constant 2 : index
    %c0_80 = arith.constant 0 : index
    %52 = vector.load %arg11[%c2_78, %c2_79, %c0_80] : memref<18x18x4xf32, #tpu.memory_space<vmem>>, vector<16x16x4xf32>
    %53 = tpu.concatenate %44, %45, %46, %47, %48, %49, %50, %51, %52 in 2 : vector<16x16x4xf32>, vector<16x16x4xf32>, vector<16x16x4xf32>, vector<16x16x4xf32>, vector<16x16x4xf32>, vector<16x16x4xf32>, vector<16x16x4xf32>, vector<16x16x4xf32>, vector<16x16x4xf32> -> vector<16x16x36xf32>
    %54 = vector.shape_cast %53 : vector<16x16x36xf32> to vector<256x36xf32>
    %55 = arith.truncf %54 : vector<256x36xf32> to vector<256x36xbf16>
    %c0_81 = arith.constant 0 : index
    %c0_82 = arith.constant 0 : index
    %56 = vector.load %arg3[%c0_81, %c0_82] : memref<36x4xbf16, #tpu.memory_space<vmem>>, vector<36x4xbf16>
    %cst_83 = arith.constant dense<0.000000e+00> : vector<256x4xf32>
    %57 = tpu.matmul %55, %56, %cst_83 {dimension_numbers = #tpu.dot_dimension_numbers<[1], [0], [0], [1], [0, 0, 1, 1], [], []>} : vector<256x36xbf16>, vector<36x4xbf16>, vector<256x4xf32> -> vector<256x4xf32>
    %c0_84 = arith.constant 0 : index
    %c0_85 = arith.constant 0 : index
    %58 = vector.load %arg8[%c0_84, %c0_85] : memref<1x4xf32, #tpu.memory_space<vmem>>, vector<1x4xf32>
    %59 = vector.broadcast %58 : vector<1x4xf32> to vector<256x4xf32>
    %60 = arith.addf %57, %59 : vector<256x4xf32>
    %61 = vector.shape_cast %60 : vector<256x4xf32> to vector<16x16x4xf32>
    %c0_86 = arith.constant 0 : index
    %c0_87 = arith.constant 0 : index
    %c0_88 = arith.constant 0 : index
    %c0_89 = arith.constant 0 : index
    %62 = vector.load %arg9[%c0_86, %c0_87, %c0_88, %c0_89] : memref<1x16x16x4xf32, #tpu.memory_space<vmem>>, vector<1x16x16x4xf32>
    %63 = vector.shape_cast %62 : vector<1x16x16x4xf32> to vector<16x16x4xf32>
    %64 = vector.shape_cast %61 : vector<16x16x4xf32> to vector<1x16x16x4xf32>
    tpu.vector_store %arg9[%c0_86, %c0_87, %c0_88, %c0_89], %64 {strides = array<i32>} : memref<1x16x16x4xf32, #tpu.memory_space<vmem>>, vector<1x16x16x4xf32>,
    return
  }
  func.func @transform_0(%arg0: i32) -> (i32, i32, i32, i32) {
    %c0_i32 = arith.constant 0 : i32
    %c0_i32_0 = arith.constant 0 : i32
    %c0_i32_1 = arith.constant 0 : i32
    %c0_i32_2 = arith.constant 0 : i32
    return %arg0, %c0_i32, %c0_i32_0, %c0_i32_1 : i32, i32, i32, i32
  }
  func.func @transform_1(%arg0: i32) -> (i32, i32) {
    %c0_i32 = arith.constant 0 : i32
    %c0_i32_0 = arith.constant 0 : i32
    %c0_i32_1 = arith.constant 0 : i32
    return %c0_i32, %c0_i32_0 : i32, i32
  }
  func.func @transform_2(%arg0: i32) -> (i32, i32) {
    %c0_i32 = arith.constant 0 : i32
    %c0_i32_0 = arith.constant 0 : i32
    %c0_i32_1 = arith.constant 0 : i32
    return %c0_i32, %c0_i32_0 : i32, i32
  }
  func.func @transform_3(%arg0: i32) -> (i32, i32) {
    %c0_i32 = arith.constant 0 : i32
    %c0_i32_0 = arith.constant 0 : i32
    %c0_i32_1 = arith.constant 0 : i32
    return %c0_i32, %c0_i32_0 : i32, i32
  }
  func.func @transform_4(%arg0: i32) -> (i32, i32) {
    %c0_i32 = arith.constant 0 : i32
    %c0_i32_0 = arith.constant 0 : i32
    %c0_i32_1 = arith.constant 0 : i32
    return %c0_i32, %c0_i32_0 : i32, i32
  }
  func.func @transform_5(%arg0: i32) -> (i32, i32) {
    %c0_i32 = arith.constant 0 : i32
    %c0_i32_0 = arith.constant 0 : i32
    %c0_i32_1 = arith.constant 0 : i32
    return %c0_i32, %c0_i32_0 : i32, i32
  }
  func.func @transform_6(%arg0: i32) -> (i32, i32) {
    %c0_i32 = arith.constant 0 : i32
    %c0_i32_0 = arith.constant 0 : i32
    %c0_i32_1 = arith.constant 0 : i32
    return %c0_i32, %c0_i32_0 : i32, i32
  }
  func.func @transform_7(%arg0: i32) -> (i32, i32) {
    %c0_i32 = arith.constant 0 : i32
    %c0_i32_0 = arith.constant 0 : i32
    %c0_i32_1 = arith.constant 0 : i32
    return %c0_i32, %c0_i32_0 : i32, i32
  }
  func.func @transform_8(%arg0: i32) -> (i32, i32, i32, i32) {
    %c0_i32 = arith.constant 0 : i32
    %c0_i32_0 = arith.constant 0 : i32
    %c0_i32_1 = arith.constant 0 : i32
    %c0_i32_2 = arith.constant 0 : i32
    return %arg0, %c0_i32, %c0_i32_0, %c0_i32_1 : i32, i32, i32, i32
  }
}

</mosaic_0001>

<llo_original>
// kernel: convblock_forward.1
$region0: #{convblock_forward.1}
  #allocation0 [shape = 'u32[]', space=smem, size = 0x4, offset = 0x4, fixed_abs, tag = 'smem constant byte address 0x4 - core index']
  #allocation1 [shape = 'u32[144,128]{1,0:T(1,128)}', space=vmem, size = 0x12000, scoped, tag = 'internal scratch']
  #allocation2 [shape = 'f32[18,18,4]{2,1,0:T(8,128)}', space=vmem, size = 0x36000, scoped, tag = 'scratch operand']
  #allocation3 [shape = 'f32[18,18,4]{2,1,0:T(8,128)}', space=vmem, size = 0x36000, scoped, tag = 'scratch operand']
  %s0 = inlined_call_operand.vmem [shape: bf16[2,16,16,4], index: 0, kind: input, shape index: {}]
  %s1 = inlined_call_operand.vmem [shape: bf16[36,4], index: 1, kind: input, shape index: {}]
  %s2 = inlined_call_operand.vmem [shape: bf16[36,4], index: 2, kind: input, shape index: {}]
  %s3 = inlined_call_operand.vmem [shape: f32[1,4], index: 3, kind: input, shape index: {}]
  %s4 = inlined_call_operand.vmem [shape: f32[1,4], index: 4, kind: input, shape index: {}]
  %s5 = inlined_call_operand.vmem [shape: f32[1,4], index: 5, kind: input, shape index: {}]
  %s6 = inlined_call_operand.vmem [shape: f32[1,4], index: 6, kind: input, shape index: {}]
  %s7 = inlined_call_operand.vmem [shape: f32[1,4], index: 7, kind: input, shape index: {}]
  %s8 = inlined_call_operand.vmem [shape: f32[2,16,16,4], index: 8, kind: output, shape index: {}]
  %s9 = sld [smem:[#allocation0]]
  $region65: #{convblock_forward.1} parent=0
    _
  %s11 = ssub.s32 1, %s9
  %s12 = scalar_select 0, %s11, %s9
  loop: start=0, step=1, limit=4
  $region2: #{convblock_forward.1} parent=0 // loop_pre_header
    _
  $region3: #{convblock_forward.1} parent=0 // loop_header
    %s14 = sphi 0, %s18
    %p15 = scmp.ge.s32.totalorder %s14, 4
    %s24 = sphi 0, %s26
    %s27 = sphi 0, %s24
    %s28 = sphi 0, %s27
    %s44 = sphi 0, %s28
    %s48 = sphi 0, %s48
    %s50 = sphi 0, %s48
    %s51 = sphi 0, %s50
    %s65 = sphi 0, %s51
    %s69 = sphi 0, %s69
    %s71 = sphi 0, %s69
    %s72 = sphi 0, %s71
    %s86 = sphi 0, %s72
    %s90 = sphi 0, %s90
    %s92 = sphi 0, %s90
    %s93 = sphi 0, %s92
    %s107 = sphi 0, %s93
    %s111 = sphi 0, %s111
    %s113 = sphi 0, %s111
    %s114 = sphi 0, %s113
    %s128 = sphi 0, %s114
    %s132 = sphi 0, %s132
    %s134 = sphi 0, %s132
    %s135 = sphi 0, %s134
    %s149 = sphi 0, %s135
    %s153 = sphi 0, %s153
    %s155 = sphi 0, %s153
    %s156 = sphi 0, %s155
    %s170 = sphi 0, %s156
    %s174 = sphi 0, %s174
    %s176 = sphi 0, %s174
    %s177 = sphi 0, %s176
    %s191 = sphi 0, %s177
    %s197 = sphi 0, %s199
    %s200 = sphi 0, %s197
    %s201 = sphi 0, %s200
    %s217 = sphi 0, %s201
  $region4: #{convblock_forward.1} parent=0 // loop_header_branch
    %17 = sbr.rel (%p15) target = $region8
  $region5: #{convblock_forward.1} parent=0 // loop_body
    %s19 = ssub.s32 %s14, 1
    %s20 = ssub.s32 %s14, 2
    %s21 = sadd.s32 %s14, 1
    %s22 = ssub.s32 %s14, %s21
    %p23 = scmp.eq.s32.totalorder %s22, 0
    %s25 = sadd.s32 %s24, 1
    %s26 = scalar_select %p23, %s24, %s25
    %p29 = pneg %p23
    %p30 = scmp.eq.s32.totalorder %s14, 1
    %p31 = por %p29, %p30
    %p32 = scmp.ne.s32.totalorder %s24, %s27
    %p33 = scmp.eq.s32.totalorder %s14, 0
    %p34 = por %p32, %p33
    %p35 = scmp.ne.s32.totalorder %s24, %s27
    %p36 = scmp.eq.s32.totalorder %s19, 1
    %p37 = por %p35, %p36
    %p38 = scmp.ne.s32.totalorder %s27, %s28
    %p39 = scmp.eq.s32.totalorder %s19, 0
    %p40 = por %p38, %p39
    %p41 = scmp.ne.s32.totalorder %s27, %s28
    %p42 = scmp.eq.s32.totalorder %s20, 1
    %p43 = por %p41, %p42
    %p45 = scmp.ne.s32.totalorder %s28, %s44
    %p46 = scmp.eq.s32.totalorder %s20, 0
    %p47 = por %p45, %p46
    %s49 = sadd.s32 %s48, 1
    %p52 = scmp.eq.s32.totalorder %s14, 1
    %p53 = scmp.ne.s32.totalorder %s48, %s50
    %p54 = scmp.eq.s32.totalorder %s14, 0
    %p55 = por %p53, %p54
    %p56 = scmp.ne.s32.totalorder %s48, %s50
    %p57 = scmp.eq.s32.totalorder %s19, 1
    %p58 = por %p56, %p57
    %p59 = scmp.ne.s32.totalorder %s50, %s51
    %p60 = scmp.eq.s32.totalorder %s19, 0
    %p61 = por %p59, %p60
    %p62 = scmp.ne.s32.totalorder %s50, %s51
    %p63 = scmp.eq.s32.totalorder %s20, 1
    %p64 = por %p62, %p63
    %p66 = scmp.ne.s32.totalorder %s51, %s65
    %p67 = scmp.eq.s32.totalorder %s20, 0
    %p68 = por %p66, %p67
    %s70 = sadd.s32 %s69, 1
    %p73 = scmp.eq.s32.totalorder %s14, 1
    %p74 = scmp.ne.s32.totalorder %s69, %s71
    %p75 = scmp.eq.s32.totalorder %s14, 0
    %p76 = por %p74, %p75
    %p77 = scmp.ne.s32.totalorder %s69, %s71
    %p78 = scmp.eq.s32.totalorder %s19, 1
    %p79 = por %p77, %p78
    %p80 = scmp.ne.s32.totalorder %s71, %s72
    %p81 = scmp.eq.s32.totalorder %s19, 0
    %p82 = por %p80, %p81
    %p83 = scmp.ne.s32.totalorder %s71, %s72
    %p84 = scmp.eq.s32.totalorder %s20, 1
    %p85 = por %p83, %p84
    %p87 = scmp.ne.s32.totalorder %s72, %s86
    %p88 = scmp.eq.s32.totalorder %s20, 0
    %p89 = por %p87, %p88
    %s91 = sadd.s32 %s90, 1
    %p94 = scmp.eq.s32.totalorder %s14, 1
    %p95 = scmp.ne.s32.totalorder %s90, %s92
    %p96 = scmp.eq.s32.totalorder %s14, 0
    %p97 = por %p95, %p96
    %p98 = scmp.ne.s32.totalorder %s90, %s92
    %p99 = scmp.eq.s32.totalorder %s19, 1
    %p100 = por %p98, %p99
    %p101 = scmp.ne.s32.totalorder %s92, %s93
    %p102 = scmp.eq.s32.totalorder %s19, 0
    %p103 = por %p101, %p102
    %p104 = scmp.ne.s32.totalorder %s92, %s93
    %p105 = scmp.eq.s32.totalorder %s20, 1
    %p106 = por %p104, %p105
    %p108 = scmp.ne.s32.totalorder %s93, %s107
    %p109 = scmp.eq.s32.totalorder %s20, 0
    %p110 = por %p108, %p109
    %s112 = sadd.s32 %s111, 1
    %p115 = scmp.eq.s32.totalorder %s14, 1
    %p116 = scmp.ne.s32.totalorder %s111, %s113
    %p117 = scmp.eq.s32.totalorder %s14, 0
    %p118 = por %p116, %p117
    %p119 = scmp.ne.s32.totalorder %s111, %s113
    %p120 = scmp.eq.s32.totalorder %s19, 1
    %p121 = por %p119, %p120
    %p122 = scmp.ne.s32.totalorder %s113, %s114
    %p123 = scmp.eq.s32.totalorder %s19, 0
    %p124 = por %p122, %p123
    %p125 = scmp.ne.s32.totalorder %s113, %s114
    %p126 = scmp.eq.s32.totalorder %s20, 1
    %p127 = por %p125, %p126
    %p129 = scmp.ne.s32.totalorder %s114, %s128
    %p130 = scmp.eq.s32.totalorder %s20, 0
    %p131 = por %p129, %p130
    %s133 = sadd.s32 %s132, 1
    %p136 = scmp.eq.s32.totalorder %s14, 1
    %p137 = scmp.ne.s32.totalorder %s132, %s134
    %p138 = scmp.eq.s32.totalorder %s14, 0
    %p139 = por %p137, %p138
    %p140 = scmp.ne.s32.totalorder %s132, %s134
    %p141 = scmp.eq.s32.totalorder %s19, 1
    %p142 = por %p140, %p141
    %p143 = scmp.ne.s32.totalorder %s134, %s135
    %p144 = scmp.eq.s32.totalorder %s19, 0
    %p145 = por %p143, %p144
    %p146 = scmp.ne.s32.totalorder %s134, %s135
    %p147 = scmp.eq.s32.totalorder %s20, 1
    %p148 = por %p146, %p147
    %p150 = scmp.ne.s32.totalorder %s135, %s149
    %p151 = scmp.eq.s32.totalorder %s20, 0
    %p152 = por %p150, %p151
    %s154 = sadd.s32 %s153, 1
    %p157 = scmp.eq.s32.totalorder %s14, 1
    %p158 = scmp.ne.s32.totalorder %s153, %s155
    %p159 = scmp.eq.s32.totalorder %s14, 0
    %p160 = por %p158, %p159
    %p161 = scmp.ne.s32.totalorder %s153, %s155
    %p162 = scmp.eq.s32.totalorder %s19, 1
    %p163 = por %p161, %p162
    %p164 = scmp.ne.s32.totalorder %s155, %s156
    %p165 = scmp.eq.s32.totalorder %s19, 0
    %p166 = por %p164, %p165
    %p167 = scmp.ne.s32.totalorder %s155, %s156
    %p168 = scmp.eq.s32.totalorder %s20, 1
    %p169 = por %p167, %p168
    %p171 = scmp.ne.s32.totalorder %s156, %s170
    %p172 = scmp.eq.s32.totalorder %s20, 0
    %p173 = por %p171, %p172
    %s175 = sadd.s32 %s174, 1
    %p178 = scmp.eq.s32.totalorder %s14, 1
    %p179 = scmp.ne.s32.totalorder %s174, %s176
    %p180 = scmp.eq.s32.totalorder %s14, 0
    %p181 = por %p179, %p180
    %p182 = scmp.ne.s32.totalorder %s174, %s176
    %p183 = scmp.eq.s32.totalorder %s19, 1
    %p184 = por %p182, %p183
    %p185 = scmp.ne.s32.totalorder %s176, %s177
    %p186 = scmp.eq.s32.totalorder %s19, 0
    %p187 = por %p185, %p186
    %p188 = scmp.ne.s32.totalorder %s176, %s177
    %p189 = scmp.eq.s32.totalorder %s20, 1
    %p190 = por %p188, %p189
    %p192 = scmp.ne.s32.totalorder %s177, %s191
    %p193 = scmp.eq.s32.totalorder %s20, 0
    %p194 = por %p192, %p193
    %s195 = ssub.s32 %s14, %s21
    %p196 = scmp.eq.s32.totalorder %s195, 0
    %s198 = sadd.s32 %s197, 1
    %s199 = scalar_select %p196, %s197, %s198
    %p202 = pneg %p196
    %p203 = scmp.eq.s32.totalorder %s14, 1
    %p204 = por %p202, %p203
    %p205 = scmp.ne.s32.totalorder %s197, %s200
    %p206 = scmp.eq.s32.totalorder %s14, 0
    %p207 = por %p205, %p206
    %p208 = scmp.ne.s32.totalorder %s197, %s200
    %p209 = scmp.eq.s32.totalorder %s19, 1
    %p210 = por %p208, %p209
    %p211 = scmp.ne.s32.totalorder %s200, %s201
    %p212 = scmp.eq.s32.totalorder %s19, 0
    %p213 = por %p211, %p212
    %p214 = scmp.ne.s32.totalorder %s200, %s201
    %p215 = scmp.eq.s32.totalorder %s20, 1
    %p216 = por %p214, %p215
    %p218 = scmp.ne.s32.totalorder %s201, %s217
    %p219 = scmp.eq.s32.totalorder %s20, 0
    %p220 = por %p218, %p219
    %p221 = scmp.le.s32.totalorder 1, %s14
    %p222 = scmp.lt.s32.totalorder %s14, 3
    %p223 = pnand %p221, %p222
    %p224 = pneg %p223
    // Predicated region
    $region9: #{convblock_forward.1} parent=5 // pred_check
      _
    $region10: #{convblock_forward.1} parent=5 // pred_check_branch
      %226 = sbr.rel (%p223) target = $region12
    $region11: #{convblock_forward.1} parent=5 // pred_region
      %s227 = ssub.s32 %s14, 1
      // Predicated region
      $region13: #{convblock_forward.1} parent=11 // pred_check
        %p228 = pneg %p61
      $region14: #{convblock_forward.1} parent=11 // pred_check_branch
        %230 = sbr.rel (%p228) target = $region16
      $region15: #{convblock_forward.1} parent=11 // pred_region
        _
      $region16: #{convblock_forward.1} parent=11 // pred_fallthru
        _
      // Predicated region
      $region17: #{convblock_forward.1} parent=11 // pred_check
        %p231 = pneg %p82
      $region18: #{convblock_forward.1} parent=11 // pred_check_branch
        %233 = sbr.rel (%p231) target = $region20
      $region19: #{convblock_forward.1} parent=11 // pred_region
        _
      $region20: #{convblock_forward.1} parent=11 // pred_fallthru
        _
      // Predicated region
      $region21: #{convblock_forward.1} parent=11 // pred_check
        %p234 = pneg %p103
      $region22: #{convblock_forward.1} parent=11 // pred_check_branch
        %236 = sbr.rel (%p234) target = $region24
      $region23: #{convblock_forward.1} parent=11 // pred_region
        _
      $region24: #{convblock_forward.1} parent=11 // pred_fallthru
        _
      // Predicated region
      $region25: #{convblock_forward.1} parent=11 // pred_check
        %p237 = pneg %p124
      $region26: #{convblock_forward.1} parent=11 // pred_check_branch
        %239 = sbr.rel (%p237) target = $region28
      $region27: #{convblock_forward.1} parent=11 // pred_region
        _
      $region28: #{convblock_forward.1} parent=11 // pred_fallthru
        _
      // Predicated region
      $region29: #{convblock_forward.1} parent=11 // pred_check
        %p240 = pneg %p145
      $region30: #{convblock_forward.1} parent=11 // pred_check_branch
        %242 = sbr.rel (%p240) target = $region32
      $region31: #{convblock_forward.1} parent=11 // pred_region
        _
      $region32: #{convblock_forward.1} parent=11 // pred_fallthru
        _
      // Predicated region
      $region33: #{convblock_forward.1} parent=11 // pred_check
        %p243 = pneg %p166
      $region34: #{convblock_forward.1} parent=11 // pred_check_branch
        %245 = sbr.rel (%p243) target = $region36
      $region35: #{convblock_forward.1} parent=11 // pred_region
        _
      $region36: #{convblock_forward.1} parent=11 // pred_fallthru
        _
      // Predicated region
      $region37: #{convblock_forward.1} parent=11 // pred_check
        %p246 = pneg %p187
      $region38: #{convblock_forward.1} parent=11 // pred_check_branch
        %248 = sbr.rel (%p246) target = $region40
      $region39: #{convblock_forward.1} parent=11 // pred_region
        _
      $region40: #{convblock_forward.1} parent=11 // pred_fallthru
        _
    $region12: #{convblock_forward.1} parent=5 // pred_fallthru
      _
    %p249 = scmp.lt.s32.totalorder %s14, 2
    // Predicated region
    $region41: #{convblock_forward.1} parent=5 // pred_check
      %p250 = pneg %p249
    $region42: #{convblock_forward.1} parent=5 // pred_check_branch
      %252 = sbr.rel (%p250) target = $region44
    $region43: #{convblock_forward.1} parent=5 // pred_region
      // Predicated region
      $region45: #{convblock_forward.1} parent=43 // pred_check
        %p253 = pneg %p34
      $region46: #{convblock_forward.1} parent=43 // pred_check_branch
        %255 = sbr.rel (%p253) target = $region48
      $region47: #{convblock_forward.1} parent=43 // pred_region
        %p256 = scmp.lt.s32.totalorder %s14, 1
        %s257 = scalar_select %p256, %s14, 1
        %s258 = smul.addr %s257, 32
        %s259 = smul.addr %s258, 4
        %s260 = scalar_lea.vmem %s0, %s259
      $region48: #{convblock_forward.1} parent=43 // pred_fallthru
        _
    $region44: #{convblock_forward.1} parent=5 // pred_fallthru
      _
    %p261 = scmp.le.s32.totalorder 1, %s14
    %p262 = scmp.lt.s32.totalorder %s14, 3
    %p263 = pnand %p261, %p262
    %p264 = pneg %p263
    // Predicated region
    $region49: #{convblock_forward.1} parent=5 // pred_check
      _
    $region50: #{convblock_forward.1} parent=5 // pred_check_branch
      %266 = sbr.rel (%p263) target = $region52
    $region51: #{convblock_forward.1} parent=5 // pred_region
      %s267 = ssub.s32 %s14, 1
      %p268 = scmp.lt.s32.totalorder %s19, 1
      %s269 = scalar_select %p268, %s19, 1
      %s270 = smul.addr %s269, 32
      %s271 = smul.addr %s270, 4
      %s272 = scalar_lea.vmem %s0, %s271
      %p273 = pneg %p40
      %p274 = pneg %p37
      %p275 = pneg %p61
      %p276 = pneg %p58
      %p277 = pneg %p82
      %p278 = pneg %p79
      %p279 = pneg %p103
      %p280 = pneg %p100
      %p281 = pneg %p124
      %p282 = pneg %p121
      %p283 = pneg %p145
      %p284 = pneg %p142
      %p285 = pneg %p166
      %p286 = pneg %p163
      %p287 = pneg %p187
      %p288 = pneg %p184
      %p289 = pneg %p213
      %p290 = pneg %p210
      %p291 = scmp.lt.s32.totalorder %s19, 1
      %s292 = scalar_select %p291, %s19, 1
      %s293 = smul.addr %s292, 32
      %s294 = smul.addr %s293, 8
      %s295 = scalar_lea.vmem %s8, %s294
      %p296 = scmp.lt.s32.totalorder %s19, 1
      %s297 = scalar_select %p296, %s19, 1
      %s298 = smul.addr %s297, 32
      %s299 = smul.addr %s298, 4
      %s300 = scalar_lea.vmem %s0, %s299
      %p301 = scmp.lt.s32.totalorder %s19, 1
      %s302 = scalar_select %p301, %s19, 1
      %s303 = smul.addr %s302, 32
      %s304 = smul.addr %s303, 8
      %s305 = scalar_lea.vmem %s8, %s304
      %vm307 = vcmask 31744
      %308 = vst.msk [vmem:[#allocation2] sm:$0xff] %vm307, 0.0
      %309 = vst.msk [vmem:[#allocation2 + $0x8] sm:$0xff] %vm307, 0.0
      %vm310 = vcmask 25600
      %311 = vst.msk [vmem:[#allocation2 + $0x10] sm:$0x3] %vm310, 0.0
      %312 = vst.msk [vmem:[#allocation2 + $0x18] sm:$0xff] %vm307, 0.0
      %313 = vst.msk [vmem:[#allocation2 + $0x20] sm:$0xff] %vm307, 0.0
      %314 = vst.msk [vmem:[#allocation2 + $0x28] sm:$0x3] %vm310, 0.0
      %315 = vst.msk [vmem:[#allocation2 + $0x30] sm:$0xff] %vm307, 0.0
      %316 = vst.msk [vmem:[#allocation2 + $0x38] sm:$0xff] %vm307, 0.0
      %317 = vst.msk [vmem:[#allocation2 + $0x40] sm:$0x3] %vm310, 0.0
      %318 = vst.msk [vmem:[#allocation2 + $0x48] sm:$0xff] %vm307, 0.0
      %319 = vst.msk [vmem:[#allocation2 + $0x50] sm:$0xff] %vm307, 0.0
      %320 = vst.msk [vmem:[#allocation2 + $0x58] sm:$0x3] %vm310, 0.0
      %321 = vst.msk [vmem:[#allocation2 + $0x60] sm:$0xff] %vm307, 0.0
      %322 = vst.msk [vmem:[#allocation2 + $0x68] sm:$0xff] %vm307, 0.0
      %323 = vst.msk [vmem:[#allocation2 + $0x70] sm:$0x3] %vm310, 0.0
      %324 = vst.msk [vmem:[#allocation2 + $0x78] sm:$0xff] %vm307, 0.0
      %325 = vst.msk [vmem:[#allocation2 + $0x80] sm:$0xff] %vm307, 0.0
      %326 = vst.msk [vmem:[#allocation2 + $0x88] sm:$0x3] %vm310, 0.0
      %327 = vst.msk [vmem:[#allocation2 + $0x90] sm:$0xff] %vm307, 0.0
      %328 = vst.msk [vmem:[#allocation2 + $0x98] sm:$0xff] %vm307, 0.0
      %329 = vst.msk [vmem:[#allocation2 + $0xa0] sm:$0x3] %vm310, 0.0
      %330 = vst.msk [vmem:[#allocation2 + $0xa8] sm:$0xff] %vm307, 0.0
      %331 = vst.msk [vmem:[#allocation2 + $0xb0] sm:$0xff] %vm307, 0.0
      %332 = vst.msk [vmem:[#allocation2 + $0xb8] sm:$0x3] %vm310, 0.0
      %333 = vst.msk [vmem:[#allocation2 + $0xc0] sm:$0xff] %vm307, 0.0
      %334 = vst.msk [vmem:[#allocation2 + $0xc8] sm:$0xff] %vm307, 0.0
      %335 = vst.msk [vmem:[#allocation2 + $0xd0] sm:$0x3] %vm310, 0.0
      %336 = vst.msk [vmem:[#allocation2 + $0xd8] sm:$0xff] %vm307, 0.0
      %337 = vst.msk [vmem:[#allocation2 + $0xe0] sm:$0xff] %vm307, 0.0
      %338 = vst.msk [vmem:[#allocation2 + $0xe8] sm:$0x3] %vm310, 0.0
      %339 = vst.msk [vmem:[#allocation2 + $0xf0] sm:$0xff] %vm307, 0.0
      %340 = vst.msk [vmem:[#allocation2 + $0xf8] sm:$0xff] %vm307, 0.0
      %341 = vst.msk [vmem:[#allocation2 + $0x100] sm:$0x3] %vm310, 0.0
      %342 = vst.msk [vmem:[#allocation2 + $0x108] sm:$0xff] %vm307, 0.0
      %343 = vst.msk [vmem:[#allocation2 + $0x110] sm:$0xff] %vm307, 0.0
      %344 = vst.msk [vmem:[#allocation2 + $0x118] sm:$0x3] %vm310, 0.0
      %345 = vst.msk [vmem:[#allocation2 + $0x120] sm:$0xff] %vm307, 0.0
      %346 = vst.msk [vmem:[#allocation2 + $0x128] sm:$0xff] %vm307, 0.0
      %347 = vst.msk [vmem:[#allocation2 + $0x130] sm:$0x3] %vm310, 0.0
      %348 = vst.msk [vmem:[#allocation2 + $0x138] sm:$0xff] %vm307, 0.0
      %349 = vst.msk [vmem:[#allocation2 + $0x140] sm:$0xff] %vm307, 0.0
      %350 = vst.msk [vmem:[#allocation2 + $0x148] sm:$0x3] %vm310, 0.0
      %351 = vst.msk [vmem:[#allocation2 + $0x150] sm:$0xff] %vm307, 0.0
      %352 = vst.msk [vmem:[#allocation2 + $0x158] sm:$0xff] %vm307, 0.0
      %353 = vst.msk [vmem:[#allocation2 + $0x160] sm:$0x3] %vm310, 0.0
      %354 = vst.msk [vmem:[#allocation2 + $0x168] sm:$0xff] %vm307, 0.0
      %355 = vst.msk [vmem:[#allocation2 + $0x170] sm:$0xff] %vm307, 0.0
      %356 = vst.msk [vmem:[#allocation2 + $0x178] sm:$0x3] %vm310, 0.0
      %357 = vst.msk [vmem:[#allocation2 + $0x180] sm:$0xff] %vm307, 0.0
      %358 = vst.msk [vmem:[#allocation2 + $0x188] sm:$0xff] %vm307, 0.0
      %359 = vst.msk [vmem:[#allocation2 + $0x190] sm:$0x3] %vm310, 0.0
      %360 = vst.msk [vmem:[#allocation2 + $0x198] sm:$0xff] %vm307, 0.0
      %361 = vst.msk [vmem:[#allocation2 + $0x1a0] sm:$0xff] %vm307, 0.0
      %362 = vst.msk [vmem:[#allocation2 + $0x1a8] sm:$0x3] %vm310, 0.0
      %363 = vst.msk [vmem:[#allocation3] sm:$0xff] %vm307, 0.0
      %364 = vst.msk [vmem:[#allocation3 + $0x8] sm:$0xff] %vm307, 0.0
      %365 = vst.msk [vmem:[#allocation3 + $0x10] sm:$0x3] %vm310, 0.0
      %366 = vst.msk [vmem:[#allocation3 + $0x18] sm:$0xff] %vm307, 0.0
      %367 = vst.msk [vmem:[#allocation3 + $0x20] sm:$0xff] %vm307, 0.0
      %368 = vst.msk [vmem:[#allocation3 + $0x28] sm:$0x3] %vm310, 0.0
      %369 = vst.msk [vmem:[#allocation3 + $0x30] sm:$0xff] %vm307, 0.0
      %370 = vst.msk [vmem:[#allocation3 + $0x38] sm:$0xff] %vm307, 0.0
      %371 = vst.msk [vmem:[#allocation3 + $0x40] sm:$0x3] %vm310, 0.0
      %372 = vst.msk [vmem:[#allocation3 + $0x48] sm:$0xff] %vm307, 0.0
      %373 = vst.msk [vmem:[#allocation3 + $0x50] sm:$0xff] %vm307, 0.0
      %374 = vst.msk [vmem:[#allocation3 + $0x58] sm:$0x3] %vm310, 0.0
      %375 = vst.msk [vmem:[#allocation3 + $0x60] sm:$0xff] %vm307, 0.0
      %376 = vst.msk [vmem:[#allocation3 + $0x68] sm:$0xff] %vm307, 0.0
      %377 = vst.msk [vmem:[#allocation3 + $0x70] sm:$0x3] %vm310, 0.0
      %378 = vst.msk [vmem:[#allocation3 + $0x78] sm:$0xff] %vm307, 0.0
      %379 = vst.msk [vmem:[#allocation3 + $0x80] sm:$0xff] %vm307, 0.0
      %380 = vst.msk [vmem:[#allocation3 + $0x88] sm:$0x3] %vm310, 0.0
      %381 = vst.msk [vmem:[#allocation3 + $0x90] sm:$0xff] %vm307, 0.0
      %382 = vst.msk [vmem:[#allocation3 + $0x98] sm:$0xff] %vm307, 0.0
      %383 = vst.msk [vmem:[#allocation3 + $0xa0] sm:$0x3] %vm310, 0.0
      %384 = vst.msk [vmem:[#allocation3 + $0xa8] sm:$0xff] %vm307, 0.0
      %385 = vst.msk [vmem:[#allocation3 + $0xb0] sm:$0xff] %vm307, 0.0
      %386 = vst.msk [vmem:[#allocation3 + $0xb8] sm:$0x3] %vm310, 0.0
      %387 = vst.msk [vmem:[#allocation3 + $0xc0] sm:$0xff] %vm307, 0.0
      %388 = vst.msk [vmem:[#allocation3 + $0xc8] sm:$0xff] %vm307, 0.0
      %389 = vst.msk [vmem:[#allocation3 + $0xd0] sm:$0x3] %vm310, 0.0
      %390 = vst.msk [vmem:[#allocation3 + $0xd8] sm:$0xff] %vm307, 0.0
      %391 = vst.msk [vmem:[#allocation3 + $0xe0] sm:$0xff] %vm307, 0.0
      %392 = vst.msk [vmem:[#allocation3 + $0xe8] sm:$0x3] %vm310, 0.0
      %393 = vst.msk [vmem:[#allocation3 + $0xf0] sm:$0xff] %vm307, 0.0
      %394 = vst.msk [vmem:[#allocation3 + $0xf8] sm:$0xff] %vm307, 0.0
      %395 = vst.msk [vmem:[#allocation3 + $0x100] sm:$0x3] %vm310, 0.0
      %396 = vst.msk [vmem:[#allocation3 + $0x108] sm:$0xff] %vm307, 0.0
      %397 = vst.msk [vmem:[#allocation3 + $0x110] sm:$0xff] %vm307, 0.0
      %398 = vst.msk [vmem:[#allocation3 + $0x118] sm:$0x3] %vm310, 0.0
      %399 = vst.msk [vmem:[#allocation3 + $0x120] sm:$0xff] %vm307, 0.0
      %400 = vst.msk [vmem:[#allocation3 + $0x128] sm:$0xff] %vm307, 0.0
      %401 = vst.msk [vmem:[#allocation3 + $0x130] sm:$0x3] %vm310, 0.0
      %402 = vst.msk [vmem:[#allocation3 + $0x138] sm:$0xff] %vm307, 0.0
      %403 = vst.msk [vmem:[#allocation3 + $0x140] sm:$0xff] %vm307, 0.0
      %404 = vst.msk [vmem:[#allocation3 + $0x148] sm:$0x3] %vm310, 0.0
      %405 = vst.msk [vmem:[#allocation3 + $0x150] sm:$0xff] %vm307, 0.0
      %406 = vst.msk [vmem:[#allocation3 + $0x158] sm:$0xff] %vm307, 0.0
      %407 = vst.msk [vmem:[#allocation3 + $0x160] sm:$0x3] %vm310, 0.0
      %408 = vst.msk [vmem:[#allocation3 + $0x168] sm:$0xff] %vm307, 0.0
      %409 = vst.msk [vmem:[#allocation3 + $0x170] sm:$0xff] %vm307, 0.0
      %410 = vst.msk [vmem:[#allocation3 + $0x178] sm:$0x3] %vm310, 0.0
      %411 = vst.msk [vmem:[#allocation3 + $0x180] sm:$0xff] %vm307, 0.0
      %412 = vst.msk [vmem:[#allocation3 + $0x188] sm:$0xff] %vm307, 0.0
      %413 = vst.msk [vmem:[#allocation3 + $0x190] sm:$0x3] %vm310, 0.0
      %414 = vst.msk [vmem:[#allocation3 + $0x198] sm:$0xff] %vm307, 0.0
      %415 = vst.msk [vmem:[#allocation3 + $0x1a0] sm:$0xff] %vm307, 0.0
      %416 = vst.msk [vmem:[#allocation3 + $0x1a8] sm:$0x3] %vm310, 0.0
      %v417 = vld [vmem:[%s300] sm:$0xf]
      %v418 = vld [vmem:[%s300 + $0x4] sm:$0xf]
      %v419 = vld [vmem:[%s300 + $0x8] sm:$0xf]
      %v420 = vld [vmem:[%s300 + $0xc] sm:$0xf]
      %v421 = vld [vmem:[%s300 + $0x10] sm:$0xf]
      %v422 = vld [vmem:[%s300 + $0x14] sm:$0xf]
      %v423 = vld [vmem:[%s300 + $0x18] sm:$0xf]
      %v424 = vld [vmem:[%s300 + $0x1c] sm:$0xf]
      %v425 = vld [vmem:[%s300 + $0x20] sm:$0xf]
      %v426 = vld [vmem:[%s300 + $0x24] sm:$0xf]
      %v427 = vld [vmem:[%s300 + $0x28] sm:$0xf]
      %v428 = vld [vmem:[%s300 + $0x2c] sm:$0xf]
      %v429 = vld [vmem:[%s300 + $0x30] sm:$0xf]
      %v430 = vld [vmem:[%s300 + $0x34] sm:$0xf]
      %v431 = vld [vmem:[%s300 + $0x38] sm:$0xf]
      %v432 = vld [vmem:[%s300 + $0x3c] sm:$0xf]
      %v433 = vld [vmem:[%s300 + $0x40] sm:$0xf]
      %v434 = vld [vmem:[%s300 + $0x44] sm:$0xf]
      %v435 = vld [vmem:[%s300 + $0x48] sm:$0xf]
      %v436 = vld [vmem:[%s300 + $0x4c] sm:$0xf]
      %v437 = vld [vmem:[%s300 + $0x50] sm:$0xf]
      %v438 = vld [vmem:[%s300 + $0x54] sm:$0xf]
      %v439 = vld [vmem:[%s300 + $0x58] sm:$0xf]
      %v440 = vld [vmem:[%s300 + $0x5c] sm:$0xf]
      %v441 = vld [vmem:[%s300 + $0x60] sm:$0xf]
      %v442 = vld [vmem:[%s300 + $0x64] sm:$0xf]
      %v443 = vld [vmem:[%s300 + $0x68] sm:$0xf]
      %v444 = vld [vmem:[%s300 + $0x6c] sm:$0xf]
      %v445 = vld [vmem:[%s300 + $0x70] sm:$0xf]
      %v446 = vld [vmem:[%s300 + $0x74] sm:$0xf]
      %v447 = vld [vmem:[%s300 + $0x78] sm:$0xf]
      %v448 = vld [vmem:[%s300 + $0x7c] sm:$0xf]
      %v449 = vunpack.c.l.bf16 %v417
      %v450 = vunpack.c.l.bf16 %v418
      %v451 = vunpack.c.l.bf16 %v419
      %v452 = vunpack.c.l.bf16 %v420
      %v453 = vunpack.c.l.bf16 %v421
      %v454 = vunpack.c.l.bf16 %v422
      %v455 = vunpack.c.l.bf16 %v423
      %v456 = vunpack.c.l.bf16 %v424
      %v457 = vunpack.c.l.bf16 %v425
      %v458 = vunpack.c.l.bf16 %v426
      %v459 = vunpack.c.l.bf16 %v427
      %v460 = vunpack.c.l.bf16 %v428
      %v461 = vunpack.c.l.bf16 %v429
      %v462 = vunpack.c.l.bf16 %v430
      %v463 = vunpack.c.l.bf16 %v431
      %v464 = vunpack.c.l.bf16 %v432
      %v465 = vunpack.c.l.bf16 %v433
      %v466 = vunpack.c.l.bf16 %v434
      %v467 = vunpack.c.l.bf16 %v435
      %v468 = vunpack.c.l.bf16 %v436
      %v469 = vunpack.c.l.bf16 %v437
      %v470 = vunpack.c.l.bf16 %v438
      %v471 = vunpack.c.l.bf16 %v439
      %v472 = vunpack.c.l.bf16 %v440
      %v473 = vunpack.c.l.bf16 %v441
      %v474 = vunpack.c.l.bf16 %v442
      %v475 = vunpack.c.l.bf16 %v443
      %v476 = vunpack.c.l.bf16 %v444
      %v477 = vunpack.c.l.bf16 %v445
      %v478 = vunpack.c.l.bf16 %v446
      %v479 = vunpack.c.l.bf16 %v447
      %v480 = vunpack.c.l.bf16 %v448
      %v481 = vld [vmem:[%s3] sm:$0x1]
      %v483 = vlaneseq
      %v484 = vshrl.u32 %v483, 7
      %v485 = vsub.s32 0, %v484
      %v486 = vrot.slane %v481, %v485
      %v488 = vmul.f32 %v449, %v486
      %v489 = vmul.f32 %v450, %v486
      %v490 = vmul.f32 %v451, %v486
      %v491 = vmul.f32 %v452, %v486
      %v492 = vmul.f32 %v453, %v486
      %v493 = vmul.f32 %v454, %v486
      %v494 = vmul.f32 %v455, %v486
      %v495 = vmul.f32 %v456, %v486
      %v496 = vmul.f32 %v457, %v486
      %v497 = vmul.f32 %v458, %v486
      %v498 = vmul.f32 %v459, %v486
      %v499 = vmul.f32 %v460, %v486
      %v500 = vmul.f32 %v461, %v486
      %v501 = vmul.f32 %v462, %v486
      %v502 = vmul.f32 %v463, %v486
      %v503 = vmul.f32 %v464, %v486
      %v504 = vmul.f32 %v465, %v486
      %v505 = vmul.f32 %v466, %v486
      %v506 = vmul.f32 %v467, %v486
      %v507 = vmul.f32 %v468, %v486
      %v508 = vmul.f32 %v469, %v486
      %v509 = vmul.f32 %v470, %v486
      %v510 = vmul.f32 %v471, %v486
      %v511 = vmul.f32 %v472, %v486
      %v512 = vmul.f32 %v473, %v486
      %v513 = vmul.f32 %v474, %v486
      %v514 = vmul.f32 %v475, %v486
      %v515 = vmul.f32 %v476, %v486
      %v516 = vmul.f32 %v477, %v486
      %v517 = vmul.f32 %v478, %v486
      %v518 = vmul.f32 %v479, %v486
      %v519 = vmul.f32 %v480, %v486
      %v520 = vld [vmem:[%s4] sm:$0x1]
      %v522 = vlaneseq
      %v523 = vshrl.u32 %v522, 7
      %v524 = vsub.s32 0, %v523
      %v525 = vrot.slane %v520, %v524
      %v527 = vadd.f32 %v488, %v525
      %v528 = vadd.f32 %v489, %v525
      %v529 = vadd.f32 %v490, %v525
      %v530 = vadd.f32 %v491, %v525
      %v531 = vadd.f32 %v492, %v525
      %v532 = vadd.f32 %v493, %v525
      %v533 = vadd.f32 %v494, %v525
      %v534 = vadd.f32 %v495, %v525
      %v535 = vadd.f32 %v496, %v525
      %v536 = vadd.f32 %v497, %v525
      %v537 = vadd.f32 %v498, %v525
      %v538 = vadd.f32 %v499, %v525
      %v539 = vadd.f32 %v500, %v525
      %v540 = vadd.f32 %v501, %v525
      %v541 = vadd.f32 %v502, %v525
      %v542 = vadd.f32 %v503, %v525
      %v543 = vadd.f32 %v504, %v525
      %v544 = vadd.f32 %v505, %v525
      %v545 = vadd.f32 %v506, %v525
      %v546 = vadd.f32 %v507, %v525
      %v547 = vadd.f32 %v508, %v525
      %v548 = vadd.f32 %v509, %v525
      %v549 = vadd.f32 %v510, %v525
      %v550 = vadd.f32 %v511, %v525
      %v551 = vadd.f32 %v512, %v525
      %v552 = vadd.f32 %v513, %v525
      %v553 = vadd.f32 %v514, %v525
      %v554 = vadd.f32 %v515, %v525
      %v555 = vadd.f32 %v516, %v525
      %v556 = vadd.f32 %v517, %v525
      %v557 = vadd.f32 %v518, %v525
      %v558 = vadd.f32 %v519, %v525
      %v559 = vmax.f32 %v527, 0.0
      %v560 = vmax.f32 %v528, 0.0
      %v561 = vmax.f32 %v529, 0.0
      %v562 = vmax.f32 %v530, 0.0
      %v563 = vmax.f32 %v531, 0.0
      %v564 = vmax.f32 %v532, 0.0
      %v565 = vmax.f32 %v533, 0.0
      %v566 = vmax.f32 %v534, 0.0
      %v567 = vmax.f32 %v535, 0.0
      %v568 = vmax.f32 %v536, 0.0
      %v569 = vmax.f32 %v537, 0.0
      %v570 = vmax.f32 %v538, 0.0
      %v571 = vmax.f32 %v539, 0.0
      %v572 = vmax.f32 %v540, 0.0
      %v573 = vmax.f32 %v541, 0.0
      %v574 = vmax.f32 %v542, 0.0
      %v575 = vmax.f32 %v543, 0.0
      %v576 = vmax.f32 %v544, 0.0
      %v577 = vmax.f32 %v545, 0.0
      %v578 = vmax.f32 %v546, 0.0
      %v579 = vmax.f32 %v547, 0.0
      %v580 = vmax.f32 %v548, 0.0
      %v581 = vmax.f32 %v549, 0.0
      %v582 = vmax.f32 %v550, 0.0
      %v583 = vmax.f32 %v551, 0.0
      %v584 = vmax.f32 %v552, 0.0
      %v585 = vmax.f32 %v553, 0.0
      %v586 = vmax.f32 %v554, 0.0
      %v587 = vmax.f32 %v555, 0.0
      %v588 = vmax.f32 %v556, 0.0
      %v589 = vmax.f32 %v557, 0.0
      %v590 = vmax.f32 %v558, 0.0
      %s591 = scalar_lea.vmem [#allocation2], 24
      %592 = vst.msk [vmem:[%s591 + $0x1] sm:$0xff] %vm307, %v559
      %593 = vst.msk [vmem:[%s591 + $0x9] sm:$0xff] %vm307, %v560
      %594 = vst.msk [vmem:[%s591 + $0x19] sm:$0xff] %vm307, %v561
      %595 = vst.msk [vmem:[%s591 + $0x21] sm:$0xff] %vm307, %v562
      %596 = vst.msk [vmem:[%s591 + $0x31] sm:$0xff] %vm307, %v563
      %597 = vst.msk [vmem:[%s591 + $0x39] sm:$0xff] %vm307, %v564
      %598 = vst.msk [vmem:[%s591 + $0x49] sm:$0xff] %vm307, %v565
      %599 = vst.msk [vmem:[%s591 + $0x51] sm:$0xff] %vm307, %v566
      %600 = vst.msk [vmem:[%s591 + $0x61] sm:$0xff] %vm307, %v567
      %601 = vst.msk [vmem:[%s591 + $0x69] sm:$0xff] %vm307, %v568
      %602 = vst.msk [vmem:[%s591 + $0x79] sm:$0xff] %vm307, %v569
      %603 = vst.msk [vmem:[%s591 + $0x81] sm:$0xff] %vm307, %v570
      %604 = vst.msk [vmem:[%s591 + $0x91] sm:$0xff] %vm307, %v571
      %605 = vst.msk [vmem:[%s591 + $0x99] sm:$0xff] %vm307, %v572
      %606 = vst.msk [vmem:[%s591 + $0xa9] sm:$0xff] %vm307, %v573
      %607 = vst.msk [vmem:[%s591 + $0xb1] sm:$0xff] %vm307, %v574
      %608 = vst.msk [vmem:[%s591 + $0xc1] sm:$0xff] %vm307, %v575
      %609 = vst.msk [vmem:[%s591 + $0xc9] sm:$0xff] %vm307, %v576
      %610 = vst.msk [vmem:[%s591 + $0xd9] sm:$0xff] %vm307, %v577
      %611 = vst.msk [vmem:[%s591 + $0xe1] sm:$0xff] %vm307, %v578
      %612 = vst.msk [vmem:[%s591 + $0xf1] sm:$0xff] %vm307, %v579
      %613 = vst.msk [vmem:[%s591 + $0xf9] sm:$0xff] %vm307, %v580
      %614 = vst.msk [vmem:[%s591 + $0x109] sm:$0xff] %vm307, %v581
      %615 = vst.msk [vmem:[%s591 + $0x111] sm:$0xff] %vm307, %v582
      %616 = vst.msk [vmem:[%s591 + $0x121] sm:$0xff] %vm307, %v583
      %617 = vst.msk [vmem:[%s591 + $0x129] sm:$0xff] %vm307, %v584
      %618 = vst.msk [vmem:[%s591 + $0x139] sm:$0xff] %vm307, %v585
      %619 = vst.msk [vmem:[%s591 + $0x141] sm:$0xff] %vm307, %v586
      %620 = vst.msk [vmem:[%s591 + $0x151] sm:$0xff] %vm307, %v587
      %621 = vst.msk [vmem:[%s591 + $0x159] sm:$0xff] %vm307, %v588
      %622 = vst.msk [vmem:[%s591 + $0x169] sm:$0xff] %vm307, %v589
      %623 = vst.msk [vmem:[%s591 + $0x171] sm:$0xff] %vm307, %v590
      %v624 = vld [vmem:[#allocation2] sm:$0xff]
      %v625 = vld [vmem:[#allocation2 + $0x8] sm:$0xff]
      %v626 = vld [vmem:[#allocation2 + $0x18] sm:$0xff]
      %v627 = vld [vmem:[#allocation2 + $0x20] sm:$0xff]
      %v628 = vld [vmem:[#allocation2 + $0x30] sm:$0xff]
      %v629 = vld [vmem:[#allocation2 + $0x38] sm:$0xff]
      %v630 = vld [vmem:[#allocation2 + $0x48] sm:$0xff]
      %v631 = vld [vmem:[#allocation2 + $0x50] sm:$0xff]
      %v632 = vld [vmem:[#allocation2 + $0x60] sm:$0xff]
      %v633 = vld [vmem:[#allocation2 + $0x68] sm:$0xff]
      %v634 = vld [vmem:[#allocation2 + $0x78] sm:$0xff]
      %v635 = vld [vmem:[#allocation2 + $0x80] sm:$0xff]
      %v636 = vld [vmem:[#allocation2 + $0x90] sm:$0xff]
      %v637 = vld [vmem:[#allocation2 + $0x98] sm:$0xff]
      %v638 = vld [vmem:[#allocation2 + $0xa8] sm:$0xff]
      %v639 = vld [vmem:[#allocation2 + $0xb0] sm:$0xff]
      %v640 = vld [vmem:[#allocation2 + $0xc0] sm:$0xff]
      %v641 = vld [vmem:[#allocation2 + $0xc8] sm:$0xff]
      %v642 = vld [vmem:[#allocation2 + $0xd8] sm:$0xff]
      %v643 = vld [vmem:[#allocation2 + $0xe0] sm:$0xff]
      %v644 = vld [vmem:[#allocation2 + $0xf0] sm:$0xff]
      %v645 = vld [vmem:[#allocation2 + $0xf8] sm:$0xff]
      %v646 = vld [vmem:[#allocation2 + $0x108] sm:$0xff]
      %v647 = vld [vmem:[#allocation2 + $0x110] sm:$0xff]
      %v648 = vld [vmem:[#allocation2 + $0x120] sm:$0xff]
      %v649 = vld [vmem:[#allocation2 + $0x128] sm:$0xff]
      %v650 = vld [vmem:[#allocation2 + $0x138] sm:$0xff]
      %v651 = vld [vmem:[#allocation2 + $0x140] sm:$0xff]
      %v652 = vld [vmem:[#allocation2 + $0x150] sm:$0xff]
      %v653 = vld [vmem:[#allocation2 + $0x158] sm:$0xff]
      %v654 = vld [vmem:[#allocation2 + $0x168] sm:$0xff]
      %v655 = vld [vmem:[#allocation2 + $0x170] sm:$0xff]
      %v656 = vld [vmem:[#allocation2 + $0x1] sm:$0xff]
      %v657 = vld [vmem:[#allocation2 + $0x9] sm:$0xff]
      %v658 = vld [vmem:[#allocation2 + $0x19] sm:$0xff]
      %v659 = vld [vmem:[#allocation2 + $0x21] sm:$0xff]
      %v660 = vld [vmem:[#allocation2 + $0x31] sm:$0xff]
      %v661 = vld [vmem:[#allocation2 + $0x39] sm:$0xff]
      %v662 = vld [vmem:[#allocation2 + $0x49] sm:$0xff]
      %v663 = vld [vmem:[#allocation2 + $0x51] sm:$0xff]
      %v664 = vld [vmem:[#allocation2 + $0x61] sm:$0xff]
      %v665 = vld [vmem:[#allocation2 + $0x69] sm:$0xff]
      %v666 = vld [vmem:[#allocation2 + $0x79] sm:$0xff]
      %v667 = vld [vmem:[#allocation2 + $0x81] sm:$0xff]
      %v668 = vld [vmem:[#allocation2 + $0x91] sm:$0xff]
      %v669 = vld [vmem:[#allocation2 + $0x99] sm:$0xff]
      %v670 = vld [vmem:[#allocation2 + $0xa9] sm:$0xff]
      %v671 = vld [vmem:[#allocation2 + $0xb1] sm:$0xff]
      %v672 = vld [vmem:[#allocation2 + $0xc1] sm:$0xff]
      %v673 = vld [vmem:[#allocation2 + $0xc9] sm:$0xff]
      %v674 = vld [vmem:[#allocation2 + $0xd9] sm:$0xff]
      %v675 = vld [vmem:[#allocation2 + $0xe1] sm:$0xff]
      %v676 = vld [vmem:[#allocation2 + $0xf1] sm:$0xff]
      %v677 = vld [vmem:[#allocation2 + $0xf9] sm:$0xff]
      %v678 = vld [vmem:[#allocation2 + $0x109] sm:$0xff]
      %v679 = vld [vmem:[#allocation2 + $0x111] sm:$0xff]
      %v680 = vld [vmem:[#allocation2 + $0x121] sm:$0xff]
      %v681 = vld [vmem:[#allocation2 + $0x129] sm:$0xff]
      %v682 = vld [vmem:[#allocation2 + $0x139] sm:$0xff]
      %v683 = vld [vmem:[#allocation2 + $0x141] sm:$0xff]
      %v684 = vld [vmem:[#allocation2 + $0x151] sm:$0xff]
      %v685 = vld [vmem:[#allocation2 + $0x159] sm:$0xff]
      %v686 = vld [vmem:[#allocation2 + $0x169] sm:$0xff]
      %v687 = vld [vmem:[#allocation2 + $0x171] sm:$0xff]
      %v688 = vld [vmem:[#allocation2 + $0x2] sm:$0xff]
      %v689 = vld [vmem:[#allocation2 + $0xa] sm:$0xff]
      %v690 = vld [vmem:[#allocation2 + $0x1a] sm:$0xff]
      %v691 = vld [vmem:[#allocation2 + $0x22] sm:$0xff]
      %v692 = vld [vmem:[#allocation2 + $0x32] sm:$0xff]
      %v693 = vld [vmem:[#allocation2 + $0x3a] sm:$0xff]
      %v694 = vld [vmem:[#allocation2 + $0x4a] sm:$0xff]
      %v695 = vld [vmem:[#allocation2 + $0x52] sm:$0xff]
      %v696 = vld [vmem:[#allocation2 + $0x62] sm:$0xff]
      %v697 = vld [vmem:[#allocation2 + $0x6a] sm:$0xff]
      %v698 = vld [vmem:[#allocation2 + $0x7a] sm:$0xff]
      %v699 = vld [vmem:[#allocation2 + $0x82] sm:$0xff]
      %v700 = vld [vmem:[#allocation2 + $0x92] sm:$0xff]
      %v701 = vld [vmem:[#allocation2 + $0x9a] sm:$0xff]
      %v702 = vld [vmem:[#allocation2 + $0xaa] sm:$0xff]
      %v703 = vld [vmem:[#allocation2 + $0xb2] sm:$0xff]
      %v704 = vld [vmem:[#allocation2 + $0xc2] sm:$0xff]
      %v705 = vld [vmem:[#allocation2 + $0xca] sm:$0xff]
      %v706 = vld [vmem:[#allocation2 + $0xda] sm:$0xff]
      %v707 = vld [vmem:[#allocation2 + $0xe2] sm:$0xff]
      %v708 = vld [vmem:[#allocation2 + $0xf2] sm:$0xff]
      %v709 = vld [vmem:[#allocation2 + $0xfa] sm:$0xff]
      %v710 = vld [vmem:[#allocation2 + $0x10a] sm:$0xff]
      %v711 = vld [vmem:[#allocation2 + $0x112] sm:$0xff]
      %v712 = vld [vmem:[#allocation2 + $0x122] sm:$0xff]
      %v713 = vld [vmem:[#allocation2 + $0x12a] sm:$0xff]
      %v714 = vld [vmem:[#allocation2 + $0x13a] sm:$0xff]
      %v715 = vld [vmem:[#allocation2 + $0x142] sm:$0xff]
      %v716 = vld [vmem:[#allocation2 + $0x152] sm:$0xff]
      %v717 = vld [vmem:[#allocation2 + $0x15a] sm:$0xff]
      %v718 = vld [vmem:[#allocation2 + $0x16a] sm:$0xff]
      %v719 = vld [vmem:[#allocation2 + $0x172] sm:$0xff]
      %v720 = vld [vmem:[%s591] sm:$0xff]
      %v721 = vld [vmem:[%s591 + $0x8] sm:$0xff]
      %v722 = vld [vmem:[%s591 + $0x18] sm:$0xff]
      %v723 = vld [vmem:[%s591 + $0x20] sm:$0xff]
      %v724 = vld [vmem:[%s591 + $0x30] sm:$0xff]
      %v725 = vld [vmem:[%s591 + $0x38] sm:$0xff]
      %v726 = vld [vmem:[%s591 + $0x48] sm:$0xff]
      %v727 = vld [vmem:[%s591 + $0x50] sm:$0xff]
      %v728 = vld [vmem:[%s591 + $0x60] sm:$0xff]
      %v729 = vld [vmem:[%s591 + $0x68] sm:$0xff]
      %v730 = vld [vmem:[%s591 + $0x78] sm:$0xff]
      %v731 = vld [vmem:[%s591 + $0x80] sm:$0xff]
      %v732 = vld [vmem:[%s591 + $0x90] sm:$0xff]
      %v733 = vld [vmem:[%s591 + $0x98] sm:$0xff]
      %v734 = vld [vmem:[%s591 + $0xa8] sm:$0xff]
      %v735 = vld [vmem:[%s591 + $0xb0] sm:$0xff]
      %v736 = vld [vmem:[%s591 + $0xc0] sm:$0xff]
      %v737 = vld [vmem:[%s591 + $0xc8] sm:$0xff]
      %v738 = vld [vmem:[%s591 + $0xd8] sm:$0xff]
      %v739 = vld [vmem:[%s591 + $0xe0] sm:$0xff]
      %v740 = vld [vmem:[%s591 + $0xf0] sm:$0xff]
      %v741 = vld [vmem:[%s591 + $0xf8] sm:$0xff]
      %v742 = vld [vmem:[%s591 + $0x108] sm:$0xff]
      %v743 = vld [vmem:[%s591 + $0x110] sm:$0xff]
      %v744 = vld [vmem:[%s591 + $0x120] sm:$0xff]
      %v745 = vld [vmem:[%s591 + $0x128] sm:$0xff]
      %v746 = vld [vmem:[%s591 + $0x138] sm:$0xff]
      %v747 = vld [vmem:[%s591 + $0x140] sm:$0xff]
      %v748 = vld [vmem:[%s591 + $0x150] sm:$0xff]
      %v749 = vld [vmem:[%s591 + $0x158] sm:$0xff]
      %v750 = vld [vmem:[%s591 + $0x168] sm:$0xff]
      %v751 = vld [vmem:[%s591 + $0x170] sm:$0xff]
      %v752 = vld [vmem:[%s591 + $0x1] sm:$0xff]
      %v753 = vld [vmem:[%s591 + $0x9] sm:$0xff]
      %v754 = vld [vmem:[%s591 + $0x19] sm:$0xff]
      %v755 = vld [vmem:[%s591 + $0x21] sm:$0xff]
      %v756 = vld [vmem:[%s591 + $0x31] sm:$0xff]
      %v757 = vld [vmem:[%s591 + $0x39] sm:$0xff]
      %v758 = vld [vmem:[%s591 + $0x49] sm:$0xff]
      %v759 = vld [vmem:[%s591 + $0x51] sm:$0xff]
      %v760 = vld [vmem:[%s591 + $0x61] sm:$0xff]
      %v761 = vld [vmem:[%s591 + $0x69] sm:$0xff]
      %v762 = vld [vmem:[%s591 + $0x79] sm:$0xff]
      %v763 = vld [vmem:[%s591 + $0x81] sm:$0xff]
      %v764 = vld [vmem:[%s591 + $0x91] sm:$0xff]
      %v765 = vld [vmem:[%s591 + $0x99] sm:$0xff]
      %v766 = vld [vmem:[%s591 + $0xa9] sm:$0xff]
      %v767 = vld [vmem:[%s591 + $0xb1] sm:$0xff]
      %v768 = vld [vmem:[%s591 + $0xc1] sm:$0xff]
      %v769 = vld [vmem:[%s591 + $0xc9] sm:$0xff]
      %v770 = vld [vmem:[%s591 + $0xd9] sm:$0xff]
      %v771 = vld [vmem:[%s591 + $0xe1] sm:$0xff]
      %v772 = vld [vmem:[%s591 + $0xf1] sm:$0xff]
      %v773 = vld [vmem:[%s591 + $0xf9] sm:$0xff]
      %v774 = vld [vmem:[%s591 + $0x109] sm:$0xff]
      %v775 = vld [vmem:[%s591 + $0x111] sm:$0xff]
      %v776 = vld [vmem:[%s591 + $0x121] sm:$0xff]
      %v777 = vld [vmem:[%s591 + $0x129] sm:$0xff]
      %v778 = vld [vmem:[%s591 + $0x139] sm:$0xff]
      %v779 = vld [vmem:[%s591 + $0x141] sm:$0xff]
      %v780 = vld [vmem:[%s591 + $0x151] sm:$0xff]
      %v781 = vld [vmem:[%s591 + $0x159] sm:$0xff]
      %v782 = vld [vmem:[%s591 + $0x169] sm:$0xff]
      %v783 = vld [vmem:[%s591 + $0x171] sm:$0xff]
      %v784 = vld [vmem:[%s591 + $0x2] sm:$0xff]
      %v785 = vld [vmem:[%s591 + $0xa] sm:$0xff]
      %v786 = vld [vmem:[%s591 + $0x1a] sm:$0xff]
      %v787 = vld [vmem:[%s591 + $0x22] sm:$0xff]
      %v788 = vld [vmem:[%s591 + $0x32] sm:$0xff]
      %v789 = vld [vmem:[%s591 + $0x3a] sm:$0xff]
      %v790 = vld [vmem:[%s591 + $0x4a] sm:$0xff]
      %v791 = vld [vmem:[%s591 + $0x52] sm:$0xff]
      %v792 = vld [vmem:[%s591 + $0x62] sm:$0xff]
      %v793 = vld [vmem:[%s591 + $0x6a] sm:$0xff]
      %v794 = vld [vmem:[%s591 + $0x7a] sm:$0xff]
      %v795 = vld [vmem:[%s591 + $0x82] sm:$0xff]
      %v796 = vld [vmem:[%s591 + $0x92] sm:$0xff]
      %v797 = vld [vmem:[%s591 + $0x9a] sm:$0xff]
      %v798 = vld [vmem:[%s591 + $0xaa] sm:$0xff]
      %v799 = vld [vmem:[%s591 + $0xb2] sm:$0xff]
      %v800 = vld [vmem:[%s591 + $0xc2] sm:$0xff]
      %v801 = vld [vmem:[%s591 + $0xca] sm:$0xff]
      %v802 = vld [vmem:[%s591 + $0xda] sm:$0xff]
      %v803 = vld [vmem:[%s591 + $0xe2] sm:$0xff]
      %v804 = vld [vmem:[%s591 + $0xf2] sm:$0xff]
      %v805 = vld [vmem:[%s591 + $0xfa] sm:$0xff]
      %v806 = vld [vmem:[%s591 + $0x10a] sm:$0xff]
      %v807 = vld [vmem:[%s591 + $0x112] sm:$0xff]
      %v808 = vld [vmem:[%s591 + $0x122] sm:$0xff]
      %v809 = vld [vmem:[%s591 + $0x12a] sm:$0xff]
      %v810 = vld [vmem:[%s591 + $0x13a] sm:$0xff]
      %v811 = vld [vmem:[%s591 + $0x142] sm:$0xff]
      %v812 = vld [vmem:[%s591 + $0x152] sm:$0xff]
      %v813 = vld [vmem:[%s591 + $0x15a] sm:$0xff]
      %v814 = vld [vmem:[%s591 + $0x16a] sm:$0xff]
      %v815 = vld [vmem:[%s591 + $0x172] sm:$0xff]
      %s816 = scalar_lea.vmem [#allocation2], 48
      %v817 = vld [vmem:[%s816] sm:$0xff]
      %v818 = vld [vmem:[%s816 + $0x8] sm:$0xff]
      %v819 = vld [vmem:[%s816 + $0x18] sm:$0xff]
      %v820 = vld [vmem:[%s816 + $0x20] sm:$0xff]
      %v821 = vld [vmem:[%s816 + $0x30] sm:$0xff]
      %v822 = vld [vmem:[%s816 + $0x38] sm:$0xff]
      %v823 = vld [vmem:[%s816 + $0x48] sm:$0xff]
      %v824 = vld [vmem:[%s816 + $0x50] sm:$0xff]
      %v825 = vld [vmem:[%s816 + $0x60] sm:$0xff]
      %v826 = vld [vmem:[%s816 + $0x68] sm:$0xff]
      %v827 = vld [vmem:[%s816 + $0x78] sm:$0xff]
      %v828 = vld [vmem:[%s816 + $0x80] sm:$0xff]
      %v829 = vld [vmem:[%s816 + $0x90] sm:$0xff]
      %v830 = vld [vmem:[%s816 + $0x98] sm:$0xff]
      %v831 = vld [vmem:[%s816 + $0xa8] sm:$0xff]
      %v832 = vld [vmem:[%s816 + $0xb0] sm:$0xff]
      %v833 = vld [vmem:[%s816 + $0xc0] sm:$0xff]
      %v834 = vld [vmem:[%s816 + $0xc8] sm:$0xff]
      %v835 = vld [vmem:[%s816 + $0xd8] sm:$0xff]
      %v836 = vld [vmem:[%s816 + $0xe0] sm:$0xff]
      %v837 = vld [vmem:[%s816 + $0xf0] sm:$0xff]
      %v838 = vld [vmem:[%s816 + $0xf8] sm:$0xff]
      %v839 = vld [vmem:[%s816 + $0x108] sm:$0xff]
      %v840 = vld [vmem:[%s816 + $0x110] sm:$0xff]
      %v841 = vld [vmem:[%s816 + $0x120] sm:$0xff]
      %v842 = vld [vmem:[%s816 + $0x128] sm:$0xff]
      %v843 = vld [vmem:[%s816 + $0x138] sm:$0xff]
      %v844 = vld [vmem:[%s816 + $0x140] sm:$0xff]
      %v845 = vld [vmem:[%s816 + $0x150] sm:$0xff]
      %v846 = vld [vmem:[%s816 + $0x158] sm:$0xff]
      %v847 = vld [vmem:[%s816 + $0x168] sm:$0xff]
      %v848 = vld [vmem:[%s816 + $0x170] sm:$0xff]
      %v849 = vld [vmem:[%s816 + $0x1] sm:$0xff]
      %v850 = vld [vmem:[%s816 + $0x9] sm:$0xff]
      %v851 = vld [vmem:[%s816 + $0x19] sm:$0xff]
      %v852 = vld [vmem:[%s816 + $0x21] sm:$0xff]
      %v853 = vld [vmem:[%s816 + $0x31] sm:$0xff]
      %v854 = vld [vmem:[%s816 + $0x39] sm:$0xff]
      %v855 = vld [vmem:[%s816 + $0x49] sm:$0xff]
      %v856 = vld [vmem:[%s816 + $0x51] sm:$0xff]
      %v857 = vld [vmem:[%s816 + $0x61] sm:$0xff]
      %v858 = vld [vmem:[%s816 + $0x69] sm:$0xff]
      %v859 = vld [vmem:[%s816 + $0x79] sm:$0xff]
      %v860 = vld [vmem:[%s816 + $0x81] sm:$0xff]
      %v861 = vld [vmem:[%s816 + $0x91] sm:$0xff]
      %v862 = vld [vmem:[%s816 + $0x99] sm:$0xff]
      %v863 = vld [vmem:[%s816 + $0xa9] sm:$0xff]
      %v864 = vld [vmem:[%s816 + $0xb1] sm:$0xff]
      %v865 = vld [vmem:[%s816 + $0xc1] sm:$0xff]
      %v866 = vld [vmem:[%s816 + $0xc9] sm:$0xff]
      %v867 = vld [vmem:[%s816 + $0xd9] sm:$0xff]
      %v868 = vld [vmem:[%s816 + $0xe1] sm:$0xff]
      %v869 = vld [vmem:[%s816 + $0xf1] sm:$0xff]
      %v870 = vld [vmem:[%s816 + $0xf9] sm:$0xff]
      %v871 = vld [vmem:[%s816 + $0x109] sm:$0xff]
      %v872 = vld [vmem:[%s816 + $0x111] sm:$0xff]
      %v873 = vld [vmem:[%s816 + $0x121] sm:$0xff]
      %v874 = vld [vmem:[%s816 + $0x129] sm:$0xff]
      %v875 = vld [vmem:[%s816 + $0x139] sm:$0xff]
      %v876 = vld [vmem:[%s816 + $0x141] sm:$0xff]
      %v877 = vld [vmem:[%s816 + $0x151] sm:$0xff]
      %v878 = vld [vmem:[%s816 + $0x159] sm:$0xff]
      %v879 = vld [vmem:[%s816 + $0x169] sm:$0xff]
      %v880 = vld [vmem:[%s816 + $0x171] sm:$0xff]
      %v881 = vld [vmem:[%s816 + $0x2] sm:$0xff]
      %v882 = vld [vmem:[%s816 + $0xa] sm:$0xff]
      %v883 = vld [vmem:[%s816 + $0x1a] sm:$0xff]
      %v884 = vld [vmem:[%s816 + $0x22] sm:$0xff]
      %v885 = vld [vmem:[%s816 + $0x32] sm:$0xff]
      %v886 = vld [vmem:[%s816 + $0x3a] sm:$0xff]
      %v887 = vld [vmem:[%s816 + $0x4a] sm:$0xff]
      %v888 = vld [vmem:[%s816 + $0x52] sm:$0xff]
      %v889 = vld [vmem:[%s816 + $0x62] sm:$0xff]
      %v890 = vld [vmem:[%s816 + $0x6a] sm:$0xff]
      %v891 = vld [vmem:[%s816 + $0x7a] sm:$0xff]
      %v892 = vld [vmem:[%s816 + $0x82] sm:$0xff]
      %v893 = vld [vmem:[%s816 + $0x92] sm:$0xff]
      %v894 = vld [vmem:[%s816 + $0x9a] sm:$0xff]
      %v895 = vld [vmem:[%s816 + $0xaa] sm:$0xff]
      %v896 = vld [vmem:[%s816 + $0xb2] sm:$0xff]
      %v897 = vld [vmem:[%s816 + $0xc2] sm:$0xff]
      %v898 = vld [vmem:[%s816 + $0xca] sm:$0xff]
      %v899 = vld [vmem:[%s816 + $0xda] sm:$0xff]
      %v900 = vld [vmem:[%s816 + $0xe2] sm:$0xff]
      %v901 = vld [vmem:[%s816 + $0xf2] sm:$0xff]
      %v902 = vld [vmem:[%s816 + $0xfa] sm:$0xff]
      %v903 = vld [vmem:[%s816 + $0x10a] sm:$0xff]
      %v904 = vld [vmem:[%s816 + $0x112] sm:$0xff]
      %v905 = vld [vmem:[%s816 + $0x122] sm:$0xff]
      %v906 = vld [vmem:[%s816 + $0x12a] sm:$0xff]
      %v907 = vld [vmem:[%s816 + $0x13a] sm:$0xff]
      %v908 = vld [vmem:[%s816 + $0x142] sm:$0xff]
      %v909 = vld [vmem:[%s816 + $0x152] sm:$0xff]
      %v910 = vld [vmem:[%s816 + $0x15a] sm:$0xff]
      %v911 = vld [vmem:[%s816 + $0x16a] sm:$0xff]
      %v912 = vld [vmem:[%s816 + $0x172] sm:$0xff]
      %945 = vrot.lane.b32.xlu0 %v656, 4
      %v946 = vpop.permute.xlu0 %945
      %947 = vrot.lane.b32.xlu0 %v657, 4
      %v948 = vpop.permute.xlu0 %947
      %949 = vrot.lane.b32.xlu0 %v658, 4
      %v950 = vpop.permute.xlu0 %949
      %951 = vrot.lane.b32.xlu0 %v659, 4
      %v952 = vpop.permute.xlu0 %951
      %953 = vrot.lane.b32.xlu0 %v660, 4
      %v954 = vpop.permute.xlu0 %953
      %955 = vrot.lane.b32.xlu0 %v661, 4
      %v956 = vpop.permute.xlu0 %955
      %957 = vrot.lane.b32.xlu0 %v662, 4
      %v958 = vpop.permute.xlu0 %957
      %959 = vrot.lane.b32.xlu0 %v663, 4
      %v960 = vpop.permute.xlu0 %959
      %961 = vrot.lane.b32.xlu0 %v664, 4
      %v962 = vpop.permute.xlu0 %961
      %963 = vrot.lane.b32.xlu0 %v665, 4
      %v964 = vpop.permute.xlu0 %963
      %965 = vrot.lane.b32.xlu0 %v666, 4
      %v966 = vpop.permute.xlu0 %965
      %967 = vrot.lane.b32.xlu0 %v667, 4
      %v968 = vpop.permute.xlu0 %967
      %969 = vrot.lane.b32.xlu0 %v668, 4
      %v970 = vpop.permute.xlu0 %969
      %971 = vrot.lane.b32.xlu0 %v669, 4
      %v972 = vpop.permute.xlu0 %971
      %973 = vrot.lane.b32.xlu0 %v670, 4
      %v974 = vpop.permute.xlu0 %973
      %975 = vrot.lane.b32.xlu0 %v671, 4
      %v976 = vpop.permute.xlu0 %975
      %977 = vrot.lane.b32.xlu0 %v672, 4
      %v978 = vpop.permute.xlu0 %977
      %979 = vrot.lane.b32.xlu0 %v673, 4
      %v980 = vpop.permute.xlu0 %979
      %981 = vrot.lane.b32.xlu0 %v674, 4
      %v982 = vpop.permute.xlu0 %981
      %983 = vrot.lane.b32.xlu0 %v675, 4
      %v984 = vpop.permute.xlu0 %983
      %985 = vrot.lane.b32.xlu0 %v676, 4
      %v986 = vpop.permute.xlu0 %985
      %987 = vrot.lane.b32.xlu0 %v677, 4
      %v988 = vpop.permute.xlu0 %987
      %989 = vrot.lane.b32.xlu0 %v678, 4
      %v990 = vpop.permute.xlu0 %989
      %991 = vrot.lane.b32.xlu0 %v679, 4
      %v992 = vpop.permute.xlu0 %991
      %993 = vrot.lane.b32.xlu0 %v680, 4
      %v994 = vpop.permute.xlu0 %993
      %995 = vrot.lane.b32.xlu0 %v681, 4
      %v996 = vpop.permute.xlu0 %995
      %997 = vrot.lane.b32.xlu0 %v682, 4
      %v998 = vpop.permute.xlu0 %997
      %999 = vrot.lane.b32.xlu0 %v683, 4
      %v1000 = vpop.permute.xlu0 %999
      %1001 = vrot.lane.b32.xlu0 %v684, 4
      %v1002 = vpop.permute.xlu0 %1001
      %1003 = vrot.lane.b32.xlu0 %v685, 4
      %v1004 = vpop.permute.xlu0 %1003
      %1005 = vrot.lane.b32.xlu0 %v686, 4
      %v1006 = vpop.permute.xlu0 %1005
      %1007 = vrot.lane.b32.xlu0 %v687, 4
      %v1008 = vpop.permute.xlu0 %1007
      %1073 = vrot.lane.b32.xlu0 %v688, 8
      %v1074 = vpop.permute.xlu0 %1073
      %1075 = vrot.lane.b32.xlu0 %v689, 8
      %v1076 = vpop.permute.xlu0 %1075
      %1077 = vrot.lane.b32.xlu0 %v690, 8
      %v1078 = vpop.permute.xlu0 %1077
      %1079 = vrot.lane.b32.xlu0 %v691, 8
      %v1080 = vpop.permute.xlu0 %1079
      %1081 = vrot.lane.b32.xlu0 %v692, 8
      %v1082 = vpop.permute.xlu0 %1081
      %1083 = vrot.lane.b32.xlu0 %v693, 8
      %v1084 = vpop.permute.xlu0 %1083
      %1085 = vrot.lane.b32.xlu0 %v694, 8
      %v1086 = vpop.permute.xlu0 %1085
      %1087 = vrot.lane.b32.xlu0 %v695, 8
      %v1088 = vpop.permute.xlu0 %1087
      %1089 = vrot.lane.b32.xlu0 %v696, 8
      %v1090 = vpop.permute.xlu0 %1089
      %1091 = vrot.lane.b32.xlu0 %v697, 8
      %v1092 = vpop.permute.xlu0 %1091
      %1093 = vrot.lane.b32.xlu0 %v698, 8
      %v1094 = vpop.permute.xlu0 %1093
      %1095 = vrot.lane.b32.xlu0 %v699, 8
      %v1096 = vpop.permute.xlu0 %1095
      %1097 = vrot.lane.b32.xlu0 %v700, 8
      %v1098 = vpop.permute.xlu0 %1097
      %1099 = vrot.lane.b32.xlu0 %v701, 8
      %v1100 = vpop.permute.xlu0 %1099
      %1101 = vrot.lane.b32.xlu0 %v702, 8
      %v1102 = vpop.permute.xlu0 %1101
      %1103 = vrot.lane.b32.xlu0 %v703, 8
      %v1104 = vpop.permute.xlu0 %1103
      %1105 = vrot.lane.b32.xlu0 %v704, 8
      %v1106 = vpop.permute.xlu0 %1105
      %1107 = vrot.lane.b32.xlu0 %v705, 8
      %v1108 = vpop.permute.xlu0 %1107
      %1109 = vrot.lane.b32.xlu0 %v706, 8
      %v1110 = vpop.permute.xlu0 %1109
      %1111 = vrot.lane.b32.xlu0 %v707, 8
      %v1112 = vpop.permute.xlu0 %1111
      %1113 = vrot.lane.b32.xlu0 %v708, 8
      %v1114 = vpop.permute.xlu0 %1113
      %1115 = vrot.lane.b32.xlu0 %v709, 8
      %v1116 = vpop.permute.xlu0 %1115
      %1117 = vrot.lane.b32.xlu0 %v710, 8
      %v1118 = vpop.permute.xlu0 %1117
      %1119 = vrot.lane.b32.xlu0 %v711, 8
      %v1120 = vpop.permute.xlu0 %1119
      %1121 = vrot.lane.b32.xlu0 %v712, 8
      %v1122 = vpop.permute.xlu0 %1121
      %1123 = vrot.lane.b32.xlu0 %v713, 8
      %v1124 = vpop.permute.xlu0 %1123
      %1125 = vrot.lane.b32.xlu0 %v714, 8
      %v1126 = vpop.permute.xlu0 %1125
      %1127 = vrot.lane.b32.xlu0 %v715, 8
      %v1128 = vpop.permute.xlu0 %1127
      %1129 = vrot.lane.b32.xlu0 %v716, 8
      %v1130 = vpop.permute.xlu0 %1129
      %1131 = vrot.lane.b32.xlu0 %v717, 8
      %v1132 = vpop.permute.xlu0 %1131
      %1133 = vrot.lane.b32.xlu0 %v718, 8
      %v1134 = vpop.permute.xlu0 %1133
      %1135 = vrot.lane.b32.xlu0 %v719, 8
      %v1136 = vpop.permute.xlu0 %1135
      %1201 = vrot.lane.b32.xlu0 %v720, 12
      %v1202 = vpop.permute.xlu0 %1201
      %1203 = vrot.lane.b32.xlu0 %v721, 12
      %v1204 = vpop.permute.xlu0 %1203
      %1205 = vrot.lane.b32.xlu0 %v722, 12
      %v1206 = vpop.permute.xlu0 %1205
      %1207 = vrot.lane.b32.xlu0 %v723, 12
      %v1208 = vpop.permute.xlu0 %1207
      %1209 = vrot.lane.b32.xlu0 %v724, 12
      %v1210 = vpop.permute.xlu0 %1209
      %1211 = vrot.lane.b32.xlu0 %v725, 12
      %v1212 = vpop.permute.xlu0 %1211
      %1213 = vrot.lane.b32.xlu0 %v726, 12
      %v1214 = vpop.permute.xlu0 %1213
      %1215 = vrot.lane.b32.xlu0 %v727, 12
      %v1216 = vpop.permute.xlu0 %1215
      %1217 = vrot.lane.b32.xlu0 %v728, 12
      %v1218 = vpop.permute.xlu0 %1217
      %1219 = vrot.lane.b32.xlu0 %v729, 12
      %v1220 = vpop.permute.xlu0 %1219
      %1221 = vrot.lane.b32.xlu0 %v730, 12
      %v1222 = vpop.permute.xlu0 %1221
      %1223 = vrot.lane.b32.xlu0 %v731, 12
      %v1224 = vpop.permute.xlu0 %1223
      %1225 = vrot.lane.b32.xlu0 %v732, 12
      %v1226 = vpop.permute.xlu0 %1225
      %1227 = vrot.lane.b32.xlu0 %v733, 12
      %v1228 = vpop.permute.xlu0 %1227
      %1229 = vrot.lane.b32.xlu0 %v734, 12
      %v1230 = vpop.permute.xlu0 %1229
      %1231 = vrot.lane.b32.xlu0 %v735, 12
      %v1232 = vpop.permute.xlu0 %1231
      %1233 = vrot.lane.b32.xlu0 %v736, 12
      %v1234 = vpop.permute.xlu0 %1233
      %1235 = vrot.lane.b32.xlu0 %v737, 12
      %v1236 = vpop.permute.xlu0 %1235
      %1237 = vrot.lane.b32.xlu0 %v738, 12
      %v1238 = vpop.permute.xlu0 %1237
      %1239 = vrot.lane.b32.xlu0 %v739, 12
      %v1240 = vpop.permute.xlu0 %1239
      %1241 = vrot.lane.b32.xlu0 %v740, 12
      %v1242 = vpop.permute.xlu0 %1241
      %1243 = vrot.lane.b32.xlu0 %v741, 12
      %v1244 = vpop.permute.xlu0 %1243
      %1245 = vrot.lane.b32.xlu0 %v742, 12
      %v1246 = vpop.permute.xlu0 %1245
      %1247 = vrot.lane.b32.xlu0 %v743, 12
      %v1248 = vpop.permute.xlu0 %1247
      %1249 = vrot.lane.b32.xlu0 %v744, 12
      %v1250 = vpop.permute.xlu0 %1249
      %1251 = vrot.lane.b32.xlu0 %v745, 12
      %v1252 = vpop.permute.xlu0 %1251
      %1253 = vrot.lane.b32.xlu0 %v746, 12
      %v1254 = vpop.permute.xlu0 %1253
      %1255 = vrot.lane.b32.xlu0 %v747, 12
      %v1256 = vpop.permute.xlu0 %1255
      %1257 = vrot.lane.b32.xlu0 %v748, 12
      %v1258 = vpop.permute.xlu0 %1257
      %1259 = vrot.lane.b32.xlu0 %v749, 12
      %v1260 = vpop.permute.xlu0 %1259
      %1261 = vrot.lane.b32.xlu0 %v750, 12
      %v1262 = vpop.permute.xlu0 %1261
      %1263 = vrot.lane.b32.xlu0 %v751, 12
      %v1264 = vpop.permute.xlu0 %1263
      %1329 = vrot.lane.b32.xlu0 %v752, 16
      %v1330 = vpop.permute.xlu0 %1329
      %1331 = vrot.lane.b32.xlu0 %v753, 16
      %v1332 = vpop.permute.xlu0 %1331
      %1333 = vrot.lane.b32.xlu0 %v754, 16
      %v1334 = vpop.permute.xlu0 %1333
      %1335 = vrot.lane.b32.xlu0 %v755, 16
      %v1336 = vpop.permute.xlu0 %1335
      %1337 = vrot.lane.b32.xlu0 %v756, 16
      %v1338 = vpop.permute.xlu0 %1337
      %1339 = vrot.lane.b32.xlu0 %v757, 16
      %v1340 = vpop.permute.xlu0 %1339
      %1341 = vrot.lane.b32.xlu0 %v758, 16
      %v1342 = vpop.permute.xlu0 %1341
      %1343 = vrot.lane.b32.xlu0 %v759, 16
      %v1344 = vpop.permute.xlu0 %1343
      %1345 = vrot.lane.b32.xlu0 %v760, 16
      %v1346 = vpop.permute.xlu0 %1345
      %1347 = vrot.lane.b32.xlu0 %v761, 16
      %v1348 = vpop.permute.xlu0 %1347
      %1349 = vrot.lane.b32.xlu0 %v762, 16
      %v1350 = vpop.permute.xlu0 %1349
      %1351 = vrot.lane.b32.xlu0 %v763, 16
      %v1352 = vpop.permute.xlu0 %1351
      %1353 = vrot.lane.b32.xlu0 %v764, 16
      %v1354 = vpop.permute.xlu0 %1353
      %1355 = vrot.lane.b32.xlu0 %v765, 16
      %v1356 = vpop.permute.xlu0 %1355
      %1357 = vrot.lane.b32.xlu0 %v766, 16
      %v1358 = vpop.permute.xlu0 %1357
      %1359 = vrot.lane.b32.xlu0 %v767, 16
      %v1360 = vpop.permute.xlu0 %1359
      %1361 = vrot.lane.b32.xlu0 %v768, 16
      %v1362 = vpop.permute.xlu0 %1361
      %1363 = vrot.lane.b32.xlu0 %v769, 16
      %v1364 = vpop.permute.xlu0 %1363
      %1365 = vrot.lane.b32.xlu0 %v770, 16
      %v1366 = vpop.permute.xlu0 %1365
      %1367 = vrot.lane.b32.xlu0 %v771, 16
      %v1368 = vpop.permute.xlu0 %1367
      %1369 = vrot.lane.b32.xlu0 %v772, 16
      %v1370 = vpop.permute.xlu0 %1369
      %1371 = vrot.lane.b32.xlu0 %v773, 16
      %v1372 = vpop.permute.xlu0 %1371
      %1373 = vrot.lane.b32.xlu0 %v774, 16
      %v1374 = vpop.permute.xlu0 %1373
      %1375 = vrot.lane.b32.xlu0 %v775, 16
      %v1376 = vpop.permute.xlu0 %1375
      %1377 = vrot.lane.b32.xlu0 %v776, 16
      %v1378 = vpop.permute.xlu0 %1377
      %1379 = vrot.lane.b32.xlu0 %v777, 16
      %v1380 = vpop.permute.xlu0 %1379
      %1381 = vrot.lane.b32.xlu0 %v778, 16
      %v1382 = vpop.permute.xlu0 %1381
      %1383 = vrot.lane.b32.xlu0 %v779, 16
      %v1384 = vpop.permute.xlu0 %1383
      %1385 = vrot.lane.b32.xlu0 %v780, 16
      %v1386 = vpop.permute.xlu0 %1385
      %1387 = vrot.lane.b32.xlu0 %v781, 16
      %v1388 = vpop.permute.xlu0 %1387
      %1389 = vrot.lane.b32.xlu0 %v782, 16
      %v1390 = vpop.permute.xlu0 %1389
      %1391 = vrot.lane.b32.xlu0 %v783, 16
      %v1392 = vpop.permute.xlu0 %1391
      %1457 = vrot.lane.b32.xlu0 %v784, 20
      %v1458 = vpop.permute.xlu0 %1457
      %1459 = vrot.lane.b32.xlu0 %v785, 20
      %v1460 = vpop.permute.xlu0 %1459
      %1461 = vrot.lane.b32.xlu0 %v786, 20
      %v1462 = vpop.permute.xlu0 %1461
      %1463 = vrot.lane.b32.xlu0 %v787, 20
      %v1464 = vpop.permute.xlu0 %1463
      %1465 = vrot.lane.b32.xlu0 %v788, 20
      %v1466 = vpop.permute.xlu0 %1465
      %1467 = vrot.lane.b32.xlu0 %v789, 20
      %v1468 = vpop.permute.xlu0 %1467
      %1469 = vrot.lane.b32.xlu0 %v790, 20
      %v1470 = vpop.permute.xlu0 %1469
      %1471 = vrot.lane.b32.xlu0 %v791, 20
      %v1472 = vpop.permute.xlu0 %1471
      %1473 = vrot.lane.b32.xlu0 %v792, 20
      %v1474 = vpop.permute.xlu0 %1473
      %1475 = vrot.lane.b32.xlu0 %v793, 20
      %v1476 = vpop.permute.xlu0 %1475
      %1477 = vrot.lane.b32.xlu0 %v794, 20
      %v1478 = vpop.permute.xlu0 %1477
      %1479 = vrot.lane.b32.xlu0 %v795, 20
      %v1480 = vpop.permute.xlu0 %1479
      %1481 = vrot.lane.b32.xlu0 %v796, 20
      %v1482 = vpop.permute.xlu0 %1481
      %1483 = vrot.lane.b32.xlu0 %v797, 20
      %v1484 = vpop.permute.xlu0 %1483
      %1485 = vrot.lane.b32.xlu0 %v798, 20
      %v1486 = vpop.permute.xlu0 %1485
      %1487 = vrot.lane.b32.xlu0 %v799, 20
      %v1488 = vpop.permute.xlu0 %1487
      %1489 = vrot.lane.b32.xlu0 %v800, 20
      %v1490 = vpop.permute.xlu0 %1489
      %1491 = vrot.lane.b32.xlu0 %v801, 20
      %v1492 = vpop.permute.xlu0 %1491
      %1493 = vrot.lane.b32.xlu0 %v802, 20
      %v1494 = vpop.permute.xlu0 %1493
      %1495 = vrot.lane.b32.xlu0 %v803, 20
      %v1496 = vpop.permute.xlu0 %1495
      %1497 = vrot.lane.b32.xlu0 %v804, 20
      %v1498 = vpop.permute.xlu0 %1497
      %1499 = vrot.lane.b32.xlu0 %v805, 20
      %v1500 = vpop.permute.xlu0 %1499
      %1501 = vrot.lane.b32.xlu0 %v806, 20
      %v1502 = vpop.permute.xlu0 %1501
      %1503 = vrot.lane.b32.xlu0 %v807, 20
      %v1504 = vpop.permute.xlu0 %1503
      %1505 = vrot.lane.b32.xlu0 %v808, 20
      %v1506 = vpop.permute.xlu0 %1505
      %1507 = vrot.lane.b32.xlu0 %v809, 20
      %v1508 = vpop.permute.xlu0 %1507
      %1509 = vrot.lane.b32.xlu0 %v810, 20
      %v1510 = vpop.permute.xlu0 %1509
      %1511 = vrot.lane.b32.xlu0 %v811, 20
      %v1512 = vpop.permute.xlu0 %1511
      %1513 = vrot.lane.b32.xlu0 %v812, 20
      %v1514 = vpop.permute.xlu0 %1513
      %1515 = vrot.lane.b32.xlu0 %v813, 20
      %v1516 = vpop.permute.xlu0 %1515
      %1517 = vrot.lane.b32.xlu0 %v814, 20
      %v1518 = vpop.permute.xlu0 %1517
      %1519 = vrot.lane.b32.xlu0 %v815, 20
      %v1520 = vpop.permute.xlu0 %1519
      %1585 = vrot.lane.b32.xlu0 %v817, 24
      %v1586 = vpop.permute.xlu0 %1585
      %1587 = vrot.lane.b32.xlu0 %v818, 24
      %v1588 = vpop.permute.xlu0 %1587
      %1589 = vrot.lane.b32.xlu0 %v819, 24
      %v1590 = vpop.permute.xlu0 %1589
      %1591 = vrot.lane.b32.xlu0 %v820, 24
      %v1592 = vpop.permute.xlu0 %1591
      %1593 = vrot.lane.b32.xlu0 %v821, 24
      %v1594 = vpop.permute.xlu0 %1593
      %1595 = vrot.lane.b32.xlu0 %v822, 24
      %v1596 = vpop.permute.xlu0 %1595
      %1597 = vrot.lane.b32.xlu0 %v823, 24
      %v1598 = vpop.permute.xlu0 %1597
      %1599 = vrot.lane.b32.xlu0 %v824, 24
      %v1600 = vpop.permute.xlu0 %1599
      %1601 = vrot.lane.b32.xlu0 %v825, 24
      %v1602 = vpop.permute.xlu0 %1601
      %1603 = vrot.lane.b32.xlu0 %v826, 24
      %v1604 = vpop.permute.xlu0 %1603
      %1605 = vrot.lane.b32.xlu0 %v827, 24
      %v1606 = vpop.permute.xlu0 %1605
      %1607 = vrot.lane.b32.xlu0 %v828, 24
      %v1608 = vpop.permute.xlu0 %1607
      %1609 = vrot.lane.b32.xlu0 %v829, 24
      %v1610 = vpop.permute.xlu0 %1609
      %1611 = vrot.lane.b32.xlu0 %v830, 24
      %v1612 = vpop.permute.xlu0 %1611
      %1613 = vrot.lane.b32.xlu0 %v831, 24
      %v1614 = vpop.permute.xlu0 %1613
      %1615 = vrot.lane.b32.xlu0 %v832, 24
      %v1616 = vpop.permute.xlu0 %1615
      %1617 = vrot.lane.b32.xlu0 %v833, 24
      %v1618 = vpop.permute.xlu0 %1617
      %1619 = vrot.lane.b32.xlu0 %v834, 24
      %v1620 = vpop.permute.xlu0 %1619
      %1621 = vrot.lane.b32.xlu0 %v835, 24
      %v1622 = vpop.permute.xlu0 %1621
      %1623 = vrot.lane.b32.xlu0 %v836, 24
      %v1624 = vpop.permute.xlu0 %1623
      %1625 = vrot.lane.b32.xlu0 %v837, 24
      %v1626 = vpop.permute.xlu0 %1625
      %1627 = vrot.lane.b32.xlu0 %v838, 24
      %v1628 = vpop.permute.xlu0 %1627
      %1629 = vrot.lane.b32.xlu0 %v839, 24
      %v1630 = vpop.permute.xlu0 %1629
      %1631 = vrot.lane.b32.xlu0 %v840, 24
      %v1632 = vpop.permute.xlu0 %1631
      %1633 = vrot.lane.b32.xlu0 %v841, 24
      %v1634 = vpop.permute.xlu0 %1633
      %1635 = vrot.lane.b32.xlu0 %v842, 24
      %v1636 = vpop.permute.xlu0 %1635
      %1637 = vrot.lane.b32.xlu0 %v843, 24
      %v1638 = vpop.permute.xlu0 %1637
      %1639 = vrot.lane.b32.xlu0 %v844, 24
      %v1640 = vpop.permute.xlu0 %1639
      %1641 = vrot.lane.b32.xlu0 %v845, 24
      %v1642 = vpop.permute.xlu0 %1641
      %1643 = vrot.lane.b32.xlu0 %v846, 24
      %v1644 = vpop.permute.xlu0 %1643
      %1645 = vrot.lane.b32.xlu0 %v847, 24
      %v1646 = vpop.permute.xlu0 %1645
      %1647 = vrot.lane.b32.xlu0 %v848, 24
      %v1648 = vpop.permute.xlu0 %1647
      %1713 = vrot.lane.b32.xlu0 %v849, 28
      %v1714 = vpop.permute.xlu0 %1713
      %1715 = vrot.lane.b32.xlu0 %v850, 28
      %v1716 = vpop.permute.xlu0 %1715
      %1717 = vrot.lane.b32.xlu0 %v851, 28
      %v1718 = vpop.permute.xlu0 %1717
      %1719 = vrot.lane.b32.xlu0 %v852, 28
      %v1720 = vpop.permute.xlu0 %1719
      %1721 = vrot.lane.b32.xlu0 %v853, 28
      %v1722 = vpop.permute.xlu0 %1721
      %1723 = vrot.lane.b32.xlu0 %v854, 28
      %v1724 = vpop.permute.xlu0 %1723
      %1725 = vrot.lane.b32.xlu0 %v855, 28
      %v1726 = vpop.permute.xlu0 %1725
      %1727 = vrot.lane.b32.xlu0 %v856, 28
      %v1728 = vpop.permute.xlu0 %1727
      %1729 = vrot.lane.b32.xlu0 %v857, 28
      %v1730 = vpop.permute.xlu0 %1729
      %1731 = vrot.lane.b32.xlu0 %v858, 28
      %v1732 = vpop.permute.xlu0 %1731
      %1733 = vrot.lane.b32.xlu0 %v859, 28
      %v1734 = vpop.permute.xlu0 %1733
      %1735 = vrot.lane.b32.xlu0 %v860, 28
      %v1736 = vpop.permute.xlu0 %1735
      %1737 = vrot.lane.b32.xlu0 %v861, 28
      %v1738 = vpop.permute.xlu0 %1737
      %1739 = vrot.lane.b32.xlu0 %v862, 28
      %v1740 = vpop.permute.xlu0 %1739
      %1741 = vrot.lane.b32.xlu0 %v863, 28
      %v1742 = vpop.permute.xlu0 %1741
      %1743 = vrot.lane.b32.xlu0 %v864, 28
      %v1744 = vpop.permute.xlu0 %1743
      %1745 = vrot.lane.b32.xlu0 %v865, 28
      %v1746 = vpop.permute.xlu0 %1745
      %1747 = vrot.lane.b32.xlu0 %v866, 28
      %v1748 = vpop.permute.xlu0 %1747
      %1749 = vrot.lane.b32.xlu0 %v867, 28
      %v1750 = vpop.permute.xlu0 %1749
      %1751 = vrot.lane.b32.xlu0 %v868, 28
      %v1752 = vpop.permute.xlu0 %1751
      %1753 = vrot.lane.b32.xlu0 %v869, 28
      %v1754 = vpop.permute.xlu0 %1753
      %1755 = vrot.lane.b32.xlu0 %v870, 28
      %v1756 = vpop.permute.xlu0 %1755
      %1757 = vrot.lane.b32.xlu0 %v871, 28
      %v1758 = vpop.permute.xlu0 %1757
      %1759 = vrot.lane.b32.xlu0 %v872, 28
      %v1760 = vpop.permute.xlu0 %1759
      %1761 = vrot.lane.b32.xlu0 %v873, 28
      %v1762 = vpop.permute.xlu0 %1761
      %1763 = vrot.lane.b32.xlu0 %v874, 28
      %v1764 = vpop.permute.xlu0 %1763
      %1765 = vrot.lane.b32.xlu0 %v875, 28
      %v1766 = vpop.permute.xlu0 %1765
      %1767 = vrot.lane.b32.xlu0 %v876, 28
      %v1768 = vpop.permute.xlu0 %1767
      %1769 = vrot.lane.b32.xlu0 %v877, 28
      %v1770 = vpop.permute.xlu0 %1769
      %1771 = vrot.lane.b32.xlu0 %v878, 28
      %v1772 = vpop.permute.xlu0 %1771
      %1773 = vrot.lane.b32.xlu0 %v879, 28
      %v1774 = vpop.permute.xlu0 %1773
      %1775 = vrot.lane.b32.xlu0 %v880, 28
      %v1776 = vpop.permute.xlu0 %1775
      %1841 = vrot.lane.b32.xlu0 %v881, 32
      %v1842 = vpop.permute.xlu0 %1841
      %1843 = vrot.lane.b32.xlu0 %v882, 32
      %v1844 = vpop.permute.xlu0 %1843
      %1845 = vrot.lane.b32.xlu0 %v883, 32
      %v1846 = vpop.permute.xlu0 %1845
      %1847 = vrot.lane.b32.xlu0 %v884, 32
      %v1848 = vpop.permute.xlu0 %1847
      %1849 = vrot.lane.b32.xlu0 %v885, 32
      %v1850 = vpop.permute.xlu0 %1849
      %1851 = vrot.lane.b32.xlu0 %v886, 32
      %v1852 = vpop.permute.xlu0 %1851
      %1853 = vrot.lane.b32.xlu0 %v887, 32
      %v1854 = vpop.permute.xlu0 %1853
      %1855 = vrot.lane.b32.xlu0 %v888, 32
      %v1856 = vpop.permute.xlu0 %1855
      %1857 = vrot.lane.b32.xlu0 %v889, 32
      %v1858 = vpop.permute.xlu0 %1857
      %1859 = vrot.lane.b32.xlu0 %v890, 32
      %v1860 = vpop.permute.xlu0 %1859
      %1861 = vrot.lane.b32.xlu0 %v891, 32
      %v1862 = vpop.permute.xlu0 %1861
      %1863 = vrot.lane.b32.xlu0 %v892, 32
      %v1864 = vpop.permute.xlu0 %1863
      %1865 = vrot.lane.b32.xlu0 %v893, 32
      %v1866 = vpop.permute.xlu0 %1865
      %1867 = vrot.lane.b32.xlu0 %v894, 32
      %v1868 = vpop.permute.xlu0 %1867
      %1869 = vrot.lane.b32.xlu0 %v895, 32
      %v1870 = vpop.permute.xlu0 %1869
      %1871 = vrot.lane.b32.xlu0 %v896, 32
      %v1872 = vpop.permute.xlu0 %1871
      %1873 = vrot.lane.b32.xlu0 %v897, 32
      %v1874 = vpop.permute.xlu0 %1873
      %1875 = vrot.lane.b32.xlu0 %v898, 32
      %v1876 = vpop.permute.xlu0 %1875
      %1877 = vrot.lane.b32.xlu0 %v899, 32
      %v1878 = vpop.permute.xlu0 %1877
      %1879 = vrot.lane.b32.xlu0 %v900, 32
      %v1880 = vpop.permute.xlu0 %1879
      %1881 = vrot.lane.b32.xlu0 %v901, 32
      %v1882 = vpop.permute.xlu0 %1881
      %1883 = vrot.lane.b32.xlu0 %v902, 32
      %v1884 = vpop.permute.xlu0 %1883
      %1885 = vrot.lane.b32.xlu0 %v903, 32
      %v1886 = vpop.permute.xlu0 %1885
      %1887 = vrot.lane.b32.xlu0 %v904, 32
      %v1888 = vpop.permute.xlu0 %1887
      %1889 = vrot.lane.b32.xlu0 %v905, 32
      %v1890 = vpop.permute.xlu0 %1889
      %1891 = vrot.lane.b32.xlu0 %v906, 32
      %v1892 = vpop.permute.xlu0 %1891
      %1893 = vrot.lane.b32.xlu0 %v907, 32
      %v1894 = vpop.permute.xlu0 %1893
      %1895 = vrot.lane.b32.xlu0 %v908, 32
      %v1896 = vpop.permute.xlu0 %1895
      %1897 = vrot.lane.b32.xlu0 %v909, 32
      %v1898 = vpop.permute.xlu0 %1897
      %1899 = vrot.lane.b32.xlu0 %v910, 32
      %v1900 = vpop.permute.xlu0 %1899
      %1901 = vrot.lane.b32.xlu0 %v911, 32
      %v1902 = vpop.permute.xlu0 %1901
      %1903 = vrot.lane.b32.xlu0 %v912, 32
      %v1904 = vpop.permute.xlu0 %1903
      %v1937 = vsel %vm307, %v624, %v946
      %v1938 = vsel %vm307, %v625, %v948
      %v1939 = vsel %vm307, %v626, %v950
      %v1940 = vsel %vm307, %v627, %v952
      %v1941 = vsel %vm307, %v628, %v954
      %v1942 = vsel %vm307, %v629, %v956
      %v1943 = vsel %vm307, %v630, %v958
      %v1944 = vsel %vm307, %v631, %v960
      %v1945 = vsel %vm307, %v632, %v962
      %v1946 = vsel %vm307, %v633, %v964
      %v1947 = vsel %vm307, %v634, %v966
      %v1948 = vsel %vm307, %v635, %v968
      %v1949 = vsel %vm307, %v636, %v970
      %v1950 = vsel %vm307, %v637, %v972
      %v1951 = vsel %vm307, %v638, %v974
      %v1952 = vsel %vm307, %v639, %v976
      %v1953 = vsel %vm307, %v640, %v978
      %v1954 = vsel %vm307, %v641, %v980
      %v1955 = vsel %vm307, %v642, %v982
      %v1956 = vsel %vm307, %v643, %v984
      %v1957 = vsel %vm307, %v644, %v986
      %v1958 = vsel %vm307, %v645, %v988
      %v1959 = vsel %vm307, %v646, %v990
      %v1960 = vsel %vm307, %v647, %v992
      %v1961 = vsel %vm307, %v648, %v994
      %v1962 = vsel %vm307, %v649, %v996
      %v1963 = vsel %vm307, %v650, %v998
      %v1964 = vsel %vm307, %v651, %v1000
      %v1965 = vsel %vm307, %v652, %v1002
      %v1966 = vsel %vm307, %v653, %v1004
      %v1967 = vsel %vm307, %v654, %v1006
      %v1968 = vsel %vm307, %v655, %v1008
      %vm1969 = vcmask 64512
      %v1970 = vsel %vm1969, %v1937, %v1074
      %v1971 = vsel %vm1969, %v1938, %v1076
      %v1972 = vsel %vm1969, %v1939, %v1078
      %v1973 = vsel %vm1969, %v1940, %v1080
      %v1974 = vsel %vm1969, %v1941, %v1082
      %v1975 = vsel %vm1969, %v1942, %v1084
      %v1976 = vsel %vm1969, %v1943, %v1086
      %v1977 = vsel %vm1969, %v1944, %v1088
      %v1978 = vsel %vm1969, %v1945, %v1090
      %v1979 = vsel %vm1969, %v1946, %v1092
      %v1980 = vsel %vm1969, %v1947, %v1094
      %v1981 = vsel %vm1969, %v1948, %v1096
      %v1982 = vsel %vm1969, %v1949, %v1098
      %v1983 = vsel %vm1969, %v1950, %v1100
      %v1984 = vsel %vm1969, %v1951, %v1102
      %v1985 = vsel %vm1969, %v1952, %v1104
      %v1986 = vsel %vm1969, %v1953, %v1106
      %v1987 = vsel %vm1969, %v1954, %v1108
      %v1988 = vsel %vm1969, %v1955, %v1110
      %v1989 = vsel %vm1969, %v1956, %v1112
      %v1990 = vsel %vm1969, %v1957, %v1114
      %v1991 = vsel %vm1969, %v1958, %v1116
      %v1992 = vsel %vm1969, %v1959, %v1118
      %v1993 = vsel %vm1969, %v1960, %v1120
      %v1994 = vsel %vm1969, %v1961, %v1122
      %v1995 = vsel %vm1969, %v1962, %v1124
      %v1996 = vsel %vm1969, %v1963, %v1126
      %v1997 = vsel %vm1969, %v1964, %v1128
      %v1998 = vsel %vm1969, %v1965, %v1130
      %v1999 = vsel %vm1969, %v1966, %v1132
      %v2000 = vsel %vm1969, %v1967, %v1134
      %v2001 = vsel %vm1969, %v1968, %v1136
      %vm2002 = vcmask 97280
      %v2003 = vsel %vm2002, %v1970, %v1202
      %v2004 = vsel %vm2002, %v1971, %v1204
      %v2005 = vsel %vm2002, %v1972, %v1206
      %v2006 = vsel %vm2002, %v1973, %v1208
      %v2007 = vsel %vm2002, %v1974, %v1210
      %v2008 = vsel %vm2002, %v1975, %v1212
      %v2009 = vsel %vm2002, %v1976, %v1214
      %v2010 = vsel %vm2002, %v1977, %v1216
      %v2011 = vsel %vm2002, %v1978, %v1218
      %v2012 = vsel %vm2002, %v1979, %v1220
      %v2013 = vsel %vm2002, %v1980, %v1222
      %v2014 = vsel %vm2002, %v1981, %v1224
      %v2015 = vsel %vm2002, %v1982, %v1226
      %v2016 = vsel %vm2002, %v1983, %v1228
      %v2017 = vsel %vm2002, %v1984, %v1230
      %v2018 = vsel %vm2002, %v1985, %v1232
      %v2019 = vsel %vm2002, %v1986, %v1234
      %v2020 = vsel %vm2002, %v1987, %v1236
      %v2021 = vsel %vm2002, %v1988, %v1238
      %v2022 = vsel %vm2002, %v1989, %v1240
      %v2023 = vsel %vm2002, %v1990, %v1242
      %v2024 = vsel %vm2002, %v1991, %v1244
      %v2025 = vsel %vm2002, %v1992, %v1246
      %v2026 = vsel %vm2002, %v1993, %v1248
      %v2027 = vsel %vm2002, %v1994, %v1250
      %v2028 = vsel %vm2002, %v1995, %v1252
      %v2029 = vsel %vm2002, %v1996, %v1254
      %v2030 = vsel %vm2002, %v1997, %v1256
      %v2031 = vsel %vm2002, %v1998, %v1258
      %v2032 = vsel %vm2002, %v1999, %v1260
      %v2033 = vsel %vm2002, %v2000, %v1262
      %v2034 = vsel %vm2002, %v2001, %v1264
      %vm2035 = vcmask 130048
      %v2036 = vsel %vm2035, %v2003, %v1330
      %v2037 = vsel %vm2035, %v2004, %v1332
      %v2038 = vsel %vm2035, %v2005, %v1334
      %v2039 = vsel %vm2035, %v2006, %v1336
      %v2040 = vsel %vm2035, %v2007, %v1338
      %v2041 = vsel %vm2035, %v2008, %v1340
      %v2042 = vsel %vm2035, %v2009, %v1342
      %v2043 = vsel %vm2035, %v2010, %v1344
      %v2044 = vsel %vm2035, %v2011, %v1346
      %v2045 = vsel %vm2035, %v2012, %v1348
      %v2046 = vsel %vm2035, %v2013, %v1350
      %v2047 = vsel %vm2035, %v2014, %v1352
      %v2048 = vsel %vm2035, %v2015, %v1354
      %v2049 = vsel %vm2035, %v2016, %v1356
      %v2050 = vsel %vm2035, %v2017, %v1358
      %v2051 = vsel %vm2035, %v2018, %v1360
      %v2052 = vsel %vm2035, %v2019, %v1362
      %v2053 = vsel %vm2035, %v2020, %v1364
      %v2054 = vsel %vm2035, %v2021, %v1366
      %v2055 = vsel %vm2035, %v2022, %v1368
      %v2056 = vsel %vm2035, %v2023, %v1370
      %v2057 = vsel %vm2035, %v2024, %v1372
      %v2058 = vsel %vm2035, %v2025, %v1374
      %v2059 = vsel %vm2035, %v2026, %v1376
      %v2060 = vsel %vm2035, %v2027, %v1378
      %v2061 = vsel %vm2035, %v2028, %v1380
      %v2062 = vsel %vm2035, %v2029, %v1382
      %v2063 = vsel %vm2035, %v2030, %v1384
      %v2064 = vsel %vm2035, %v2031, %v1386
      %v2065 = vsel %vm2035, %v2032, %v1388
      %v2066 = vsel %vm2035, %v2033, %v1390
      %v2067 = vsel %vm2035, %v2034, %v1392
      %vm2068 = vcmask 162816
      %v2069 = vsel %vm2068, %v2036, %v1458
      %v2070 = vsel %vm2068, %v2037, %v1460
      %v2071 = vsel %vm2068, %v2038, %v1462
      %v2072 = vsel %vm2068, %v2039, %v1464
      %v2073 = vsel %vm2068, %v2040, %v1466
      %v2074 = vsel %vm2068, %v2041, %v1468
      %v2075 = vsel %vm2068, %v2042, %v1470
      %v2076 = vsel %vm2068, %v2043, %v1472
      %v2077 = vsel %vm2068, %v2044, %v1474
      %v2078 = vsel %vm2068, %v2045, %v1476
      %v2079 = vsel %vm2068, %v2046, %v1478
      %v2080 = vsel %vm2068, %v2047, %v1480
      %v2081 = vsel %vm2068, %v2048, %v1482
      %v2082 = vsel %vm2068, %v2049, %v1484
      %v2083 = vsel %vm2068, %v2050, %v1486
      %v2084 = vsel %vm2068, %v2051, %v1488
      %v2085 = vsel %vm2068, %v2052, %v1490
      %v2086 = vsel %vm2068, %v2053, %v1492
      %v2087 = vsel %vm2068, %v2054, %v1494
      %v2088 = vsel %vm2068, %v2055, %v1496
      %v2089 = vsel %vm2068, %v2056, %v1498
      %v2090 = vsel %vm2068, %v2057, %v1500
      %v2091 = vsel %vm2068, %v2058, %v1502
      %v2092 = vsel %vm2068, %v2059, %v1504
      %v2093 = vsel %vm2068, %v2060, %v1506
      %v2094 = vsel %vm2068, %v2061, %v1508
      %v2095 = vsel %vm2068, %v2062, %v1510
      %v2096 = vsel %vm2068, %v2063, %v1512
      %v2097 = vsel %vm2068, %v2064, %v1514
      %v2098 = vsel %vm2068, %v2065, %v1516
      %v2099 = vsel %vm2068, %v2066, %v1518
      %v2100 = vsel %vm2068, %v2067, %v1520
      %vm2101 = vcmask 195584
      %v2102 = vsel %vm2101, %v2069, %v1586
      %v2103 = vsel %vm2101, %v2070, %v1588
      %v2104 = vsel %vm2101, %v2071, %v1590
      %v2105 = vsel %vm2101, %v2072, %v1592
      %v2106 = vsel %vm2101, %v2073, %v1594
      %v2107 = vsel %vm2101, %v2074, %v1596
      %v2108 = vsel %vm2101, %v2075, %v1598
      %v2109 = vsel %vm2101, %v2076, %v1600
      %v2110 = vsel %vm2101, %v2077, %v1602
      %v2111 = vsel %vm2101, %v2078, %v1604
      %v2112 = vsel %vm2101, %v2079, %v1606
      %v2113 = vsel %vm2101, %v2080, %v1608
      %v2114 = vsel %vm2101, %v2081, %v1610
      %v2115 = vsel %vm2101, %v2082, %v1612
      %v2116 = vsel %vm2101, %v2083, %v1614
      %v2117 = vsel %vm2101, %v2084, %v1616
      %v2118 = vsel %vm2101, %v2085, %v1618
      %v2119 = vsel %vm2101, %v2086, %v1620
      %v2120 = vsel %vm2101, %v2087, %v1622
      %v2121 = vsel %vm2101, %v2088, %v1624
      %v2122 = vsel %vm2101, %v2089, %v1626
      %v2123 = vsel %vm2101, %v2090, %v1628
      %v2124 = vsel %vm2101, %v2091, %v1630
      %v2125 = vsel %vm2101, %v2092, %v1632
      %v2126 = vsel %vm2101, %v2093, %v1634
      %v2127 = vsel %vm2101, %v2094, %v1636
      %v2128 = vsel %vm2101, %v2095, %v1638
      %v2129 = vsel %vm2101, %v2096, %v1640
      %v2130 = vsel %vm2101, %v2097, %v1642
      %v2131 = vsel %vm2101, %v2098, %v1644
      %v2132 = vsel %vm2101, %v2099, %v1646
      %v2133 = vsel %vm2101, %v2100, %v1648
      %vm2134 = vcmask 228352
      %v2135 = vsel %vm2134, %v2102, %v1714
      %v2136 = vsel %vm2134, %v2103, %v1716
      %v2137 = vsel %vm2134, %v2104, %v1718
      %v2138 = vsel %vm2134, %v2105, %v1720
      %v2139 = vsel %vm2134, %v2106, %v1722
      %v2140 = vsel %vm2134, %v2107, %v1724
      %v2141 = vsel %vm2134, %v2108, %v1726
      %v2142 = vsel %vm2134, %v2109, %v1728
      %v2143 = vsel %vm2134, %v2110, %v1730
      %v2144 = vsel %vm2134, %v2111, %v1732
      %v2145 = vsel %vm2134, %v2112, %v1734
      %v2146 = vsel %vm2134, %v2113, %v1736
      %v2147 = vsel %vm2134, %v2114, %v1738
      %v2148 = vsel %vm2134, %v2115, %v1740
      %v2149 = vsel %vm2134, %v2116, %v1742
      %v2150 = vsel %vm2134, %v2117, %v1744
      %v2151 = vsel %vm2134, %v2118, %v1746
      %v2152 = vsel %vm2134, %v2119, %v1748
      %v2153 = vsel %vm2134, %v2120, %v1750
      %v2154 = vsel %vm2134, %v2121, %v1752
      %v2155 = vsel %vm2134, %v2122, %v1754
      %v2156 = vsel %vm2134, %v2123, %v1756
      %v2157 = vsel %vm2134, %v2124, %v1758
      %v2158 = vsel %vm2134, %v2125, %v1760
      %v2159 = vsel %vm2134, %v2126, %v1762
      %v2160 = vsel %vm2134, %v2127, %v1764
      %v2161 = vsel %vm2134, %v2128, %v1766
      %v2162 = vsel %vm2134, %v2129, %v1768
      %v2163 = vsel %vm2134, %v2130, %v1770
      %v2164 = vsel %vm2134, %v2131, %v1772
      %v2165 = vsel %vm2134, %v2132, %v1774
      %v2166 = vsel %vm2134, %v2133, %v1776
      %vm2167 = vcmask 261120
      %v2168 = vsel %vm2167, %v2135, %v1842
      %v2169 = vsel %vm2167, %v2136, %v1844
      %v2170 = vsel %vm2167, %v2137, %v1846
      %v2171 = vsel %vm2167, %v2138, %v1848
      %v2172 = vsel %vm2167, %v2139, %v1850
      %v2173 = vsel %vm2167, %v2140, %v1852
      %v2174 = vsel %vm2167, %v2141, %v1854
      %v2175 = vsel %vm2167, %v2142, %v1856
      %v2176 = vsel %vm2167, %v2143, %v1858
      %v2177 = vsel %vm2167, %v2144, %v1860
      %v2178 = vsel %vm2167, %v2145, %v1862
      %v2179 = vsel %vm2167, %v2146, %v1864
      %v2180 = vsel %vm2167, %v2147, %v1866
      %v2181 = vsel %vm2167, %v2148, %v1868
      %v2182 = vsel %vm2167, %v2149, %v1870
      %v2183 = vsel %vm2167, %v2150, %v1872
      %v2184 = vsel %vm2167, %v2151, %v1874
      %v2185 = vsel %vm2167, %v2152, %v1876
      %v2186 = vsel %vm2167, %v2153, %v1878
      %v2187 = vsel %vm2167, %v2154, %v1880
      %v2188 = vsel %vm2167, %v2155, %v1882
      %v2189 = vsel %vm2167, %v2156, %v1884
      %v2190 = vsel %vm2167, %v2157, %v1886
      %v2191 = vsel %vm2167, %v2158, %v1888
      %v2192 = vsel %vm2167, %v2159, %v1890
      %v2193 = vsel %vm2167, %v2160, %v1892
      %v2194 = vsel %vm2167, %v2161, %v1894
      %v2195 = vsel %vm2167, %v2162, %v1896
      %v2196 = vsel %vm2167, %v2163, %v1898
      %v2197 = vsel %vm2167, %v2164, %v1900
      %v2198 = vsel %vm2167, %v2165, %v1902
      %v2199 = vsel %vm2167, %v2166, %v1904
      %v2200 = vpack.c.bf16 %v2169, %v2168
      %v2201 = vpack.c.bf16 %v2171, %v2170
      %v2202 = vpack.c.bf16 %v2173, %v2172
      %v2203 = vpack.c.bf16 %v2175, %v2174
      %v2204 = vpack.c.bf16 %v2177, %v2176
      %v2205 = vpack.c.bf16 %v2179, %v2178
      %v2206 = vpack.c.bf16 %v2181, %v2180
      %v2207 = vpack.c.bf16 %v2183, %v2182
      %v2208 = vpack.c.bf16 %v2185, %v2184
      %v2209 = vpack.c.bf16 %v2187, %v2186
      %v2210 = vpack.c.bf16 %v2189, %v2188
      %v2211 = vpack.c.bf16 %v2191, %v2190
      %v2212 = vpack.c.bf16 %v2193, %v2192
      %v2213 = vpack.c.bf16 %v2195, %v2194
      %v2214 = vpack.c.bf16 %v2197, %v2196
      %v2215 = vpack.c.bf16 %v2199, %v2198
      %v2216 = vld [vmem:[%s1] sm:$0xf]
      %v2217 = vld [vmem:[%s1 + $0x4] sm:$0xf]
      %v2218 = vld [vmem:[%s1 + $0x8] sm:$0xf]
      %v2219 = vld [vmem:[%s1 + $0xc] sm:$0xf]
      %v2220 = vld [vmem:[%s1 + $0x10] sm:$0x3]
      %v2226 = vunpack.c.l.b16 %v2216
      %v2227 = vunpack.c.l.b16 %v2217
      %v2228 = vunpack.c.l.b16 %v2218
      %v2229 = vunpack.c.l.b16 %v2219
      %v2230 = vunpack.c.l.b16 %v2220
      %v2231 = vpack.c.b16 %v2227, %v2226
      %v2232 = vpack.c.b16 %v2229, %v2228
      %v2233 = vpack.c.b16 %v2230, %v2230
      %vm2236 = vcmask 293888
      %v2238 = vsel %vm2236, %v2200, 0
      %v2241 = vsel %vm2236, %v2201, 0
      %v2244 = vsel %vm2236, %v2202, 0
      %v2247 = vsel %vm2236, %v2203, 0
      %v2250 = vsel %vm2236, %v2204, 0
      %v2253 = vsel %vm2236, %v2205, 0
      %v2256 = vsel %vm2236, %v2206, 0
      %v2259 = vsel %vm2236, %v2207, 0
      %v2262 = vsel %vm2236, %v2208, 0
      %v2265 = vsel %vm2236, %v2209, 0
      %v2268 = vsel %vm2236, %v2210, 0
      %v2271 = vsel %vm2236, %v2211, 0
      %v2274 = vsel %vm2236, %v2212, 0
      %v2277 = vsel %vm2236, %v2213, 0
      %v2280 = vsel %vm2236, %v2214, 0
      %v2283 = vsel %vm2236, %v2215, 0
      %vm2285 = vcmask 1041408
      %v2287 = vsel %vm2285, %v2233, 0
      %2289 = vmatprep.subr.bf16.mxu0 0
      %2290 = vmatpush1.bf16.msra.mxu0 %v2231
      %2291 = vmatprep.subr.bf16.mxu0 0
      %2292 = vmatpush1.bf16.msra.mxu0 %v2232
      %2293 = vmatprep.subr.bf16.mxu0 0
      %2294 = vmatpush1.bf16.msra.mxu0 %v2287
      %2295 = vmatprep.subr.bf16.mxu0 0
      %2296 = vmatpush1.bf16.msra.mxu0 0
      %2297 = vmatprep.subr.bf16.mxu0 0
      %2298 = vmatpush1.bf16.msra.mxu0 0
      %2299 = vmatprep.subr.bf16.mxu0 0
      %2300 = vmatpush1.bf16.msra.mxu0 0
      %2301 = vmatprep.subr.bf16.mxu0 0
      %2302 = vmatpush1.bf16.msra.mxu0 0
      %2303 = vmatprep.subr.bf16.mxu0 0
      %2304 = vmatpush1.bf16.msra.mxu0 0
      %2305 = vmatprep.subr.bf16.mxu0 0
      %2306 = vmatpush1.bf16.msra.mxu0 0
      %2307 = vmatprep.subr.bf16.mxu0 0
      %2308 = vmatpush1.bf16.msra.mxu0 0
      %2309 = vmatprep.subr.bf16.mxu0 0
      %2310 = vmatpush1.bf16.msra.mxu0 0
      %2311 = vmatprep.subr.bf16.mxu0 0
      %2312 = vmatpush1.bf16.msra.mxu0 0
      %2313 = vmatprep.subr.bf16.mxu0 0
      %2314 = vmatpush1.bf16.msra.mxu0 0
      %2315 = vmatprep.subr.bf16.mxu0 0
      %2316 = vmatpush1.bf16.msra.mxu0 0
      %2317 = vmatprep.subr.bf16.mxu0 0
      %2318 = vmatpush1.bf16.msra.mxu0 0
      %2319 = vmatprep.subr.bf16.mxu0 0
      %2320 = vmatpush1.bf16.msra.mxu0 0
      %2321 = vmatprep.mubr.bf16.mxu0 0
      %2322 = vmatmul.mubr.bf16.gmra.mrb[0].mxu0 %v2238
      %v2323 = vpop.f32.mrb[0].mxu0
      %v2324 = vadd.f32 0.0, %v2323
      %v2325 = vpop.f32.mrb[0].mxu0
      %v2326 = vpop.f32.mrb[0].mxu0
      %v2327 = vadd.f32 0.0, %v2326
      %v2328 = vpop.f32.mrb[0].mxu0
      %2329 = vmatprep.mubr.bf16.mxu0 0
      %2330 = vmatmul.mubr.bf16.gmra.mrb[0].mxu0 %v2241
      %v2331 = vpop.f32.mrb[0].mxu0
      %v2332 = vadd.f32 0.0, %v2331
      %v2333 = vpop.f32.mrb[0].mxu0
      %v2334 = vpop.f32.mrb[0].mxu0
      %v2335 = vadd.f32 0.0, %v2334
      %v2336 = vpop.f32.mrb[0].mxu0
      %2337 = vmatprep.mubr.bf16.mxu0 0
      %2338 = vmatmul.mubr.bf16.gmra.mrb[0].mxu0 %v2244
      %v2339 = vpop.f32.mrb[0].mxu0
      %v2340 = vadd.f32 0.0, %v2339
      %v2341 = vpop.f32.mrb[0].mxu0
      %v2342 = vpop.f32.mrb[0].mxu0
      %v2343 = vadd.f32 0.0, %v2342
      %v2344 = vpop.f32.mrb[0].mxu0
      %2345 = vmatprep.mubr.bf16.mxu0 0
      %2346 = vmatmul.mubr.bf16.gmra.mrb[0].mxu0 %v2247
      %v2347 = vpop.f32.mrb[0].mxu0
      %v2348 = vadd.f32 0.0, %v2347
      %v2349 = vpop.f32.mrb[0].mxu0
      %v2350 = vpop.f32.mrb[0].mxu0
      %v2351 = vadd.f32 0.0, %v2350
      %v2352 = vpop.f32.mrb[0].mxu0
      %2353 = vmatprep.mubr.bf16.mxu0 0
      %2354 = vmatmul.mubr.bf16.gmra.mrb[0].mxu0 %v2250
      %v2355 = vpop.f32.mrb[0].mxu0
      %v2356 = vadd.f32 0.0, %v2355
      %v2357 = vpop.f32.mrb[0].mxu0
      %v2358 = vpop.f32.mrb[0].mxu0
      %v2359 = vadd.f32 0.0, %v2358
      %v2360 = vpop.f32.mrb[0].mxu0
      %2361 = vmatprep.mubr.bf16.mxu0 0
      %2362 = vmatmul.mubr.bf16.gmra.mrb[0].mxu0 %v2253
      %v2363 = vpop.f32.mrb[0].mxu0
      %v2364 = vadd.f32 0.0, %v2363
      %v2365 = vpop.f32.mrb[0].mxu0
      %v2366 = vpop.f32.mrb[0].mxu0
      %v2367 = vadd.f32 0.0, %v2366
      %v2368 = vpop.f32.mrb[0].mxu0
      %2369 = vmatprep.mubr.bf16.mxu0 0
      %2370 = vmatmul.mubr.bf16.gmra.mrb[0].mxu0 %v2256
      %v2371 = vpop.f32.mrb[0].mxu0
      %v2372 = vadd.f32 0.0, %v2371
      %v2373 = vpop.f32.mrb[0].mxu0
      %v2374 = vpop.f32.mrb[0].mxu0
      %v2375 = vadd.f32 0.0, %v2374
      %v2376 = vpop.f32.mrb[0].mxu0
      %2377 = vmatprep.mubr.bf16.mxu0 0
      %2378 = vmatmul.mubr.bf16.gmra.mrb[0].mxu0 %v2259
      %v2379 = vpop.f32.mrb[0].mxu0
      %v2380 = vadd.f32 0.0, %v2379
      %v2381 = vpop.f32.mrb[0].mxu0
      %v2382 = vpop.f32.mrb[0].mxu0
      %v2383 = vadd.f32 0.0, %v2382
      %v2384 = vpop.f32.mrb[0].mxu0
      %2385 = vmatprep.mubr.bf16.mxu0 0
      %2386 = vmatmul.mubr.bf16.gmra.mrb[0].mxu0 %v2262
      %v2387 = vpop.f32.mrb[0].mxu0
      %v2388 = vadd.f32 0.0, %v2387
      %v2389 = vpop.f32.mrb[0].mxu0
      %v2390 = vpop.f32.mrb[0].mxu0
      %v2391 = vadd.f32 0.0, %v2390
      %v2392 = vpop.f32.mrb[0].mxu0
      %2393 = vmatprep.mubr.bf16.mxu0 0
      %2394 = vmatmul.mubr.bf16.gmra.mrb[0].mxu0 %v2265
      %v2395 = vpop.f32.mrb[0].mxu0
      %v2396 = vadd.f32 0.0, %v2395
      %v2397 = vpop.f32.mrb[0].mxu0
      %v2398 = vpop.f32.mrb[0].mxu0
      %v2399 = vadd.f32 0.0, %v2398
      %v2400 = vpop.f32.mrb[0].mxu0
      %2401 = vmatprep.mubr.bf16.mxu0 0
      %2402 = vmatmul.mubr.bf16.gmra.mrb[0].mxu0 %v2268
      %v2403 = vpop.f32.mrb[0].mxu0
      %v2404 = vadd.f32 0.0, %v2403
      %v2405 = vpop.f32.mrb[0].mxu0
      %v2406 = vpop.f32.mrb[0].mxu0
      %v2407 = vadd.f32 0.0, %v2406
      %v2408 = vpop.f32.mrb[0].mxu0
      %2409 = vmatprep.mubr.bf16.mxu0 0
      %2410 = vmatmul.mubr.bf16.gmra.mrb[0].mxu0 %v2271
      %v2411 = vpop.f32.mrb[0].mxu0
      %v2412 = vadd.f32 0.0, %v2411
      %v2413 = vpop.f32.mrb[0].mxu0
      %v2414 = vpop.f32.mrb[0].mxu0
      %v2415 = vadd.f32 0.0, %v2414
      %v2416 = vpop.f32.mrb[0].mxu0
      %2417 = vmatprep.mubr.bf16.mxu0 0
      %2418 = vmatmul.mubr.bf16.gmra.mrb[0].mxu0 %v2274
      %v2419 = vpop.f32.mrb[0].mxu0
      %v2420 = vadd.f32 0.0, %v2419
      %v2421 = vpop.f32.mrb[0].mxu0
      %v2422 = vpop.f32.mrb[0].mxu0
      %v2423 = vadd.f32 0.0, %v2422
      %v2424 = vpop.f32.mrb[0].mxu0
      %2425 = vmatprep.mubr.bf16.mxu0 0
      %2426 = vmatmul.mubr.bf16.gmra.mrb[0].mxu0 %v2277
      %v2427 = vpop.f32.mrb[0].mxu0
      %v2428 = vadd.f32 0.0, %v2427
      %v2429 = vpop.f32.mrb[0].mxu0
      %v2430 = vpop.f32.mrb[0].mxu0
      %v2431 = vadd.f32 0.0, %v2430
      %v2432 = vpop.f32.mrb[0].mxu0
      %2433 = vmatprep.mubr.bf16.mxu0 0
      %2434 = vmatmul.mubr.bf16.gmra.mrb[0].mxu0 %v2280
      %v2435 = vpop.f32.mrb[0].mxu0
      %v2436 = vadd.f32 0.0, %v2435
      %v2437 = vpop.f32.mrb[0].mxu0
      %v2438 = vpop.f32.mrb[0].mxu0
      %v2439 = vadd.f32 0.0, %v2438
      %v2440 = vpop.f32.mrb[0].mxu0
      %2441 = vmatprep.mubr.bf16.mxu0 0
      %2442 = vmatmul.mubr.bf16.gmra.mrb[0].mxu0 %v2283
      %v2443 = vpop.f32.mrb[0].mxu0
      %v2444 = vadd.f32 0.0, %v2443
      %v2445 = vpop.f32.mrb[0].mxu0
      %v2446 = vpop.f32.mrb[0].mxu0
      %v2447 = vadd.f32 0.0, %v2446
      %v2448 = vpop.f32.mrb[0].mxu0
      %2449 = vdwg.mxu0
      %v2450 = vld [vmem:[%s5] sm:$0x1]
      %v2452 = vlaneseq
      %v2453 = vshrl.u32 %v2452, 7
      %v2454 = vsub.s32 0, %v2453
      %v2455 = vrot.slane %v2450, %v2454
      %v2457 = vmul.f32 %v2324, %v2455
      %v2458 = vmul.f32 %v2327, %v2455
      %v2459 = vmul.f32 %v2332, %v2455
      %v2460 = vmul.f32 %v2335, %v2455
      %v2461 = vmul.f32 %v2340, %v2455
      %v2462 = vmul.f32 %v2343, %v2455
      %v2463 = vmul.f32 %v2348, %v2455
      %v2464 = vmul.f32 %v2351, %v2455
      %v2465 = vmul.f32 %v2356, %v2455
      %v2466 = vmul.f32 %v2359, %v2455
      %v2467 = vmul.f32 %v2364, %v2455
      %v2468 = vmul.f32 %v2367, %v2455
      %v2469 = vmul.f32 %v2372, %v2455
      %v2470 = vmul.f32 %v2375, %v2455
      %v2471 = vmul.f32 %v2380, %v2455
      %v2472 = vmul.f32 %v2383, %v2455
      %v2473 = vmul.f32 %v2388, %v2455
      %v2474 = vmul.f32 %v2391, %v2455
      %v2475 = vmul.f32 %v2396, %v2455
      %v2476 = vmul.f32 %v2399, %v2455
      %v2477 = vmul.f32 %v2404, %v2455
      %v2478 = vmul.f32 %v2407, %v2455
      %v2479 = vmul.f32 %v2412, %v2455
      %v2480 = vmul.f32 %v2415, %v2455
      %v2481 = vmul.f32 %v2420, %v2455
      %v2482 = vmul.f32 %v2423, %v2455
      %v2483 = vmul.f32 %v2428, %v2455
      %v2484 = vmul.f32 %v2431, %v2455
      %v2485 = vmul.f32 %v2436, %v2455
      %v2486 = vmul.f32 %v2439, %v2455
      %v2487 = vmul.f32 %v2444, %v2455
      %v2488 = vmul.f32 %v2447, %v2455
      %v2489 = vld [vmem:[%s6] sm:$0x1]
      %v2491 = vlaneseq
      %v2492 = vshrl.u32 %v2491, 7
      %v2493 = vsub.s32 0, %v2492
      %v2494 = vrot.slane %v2489, %v2493
      %v2496 = vadd.f32 %v2457, %v2494
      %v2497 = vadd.f32 %v2458, %v2494
      %v2498 = vadd.f32 %v2459, %v2494
      %v2499 = vadd.f32 %v2460, %v2494
      %v2500 = vadd.f32 %v2461, %v2494
      %v2501 = vadd.f32 %v2462, %v2494
      %v2502 = vadd.f32 %v2463, %v2494
      %v2503 = vadd.f32 %v2464, %v2494
      %v2504 = vadd.f32 %v2465, %v2494
      %v2505 = vadd.f32 %v2466, %v2494
      %v2506 = vadd.f32 %v2467, %v2494
      %v2507 = vadd.f32 %v2468, %v2494
      %v2508 = vadd.f32 %v2469, %v2494
      %v2509 = vadd.f32 %v2470, %v2494
      %v2510 = vadd.f32 %v2471, %v2494
      %v2511 = vadd.f32 %v2472, %v2494
      %v2512 = vadd.f32 %v2473, %v2494
      %v2513 = vadd.f32 %v2474, %v2494
      %v2514 = vadd.f32 %v2475, %v2494
      %v2515 = vadd.f32 %v2476, %v2494
      %v2516 = vadd.f32 %v2477, %v2494
      %v2517 = vadd.f32 %v2478, %v2494
      %v2518 = vadd.f32 %v2479, %v2494
      %v2519 = vadd.f32 %v2480, %v2494
      %v2520 = vadd.f32 %v2481, %v2494
      %v2521 = vadd.f32 %v2482, %v2494
      %v2522 = vadd.f32 %v2483, %v2494
      %v2523 = vadd.f32 %v2484, %v2494
      %v2524 = vadd.f32 %v2485, %v2494
      %v2525 = vadd.f32 %v2486, %v2494
      %v2526 = vadd.f32 %v2487, %v2494
      %v2527 = vadd.f32 %v2488, %v2494
      %v2528 = vmax.f32 %v2496, 0.0
      %v2529 = vmax.f32 %v2497, 0.0
      %v2530 = vmax.f32 %v2498, 0.0
      %v2531 = vmax.f32 %v2499, 0.0
      %v2532 = vmax.f32 %v2500, 0.0
      %v2533 = vmax.f32 %v2501, 0.0
      %v2534 = vmax.f32 %v2502, 0.0
      %v2535 = vmax.f32 %v2503, 0.0
      %v2536 = vmax.f32 %v2504, 0.0
      %v2537 = vmax.f32 %v2505, 0.0
      %v2538 = vmax.f32 %v2506, 0.0
      %v2539 = vmax.f32 %v2507, 0.0
      %v2540 = vmax.f32 %v2508, 0.0
      %v2541 = vmax.f32 %v2509, 0.0
      %v2542 = vmax.f32 %v2510, 0.0
      %v2543 = vmax.f32 %v2511, 0.0
      %v2544 = vmax.f32 %v2512, 0.0
      %v2545 = vmax.f32 %v2513, 0.0
      %v2546 = vmax.f32 %v2514, 0.0
      %v2547 = vmax.f32 %v2515, 0.0
      %v2548 = vmax.f32 %v2516, 0.0
      %v2549 = vmax.f32 %v2517, 0.0
      %v2550 = vmax.f32 %v2518, 0.0
      %v2551 = vmax.f32 %v2519, 0.0
      %v2552 = vmax.f32 %v2520, 0.0
      %v2553 = vmax.f32 %v2521, 0.0
      %v2554 = vmax.f32 %v2522, 0.0
      %v2555 = vmax.f32 %v2523, 0.0
      %v2556 = vmax.f32 %v2524, 0.0
      %v2557 = vmax.f32 %v2525, 0.0
      %v2558 = vmax.f32 %v2526, 0.0
      %v2559 = vmax.f32 %v2527, 0.0
      %s2560 = scalar_lea.vmem [#allocation3], 24
      %2561 = vst.msk [vmem:[%s2560 + $0x1] sm:$0xff] %vm307, %v2528
      %2562 = vst.msk [vmem:[%s2560 + $0x9] sm:$0xff] %vm307, %v2529
      %2563 = vst.msk [vmem:[%s2560 + $0x19] sm:$0xff] %vm307, %v2530
      %2564 = vst.msk [vmem:[%s2560 + $0x21] sm:$0xff] %vm307, %v2531
      %2565 = vst.msk [vmem:[%s2560 + $0x31] sm:$0xff] %vm307, %v2532
      %2566 = vst.msk [vmem:[%s2560 + $0x39] sm:$0xff] %vm307, %v2533
      %2567 = vst.msk [vmem:[%s2560 + $0x49] sm:$0xff] %vm307, %v2534
      %2568 = vst.msk [vmem:[%s2560 + $0x51] sm:$0xff] %vm307, %v2535
      %2569 = vst.msk [vmem:[%s2560 + $0x61] sm:$0xff] %vm307, %v2536
      %2570 = vst.msk [vmem:[%s2560 + $0x69] sm:$0xff] %vm307, %v2537
      %2571 = vst.msk [vmem:[%s2560 + $0x79] sm:$0xff] %vm307, %v2538
      %2572 = vst.msk [vmem:[%s2560 + $0x81] sm:$0xff] %vm307, %v2539
      %2573 = vst.msk [vmem:[%s2560 + $0x91] sm:$0xff] %vm307, %v2540
      %2574 = vst.msk [vmem:[%s2560 + $0x99] sm:$0xff] %vm307, %v2541
      %2575 = vst.msk [vmem:[%s2560 + $0xa9] sm:$0xff] %vm307, %v2542
      %2576 = vst.msk [vmem:[%s2560 + $0xb1] sm:$0xff] %vm307, %v2543
      %2577 = vst.msk [vmem:[%s2560 + $0xc1] sm:$0xff] %vm307, %v2544
      %2578 = vst.msk [vmem:[%s2560 + $0xc9] sm:$0xff] %vm307, %v2545
      %2579 = vst.msk [vmem:[%s2560 + $0xd9] sm:$0xff] %vm307, %v2546
      %2580 = vst.msk [vmem:[%s2560 + $0xe1] sm:$0xff] %vm307, %v2547
      %2581 = vst.msk [vmem:[%s2560 + $0xf1] sm:$0xff] %vm307, %v2548
      %2582 = vst.msk [vmem:[%s2560 + $0xf9] sm:$0xff] %vm307, %v2549
      %2583 = vst.msk [vmem:[%s2560 + $0x109] sm:$0xff] %vm307, %v2550
      %2584 = vst.msk [vmem:[%s2560 + $0x111] sm:$0xff] %vm307, %v2551
      %2585 = vst.msk [vmem:[%s2560 + $0x121] sm:$0xff] %vm307, %v2552
      %2586 = vst.msk [vmem:[%s2560 + $0x129] sm:$0xff] %vm307, %v2553
      %2587 = vst.msk [vmem:[%s2560 + $0x139] sm:$0xff] %vm307, %v2554
      %2588 = vst.msk [vmem:[%s2560 + $0x141] sm:$0xff] %vm307, %v2555
      %2589 = vst.msk [vmem:[%s2560 + $0x151] sm:$0xff] %vm307, %v2556
      %2590 = vst.msk [vmem:[%s2560 + $0x159] sm:$0xff] %vm307, %v2557
      %2591 = vst.msk [vmem:[%s2560 + $0x169] sm:$0xff] %vm307, %v2558
      %2592 = vst.msk [vmem:[%s2560 + $0x171] sm:$0xff] %vm307, %v2559
      %v2593 = vld [vmem:[#allocation3] sm:$0xff]
      %v2594 = vld [vmem:[#allocation3 + $0x8] sm:$0xff]
      %v2595 = vld [vmem:[#allocation3 + $0x18] sm:$0xff]
      %v2596 = vld [vmem:[#allocation3 + $0x20] sm:$0xff]
      %v2597 = vld [vmem:[#allocation3 + $0x30] sm:$0xff]
      %v2598 = vld [vmem:[#allocation3 + $0x38] sm:$0xff]
      %v2599 = vld [vmem:[#allocation3 + $0x48] sm:$0xff]
      %v2600 = vld [vmem:[#allocation3 + $0x50] sm:$0xff]
      %v2601 = vld [vmem:[#allocation3 + $0x60] sm:$0xff]
      %v2602 = vld [vmem:[#allocation3 + $0x68] sm:$0xff]
      %v2603 = vld [vmem:[#allocation3 + $0x78] sm:$0xff]
      %v2604 = vld [vmem:[#allocation3 + $0x80] sm:$0xff]
      %v2605 = vld [vmem:[#allocation3 + $0x90] sm:$0xff]
      %v2606 = vld [vmem:[#allocation3 + $0x98] sm:$0xff]
      %v2607 = vld [vmem:[#allocation3 + $0xa8] sm:$0xff]
      %v2608 = vld [vmem:[#allocation3 + $0xb0] sm:$0xff]
      %v2609 = vld [vmem:[#allocation3 + $0xc0] sm:$0xff]
      %v2610 = vld [vmem:[#allocation3 + $0xc8] sm:$0xff]
      %v2611 = vld [vmem:[#allocation3 + $0xd8] sm:$0xff]
      %v2612 = vld [vmem:[#allocation3 + $0xe0] sm:$0xff]
      %v2613 = vld [vmem:[#allocation3 + $0xf0] sm:$0xff]
      %v2614 = vld [vmem:[#allocation3 + $0xf8] sm:$0xff]
      %v2615 = vld [vmem:[#allocation3 + $0x108] sm:$0xff]
      %v2616 = vld [vmem:[#allocation3 + $0x110] sm:$0xff]
      %v2617 = vld [vmem:[#allocation3 + $0x120] sm:$0xff]
      %v2618 = vld [vmem:[#allocation3 + $0x128] sm:$0xff]
      %v2619 = vld [vmem:[#allocation3 + $0x138] sm:$0xff]
      %v2620 = vld [vmem:[#allocation3 + $0x140] sm:$0xff]
      %v2621 = vld [vmem:[#allocation3 + $0x150] sm:$0xff]
      %v2622 = vld [vmem:[#allocation3 + $0x158] sm:$0xff]
      %v2623 = vld [vmem:[#allocation3 + $0x168] sm:$0xff]
      %v2624 = vld [vmem:[#allocation3 + $0x170] sm:$0xff]
      %v2625 = vld [vmem:[#allocation3 + $0x1] sm:$0xff]
      %v2626 = vld [vmem:[#allocation3 + $0x9] sm:$0xff]
      %v2627 = vld [vmem:[#allocation3 + $0x19] sm:$0xff]
      %v2628 = vld [vmem:[#allocation3 + $0x21] sm:$0xff]
      %v2629 = vld [vmem:[#allocation3 + $0x31] sm:$0xff]
      %v2630 = vld [vmem:[#allocation3 + $0x39] sm:$0xff]
      %v2631 = vld [vmem:[#allocation3 + $0x49] sm:$0xff]
      %v2632 = vld [vmem:[#allocation3 + $0x51] sm:$0xff]
      %v2633 = vld [vmem:[#allocation3 + $0x61] sm:$0xff]
      %v2634 = vld [vmem:[#allocation3 + $0x69] sm:$0xff]
      %v2635 = vld [vmem:[#allocation3 + $0x79] sm:$0xff]
      %v2636 = vld [vmem:[#allocation3 + $0x81] sm:$0xff]
      %v2637 = vld [vmem:[#allocation3 + $0x91] sm:$0xff]
      %v2638 = vld [vmem:[#allocation3 + $0x99] sm:$0xff]
      %v2639 = vld [vmem:[#allocation3 + $0xa9] sm:$0xff]
      %v2640 = vld [vmem:[#allocation3 + $0xb1] sm:$0xff]
      %v2641 = vld [vmem:[#allocation3 + $0xc1] sm:$0xff]
      %v2642 = vld [vmem:[#allocation3 + $0xc9] sm:$0xff]
      %v2643 = vld [vmem:[#allocation3 + $0xd9] sm:$0xff]
      %v2644 = vld [vmem:[#allocation3 + $0xe1] sm:$0xff]
      %v2645 = vld [vmem:[#allocation3 + $0xf1] sm:$0xff]
      %v2646 = vld [vmem:[#allocation3 + $0xf9] sm:$0xff]
      %v2647 = vld [vmem:[#allocation3 + $0x109] sm:$0xff]
      %v2648 = vld [vmem:[#allocation3 + $0x111] sm:$0xff]
      %v2649 = vld [vmem:[#allocation3 + $0x121] sm:$0xff]
      %v2650 = vld [vmem:[#allocation3 + $0x129] sm:$0xff]
      %v2651 = vld [vmem:[#allocation3 + $0x139] sm:$0xff]
      %v2652 = vld [vmem:[#allocation3 + $0x141] sm:$0xff]
      %v2653 = vld [vmem:[#allocation3 + $0x151] sm:$0xff]
      %v2654 = vld [vmem:[#allocation3 + $0x159] sm:$0xff]
      %v2655 = vld [vmem:[#allocation3 + $0x169] sm:$0xff]
      %v2656 = vld [vmem:[#allocation3 + $0x171] sm:$0xff]
      %v2657 = vld [vmem:[#allocation3 + $0x2] sm:$0xff]
      %v2658 = vld [vmem:[#allocation3 + $0xa] sm:$0xff]
      %v2659 = vld [vmem:[#allocation3 + $0x1a] sm:$0xff]
      %v2660 = vld [vmem:[#allocation3 + $0x22] sm:$0xff]
      %v2661 = vld [vmem:[#allocation3 + $0x32] sm:$0xff]
      %v2662 = vld [vmem:[#allocation3 + $0x3a] sm:$0xff]
      %v2663 = vld [vmem:[#allocation3 + $0x4a] sm:$0xff]
      %v2664 = vld [vmem:[#allocation3 + $0x52] sm:$0xff]
      %v2665 = vld [vmem:[#allocation3 + $0x62] sm:$0xff]
      %v2666 = vld [vmem:[#allocation3 + $0x6a] sm:$0xff]
      %v2667 = vld [vmem:[#allocation3 + $0x7a] sm:$0xff]
      %v2668 = vld [vmem:[#allocation3 + $0x82] sm:$0xff]
      %v2669 = vld [vmem:[#allocation3 + $0x92] sm:$0xff]
      %v2670 = vld [vmem:[#allocation3 + $0x9a] sm:$0xff]
      %v2671 = vld [vmem:[#allocation3 + $0xaa] sm:$0xff]
      %v2672 = vld [vmem:[#allocation3 + $0xb2] sm:$0xff]
      %v2673 = vld [vmem:[#allocation3 + $0xc2] sm:$0xff]
      %v2674 = vld [vmem:[#allocation3 + $0xca] sm:$0xff]
      %v2675 = vld [vmem:[#allocation3 + $0xda] sm:$0xff]
      %v2676 = vld [vmem:[#allocation3 + $0xe2] sm:$0xff]
      %v2677 = vld [vmem:[#allocation3 + $0xf2] sm:$0xff]
      %v2678 = vld [vmem:[#allocation3 + $0xfa] sm:$0xff]
      %v2679 = vld [vmem:[#allocation3 + $0x10a] sm:$0xff]
      %v2680 = vld [vmem:[#allocation3 + $0x112] sm:$0xff]
      %v2681 = vld [vmem:[#allocation3 + $0x122] sm:$0xff]
      %v2682 = vld [vmem:[#allocation3 + $0x12a] sm:$0xff]
      %v2683 = vld [vmem:[#allocation3 + $0x13a] sm:$0xff]
      %v2684 = vld [vmem:[#allocation3 + $0x142] sm:$0xff]
      %v2685 = vld [vmem:[#allocation3 + $0x152] sm:$0xff]
      %v2686 = vld [vmem:[#allocation3 + $0x15a] sm:$0xff]
      %v2687 = vld [vmem:[#allocation3 + $0x16a] sm:$0xff]
      %v2688 = vld [vmem:[#allocation3 + $0x172] sm:$0xff]
      %v2689 = vld [vmem:[%s2560] sm:$0xff]
      %v2690 = vld [vmem:[%s2560 + $0x8] sm:$0xff]
      %v2691 = vld [vmem:[%s2560 + $0x18] sm:$0xff]
      %v2692 = vld [vmem:[%s2560 + $0x20] sm:$0xff]
      %v2693 = vld [vmem:[%s2560 + $0x30] sm:$0xff]
      %v2694 = vld [vmem:[%s2560 + $0x38] sm:$0xff]
      %v2695 = vld [vmem:[%s2560 + $0x48] sm:$0xff]
      %v2696 = vld [vmem:[%s2560 + $0x50] sm:$0xff]
      %v2697 = vld [vmem:[%s2560 + $0x60] sm:$0xff]
      %v2698 = vld [vmem:[%s2560 + $0x68] sm:$0xff]
      %v2699 = vld [vmem:[%s2560 + $0x78] sm:$0xff]
      %v2700 = vld [vmem:[%s2560 + $0x80] sm:$0xff]
      %v2701 = vld [vmem:[%s2560 + $0x90] sm:$0xff]
      %v2702 = vld [vmem:[%s2560 + $0x98] sm:$0xff]
      %v2703 = vld [vmem:[%s2560 + $0xa8] sm:$0xff]
      %v2704 = vld [vmem:[%s2560 + $0xb0] sm:$0xff]
      %v2705 = vld [vmem:[%s2560 + $0xc0] sm:$0xff]
      %v2706 = vld [vmem:[%s2560 + $0xc8] sm:$0xff]
      %v2707 = vld [vmem:[%s2560 + $0xd8] sm:$0xff]
      %v2708 = vld [vmem:[%s2560 + $0xe0] sm:$0xff]
      %v2709 = vld [vmem:[%s2560 + $0xf0] sm:$0xff]
      %v2710 = vld [vmem:[%s2560 + $0xf8] sm:$0xff]
      %v2711 = vld [vmem:[%s2560 + $0x108] sm:$0xff]
      %v2712 = vld [vmem:[%s2560 + $0x110] sm:$0xff]
      %v2713 = vld [vmem:[%s2560 + $0x120] sm:$0xff]
      %v2714 = vld [vmem:[%s2560 + $0x128] sm:$0xff]
      %v2715 = vld [vmem:[%s2560 + $0x138] sm:$0xff]
      %v2716 = vld [vmem:[%s2560 + $0x140] sm:$0xff]
      %v2717 = vld [vmem:[%s2560 + $0x150] sm:$0xff]
      %v2718 = vld [vmem:[%s2560 + $0x158] sm:$0xff]
      %v2719 = vld [vmem:[%s2560 + $0x168] sm:$0xff]
      %v2720 = vld [vmem:[%s2560 + $0x170] sm:$0xff]
      %v2721 = vld [vmem:[%s2560 + $0x1] sm:$0xff]
      %v2722 = vld [vmem:[%s2560 + $0x9] sm:$0xff]
      %v2723 = vld [vmem:[%s2560 + $0x19] sm:$0xff]
      %v2724 = vld [vmem:[%s2560 + $0x21] sm:$0xff]
      %v2725 = vld [vmem:[%s2560 + $0x31] sm:$0xff]
      %v2726 = vld [vmem:[%s2560 + $0x39] sm:$0xff]
      %v2727 = vld [vmem:[%s2560 + $0x49] sm:$0xff]
      %v2728 = vld [vmem:[%s2560 + $0x51] sm:$0xff]
      %v2729 = vld [vmem:[%s2560 + $0x61] sm:$0xff]
      %v2730 = vld [vmem:[%s2560 + $0x69] sm:$0xff]
      %v2731 = vld [vmem:[%s2560 + $0x79] sm:$0xff]
      %v2732 = vld [vmem:[%s2560 + $0x81] sm:$0xff]
      %v2733 = vld [vmem:[%s2560 + $0x91] sm:$0xff]
      %v2734 = vld [vmem:[%s2560 + $0x99] sm:$0xff]
      %v2735 = vld [vmem:[%s2560 + $0xa9] sm:$0xff]
      %v2736 = vld [vmem:[%s2560 + $0xb1] sm:$0xff]
      %v2737 = vld [vmem:[%s2560 + $0xc1] sm:$0xff]
      %v2738 = vld [vmem:[%s2560 + $0xc9] sm:$0xff]
      %v2739 = vld [vmem:[%s2560 + $0xd9] sm:$0xff]
      %v2740 = vld [vmem:[%s2560 + $0xe1] sm:$0xff]
      %v2741 = vld [vmem:[%s2560 + $0xf1] sm:$0xff]
      %v2742 = vld [vmem:[%s2560 + $0xf9] sm:$0xff]
      %v2743 = vld [vmem:[%s2560 + $0x109] sm:$0xff]
      %v2744 = vld [vmem:[%s2560 + $0x111] sm:$0xff]
      %v2745 = vld [vmem:[%s2560 + $0x121] sm:$0xff]
      %v2746 = vld [vmem:[%s2560 + $0x129] sm:$0xff]
      %v2747 = vld [vmem:[%s2560 + $0x139] sm:$0xff]
      %v2748 = vld [vmem:[%s2560 + $0x141] sm:$0xff]
      %v2749 = vld [vmem:[%s2560 + $0x151] sm:$0xff]
      %v2750 = vld [vmem:[%s2560 + $0x159] sm:$0xff]
      %v2751 = vld [vmem:[%s2560 + $0x169] sm:$0xff]
      %v2752 = vld [vmem:[%s2560 + $0x171] sm:$0xff]
      %v2753 = vld [vmem:[%s2560 + $0x2] sm:$0xff]
      %v2754 = vld [vmem:[%s2560 + $0xa] sm:$0xff]
      %v2755 = vld [vmem:[%s2560 + $0x1a] sm:$0xff]
      %v2756 = vld [vmem:[%s2560 + $0x22] sm:$0xff]
      %v2757 = vld [vmem:[%s2560 + $0x32] sm:$0xff]
      %v2758 = vld [vmem:[%s2560 + $0x3a] sm:$0xff]
      %v2759 = vld [vmem:[%s2560 + $0x4a] sm:$0xff]
      %v2760 = vld [vmem:[%s2560 + $0x52] sm:$0xff]
      %v2761 = vld [vmem:[%s2560 + $0x62] sm:$0xff]
      %v2762 = vld [vmem:[%s2560 + $0x6a] sm:$0xff]
      %v2763 = vld [vmem:[%s2560 + $0x7a] sm:$0xff]
      %v2764 = vld [vmem:[%s2560 + $0x82] sm:$0xff]
      %v2765 = vld [vmem:[%s2560 + $0x92] sm:$0xff]
      %v2766 = vld [vmem:[%s2560 + $0x9a] sm:$0xff]
      %v2767 = vld [vmem:[%s2560 + $0xaa] sm:$0xff]
      %v2768 = vld [vmem:[%s2560 + $0xb2] sm:$0xff]
      %v2769 = vld [vmem:[%s2560 + $0xc2] sm:$0xff]
      %v2770 = vld [vmem:[%s2560 + $0xca] sm:$0xff]
      %v2771 = vld [vmem:[%s2560 + $0xda] sm:$0xff]
      %v2772 = vld [vmem:[%s2560 + $0xe2] sm:$0xff]
      %v2773 = vld [vmem:[%s2560 + $0xf2] sm:$0xff]
      %v2774 = vld [vmem:[%s2560 + $0xfa] sm:$0xff]
      %v2775 = vld [vmem:[%s2560 + $0x10a] sm:$0xff]
      %v2776 = vld [vmem:[%s2560 + $0x112] sm:$0xff]
      %v2777 = vld [vmem:[%s2560 + $0x122] sm:$0xff]
      %v2778 = vld [vmem:[%s2560 + $0x12a] sm:$0xff]
      %v2779 = vld [vmem:[%s2560 + $0x13a] sm:$0xff]
      %v2780 = vld [vmem:[%s2560 + $0x142] sm:$0xff]
      %v2781 = vld [vmem:[%s2560 + $0x152] sm:$0xff]
      %v2782 = vld [vmem:[%s2560 + $0x15a] sm:$0xff]
      %v2783 = vld [vmem:[%s2560 + $0x16a] sm:$0xff]
      %v2784 = vld [vmem:[%s2560 + $0x172] sm:$0xff]
      %s2785 = scalar_lea.vmem [#allocation3], 48
      %v2786 = vld [vmem:[%s2785] sm:$0xff]
      %v2787 = vld [vmem:[%s2785 + $0x8] sm:$0xff]
      %v2788 = vld [vmem:[%s2785 + $0x18] sm:$0xff]
      %v2789 = vld [vmem:[%s2785 + $0x20] sm:$0xff]
      %v2790 = vld [vmem:[%s2785 + $0x30] sm:$0xff]
      %v2791 = vld [vmem:[%s2785 + $0x38] sm:$0xff]
      %v2792 = vld [vmem:[%s2785 + $0x48] sm:$0xff]
      %v2793 = vld [vmem:[%s2785 + $0x50] sm:$0xff]
      %v2794 = vld [vmem:[%s2785 + $0x60] sm:$0xff]
      %v2795 = vld [vmem:[%s2785 + $0x68] sm:$0xff]
      %v2796 = vld [vmem:[%s2785 + $0x78] sm:$0xff]
      %v2797 = vld [vmem:[%s2785 + $0x80] sm:$0xff]
      %v2798 = vld [vmem:[%s2785 + $0x90] sm:$0xff]
      %v2799 = vld [vmem:[%s2785 + $0x98] sm:$0xff]
      %v2800 = vld [vmem:[%s2785 + $0xa8] sm:$0xff]
      %v2801 = vld [vmem:[%s2785 + $0xb0] sm:$0xff]
      %v2802 = vld [vmem:[%s2785 + $0xc0] sm:$0xff]
      %v2803 = vld [vmem:[%s2785 + $0xc8] sm:$0xff]
      %v2804 = vld [vmem:[%s2785 + $0xd8] sm:$0xff]
      %v2805 = vld [vmem:[%s2785 + $0xe0] sm:$0xff]
      %v2806 = vld [vmem:[%s2785 + $0xf0] sm:$0xff]
      %v2807 = vld [vmem:[%s2785 + $0xf8] sm:$0xff]
      %v2808 = vld [vmem:[%s2785 + $0x108] sm:$0xff]
      %v2809 = vld [vmem:[%s2785 + $0x110] sm:$0xff]
      %v2810 = vld [vmem:[%s2785 + $0x120] sm:$0xff]
      %v2811 = vld [vmem:[%s2785 + $0x128] sm:$0xff]
      %v2812 = vld [vmem:[%s2785 + $0x138] sm:$0xff]
      %v2813 = vld [vmem:[%s2785 + $0x140] sm:$0xff]
      %v2814 = vld [vmem:[%s2785 + $0x150] sm:$0xff]
      %v2815 = vld [vmem:[%s2785 + $0x158] sm:$0xff]
      %v2816 = vld [vmem:[%s2785 + $0x168] sm:$0xff]
      %v2817 = vld [vmem:[%s2785 + $0x170] sm:$0xff]
      %v2818 = vld [vmem:[%s2785 + $0x1] sm:$0xff]
      %v2819 = vld [vmem:[%s2785 + $0x9] sm:$0xff]
      %v2820 = vld [vmem:[%s2785 + $0x19] sm:$0xff]
      %v2821 = vld [vmem:[%s2785 + $0x21] sm:$0xff]
      %v2822 = vld [vmem:[%s2785 + $0x31] sm:$0xff]
      %v2823 = vld [vmem:[%s2785 + $0x39] sm:$0xff]
      %v2824 = vld [vmem:[%s2785 + $0x49] sm:$0xff]
      %v2825 = vld [vmem:[%s2785 + $0x51] sm:$0xff]
      %v2826 = vld [vmem:[%s2785 + $0x61] sm:$0xff]
      %v2827 = vld [vmem:[%s2785 + $0x69] sm:$0xff]
      %v2828 = vld [vmem:[%s2785 + $0x79] sm:$0xff]
      %v2829 = vld [vmem:[%s2785 + $0x81] sm:$0xff]
      %v2830 = vld [vmem:[%s2785 + $0x91] sm:$0xff]
      %v2831 = vld [vmem:[%s2785 + $0x99] sm:$0xff]
      %v2832 = vld [vmem:[%s2785 + $0xa9] sm:$0xff]
      %v2833 = vld [vmem:[%s2785 + $0xb1] sm:$0xff]
      %v2834 = vld [vmem:[%s2785 + $0xc1] sm:$0xff]
      %v2835 = vld [vmem:[%s2785 + $0xc9] sm:$0xff]
      %v2836 = vld [vmem:[%s2785 + $0xd9] sm:$0xff]
      %v2837 = vld [vmem:[%s2785 + $0xe1] sm:$0xff]
      %v2838 = vld [vmem:[%s2785 + $0xf1] sm:$0xff]
      %v2839 = vld [vmem:[%s2785 + $0xf9] sm:$0xff]
      %v2840 = vld [vmem:[%s2785 + $0x109] sm:$0xff]
      %v2841 = vld [vmem:[%s2785 + $0x111] sm:$0xff]
      %v2842 = vld [vmem:[%s2785 + $0x121] sm:$0xff]
      %v2843 = vld [vmem:[%s2785 + $0x129] sm:$0xff]
      %v2844 = vld [vmem:[%s2785 + $0x139] sm:$0xff]
      %v2845 = vld [vmem:[%s2785 + $0x141] sm:$0xff]
      %v2846 = vld [vmem:[%s2785 + $0x151] sm:$0xff]
      %v2847 = vld [vmem:[%s2785 + $0x159] sm:$0xff]
      %v2848 = vld [vmem:[%s2785 + $0x169] sm:$0xff]
      %v2849 = vld [vmem:[%s2785 + $0x171] sm:$0xff]
      %v2850 = vld [vmem:[%s2785 + $0x2] sm:$0xff]
      %v2851 = vld [vmem:[%s2785 + $0xa] sm:$0xff]
      %v2852 = vld [vmem:[%s2785 + $0x1a] sm:$0xff]
      %v2853 = vld [vmem:[%s2785 + $0x22] sm:$0xff]
      %v2854 = vld [vmem:[%s2785 + $0x32] sm:$0xff]
      %v2855 = vld [vmem:[%s2785 + $0x3a] sm:$0xff]
      %v2856 = vld [vmem:[%s2785 + $0x4a] sm:$0xff]
      %v2857 = vld [vmem:[%s2785 + $0x52] sm:$0xff]
      %v2858 = vld [vmem:[%s2785 + $0x62] sm:$0xff]
      %v2859 = vld [vmem:[%s2785 + $0x6a] sm:$0xff]
      %v2860 = vld [vmem:[%s2785 + $0x7a] sm:$0xff]
      %v2861 = vld [vmem:[%s2785 + $0x82] sm:$0xff]
      %v2862 = vld [vmem:[%s2785 + $0x92] sm:$0xff]
      %v2863 = vld [vmem:[%s2785 + $0x9a] sm:$0xff]
      %v2864 = vld [vmem:[%s2785 + $0xaa] sm:$0xff]
      %v2865 = vld [vmem:[%s2785 + $0xb2] sm:$0xff]
      %v2866 = vld [vmem:[%s2785 + $0xc2] sm:$0xff]
      %v2867 = vld [vmem:[%s2785 + $0xca] sm:$0xff]
      %v2868 = vld [vmem:[%s2785 + $0xda] sm:$0xff]
      %v2869 = vld [vmem:[%s2785 + $0xe2] sm:$0xff]
      %v2870 = vld [vmem:[%s2785 + $0xf2] sm:$0xff]
      %v2871 = vld [vmem:[%s2785 + $0xfa] sm:$0xff]
      %v2872 = vld [vmem:[%s2785 + $0x10a] sm:$0xff]
      %v2873 = vld [vmem:[%s2785 + $0x112] sm:$0xff]
      %v2874 = vld [vmem:[%s2785 + $0x122] sm:$0xff]
      %v2875 = vld [vmem:[%s2785 + $0x12a] sm:$0xff]
      %v2876 = vld [vmem:[%s2785 + $0x13a] sm:$0xff]
      %v2877 = vld [vmem:[%s2785 + $0x142] sm:$0xff]
      %v2878 = vld [vmem:[%s2785 + $0x152] sm:$0xff]
      %v2879 = vld [vmem:[%s2785 + $0x15a] sm:$0xff]
      %v2880 = vld [vmem:[%s2785 + $0x16a] sm:$0xff]
      %v2881 = vld [vmem:[%s2785 + $0x172] sm:$0xff]
      %2914 = vrot.lane.b32.xlu0 %v2625, 4
      %v2915 = vpop.permute.xlu0 %2914
      %2916 = vrot.lane.b32.xlu0 %v2626, 4
      %v2917 = vpop.permute.xlu0 %2916
      %2918 = vrot.lane.b32.xlu0 %v2627, 4
      %v2919 = vpop.permute.xlu0 %2918
      %2920 = vrot.lane.b32.xlu0 %v2628, 4
      %v2921 = vpop.permute.xlu0 %2920
      %2922 = vrot.lane.b32.xlu0 %v2629, 4
      %v2923 = vpop.permute.xlu0 %2922
      %2924 = vrot.lane.b32.xlu0 %v2630, 4
      %v2925 = vpop.permute.xlu0 %2924
      %2926 = vrot.lane.b32.xlu0 %v2631, 4
      %v2927 = vpop.permute.xlu0 %2926
      %2928 = vrot.lane.b32.xlu0 %v2632, 4
      %v2929 = vpop.permute.xlu0 %2928
      %2930 = vrot.lane.b32.xlu0 %v2633, 4
      %v2931 = vpop.permute.xlu0 %2930
      %2932 = vrot.lane.b32.xlu0 %v2634, 4
      %v2933 = vpop.permute.xlu0 %2932
      %2934 = vrot.lane.b32.xlu0 %v2635, 4
      %v2935 = vpop.permute.xlu0 %2934
      %2936 = vrot.lane.b32.xlu0 %v2636, 4
      %v2937 = vpop.permute.xlu0 %2936
      %2938 = vrot.lane.b32.xlu0 %v2637, 4
      %v2939 = vpop.permute.xlu0 %2938
      %2940 = vrot.lane.b32.xlu0 %v2638, 4
      %v2941 = vpop.permute.xlu0 %2940
      %2942 = vrot.lane.b32.xlu0 %v2639, 4
      %v2943 = vpop.permute.xlu0 %2942
      %2944 = vrot.lane.b32.xlu0 %v2640, 4
      %v2945 = vpop.permute.xlu0 %2944
      %2946 = vrot.lane.b32.xlu0 %v2641, 4
      %v2947 = vpop.permute.xlu0 %2946
      %2948 = vrot.lane.b32.xlu0 %v2642, 4
      %v2949 = vpop.permute.xlu0 %2948
      %2950 = vrot.lane.b32.xlu0 %v2643, 4
      %v2951 = vpop.permute.xlu0 %2950
      %2952 = vrot.lane.b32.xlu0 %v2644, 4
      %v2953 = vpop.permute.xlu0 %2952
      %2954 = vrot.lane.b32.xlu0 %v2645, 4
      %v2955 = vpop.permute.xlu0 %2954
      %2956 = vrot.lane.b32.xlu0 %v2646, 4
      %v2957 = vpop.permute.xlu0 %2956
      %2958 = vrot.lane.b32.xlu0 %v2647, 4
      %v2959 = vpop.permute.xlu0 %2958
      %2960 = vrot.lane.b32.xlu0 %v2648, 4
      %v2961 = vpop.permute.xlu0 %2960
      %2962 = vrot.lane.b32.xlu0 %v2649, 4
      %v2963 = vpop.permute.xlu0 %2962
      %2964 = vrot.lane.b32.xlu0 %v2650, 4
      %v2965 = vpop.permute.xlu0 %2964
      %2966 = vrot.lane.b32.xlu0 %v2651, 4
      %v2967 = vpop.permute.xlu0 %2966
      %2968 = vrot.lane.b32.xlu0 %v2652, 4
      %v2969 = vpop.permute.xlu0 %2968
      %2970 = vrot.lane.b32.xlu0 %v2653, 4
      %v2971 = vpop.permute.xlu0 %2970
      %2972 = vrot.lane.b32.xlu0 %v2654, 4
      %v2973 = vpop.permute.xlu0 %2972
      %2974 = vrot.lane.b32.xlu0 %v2655, 4
      %v2975 = vpop.permute.xlu0 %2974
      %2976 = vrot.lane.b32.xlu0 %v2656, 4
      %v2977 = vpop.permute.xlu0 %2976
      %3042 = vrot.lane.b32.xlu0 %v2657, 8
      %v3043 = vpop.permute.xlu0 %3042
      %3044 = vrot.lane.b32.xlu0 %v2658, 8
      %v3045 = vpop.permute.xlu0 %3044
      %3046 = vrot.lane.b32.xlu0 %v2659, 8
      %v3047 = vpop.permute.xlu0 %3046
      %3048 = vrot.lane.b32.xlu0 %v2660, 8
      %v3049 = vpop.permute.xlu0 %3048
      %3050 = vrot.lane.b32.xlu0 %v2661, 8
      %v3051 = vpop.permute.xlu0 %3050
      %3052 = vrot.lane.b32.xlu0 %v2662, 8
      %v3053 = vpop.permute.xlu0 %3052
      %3054 = vrot.lane.b32.xlu0 %v2663, 8
      %v3055 = vpop.permute.xlu0 %3054
      %3056 = vrot.lane.b32.xlu0 %v2664, 8
      %v3057 = vpop.permute.xlu0 %3056
      %3058 = vrot.lane.b32.xlu0 %v2665, 8
      %v3059 = vpop.permute.xlu0 %3058
      %3060 = vrot.lane.b32.xlu0 %v2666, 8
      %v3061 = vpop.permute.xlu0 %3060
      %3062 = vrot.lane.b32.xlu0 %v2667, 8
      %v3063 = vpop.permute.xlu0 %3062
      %3064 = vrot.lane.b32.xlu0 %v2668, 8
      %v3065 = vpop.permute.xlu0 %3064
      %3066 = vrot.lane.b32.xlu0 %v2669, 8
      %v3067 = vpop.permute.xlu0 %3066
      %3068 = vrot.lane.b32.xlu0 %v2670, 8
      %v3069 = vpop.permute.xlu0 %3068
      %3070 = vrot.lane.b32.xlu0 %v2671, 8
      %v3071 = vpop.permute.xlu0 %3070
      %3072 = vrot.lane.b32.xlu0 %v2672, 8
      %v3073 = vpop.permute.xlu0 %3072
      %3074 = vrot.lane.b32.xlu0 %v2673, 8
      %v3075 = vpop.permute.xlu0 %3074
      %3076 = vrot.lane.b32.xlu0 %v2674, 8
      %v3077 = vpop.permute.xlu0 %3076
      %3078 = vrot.lane.b32.xlu0 %v2675, 8
      %v3079 = vpop.permute.xlu0 %3078
      %3080 = vrot.lane.b32.xlu0 %v2676, 8
      %v3081 = vpop.permute.xlu0 %3080
      %3082 = vrot.lane.b32.xlu0 %v2677, 8
      %v3083 = vpop.permute.xlu0 %3082
      %3084 = vrot.lane.b32.xlu0 %v2678, 8
      %v3085 = vpop.permute.xlu0 %3084
      %3086 = vrot.lane.b32.xlu0 %v2679, 8
      %v3087 = vpop.permute.xlu0 %3086
      %3088 = vrot.lane.b32.xlu0 %v2680, 8
      %v3089 = vpop.permute.xlu0 %3088
      %3090 = vrot.lane.b32.xlu0 %v2681, 8
      %v3091 = vpop.permute.xlu0 %3090
      %3092 = vrot.lane.b32.xlu0 %v2682, 8
      %v3093 = vpop.permute.xlu0 %3092
      %3094 = vrot.lane.b32.xlu0 %v2683, 8
      %v3095 = vpop.permute.xlu0 %3094
      %3096 = vrot.lane.b32.xlu0 %v2684, 8
      %v3097 = vpop.permute.xlu0 %3096
      %3098 = vrot.lane.b32.xlu0 %v2685, 8
      %v3099 = vpop.permute.xlu0 %3098
      %3100 = vrot.lane.b32.xlu0 %v2686, 8
      %v3101 = vpop.permute.xlu0 %3100
      %3102 = vrot.lane.b32.xlu0 %v2687, 8
      %v3103 = vpop.permute.xlu0 %3102
      %3104 = vrot.lane.b32.xlu0 %v2688, 8
      %v3105 = vpop.permute.xlu0 %3104
      %3170 = vrot.lane.b32.xlu0 %v2689, 12
      %v3171 = vpop.permute.xlu0 %3170
      %3172 = vrot.lane.b32.xlu0 %v2690, 12
      %v3173 = vpop.permute.xlu0 %3172
      %3174 = vrot.lane.b32.xlu0 %v2691, 12
      %v3175 = vpop.permute.xlu0 %3174
      %3176 = vrot.lane.b32.xlu0 %v2692, 12
      %v3177 = vpop.permute.xlu0 %3176
      %3178 = vrot.lane.b32.xlu0 %v2693, 12
      %v3179 = vpop.permute.xlu0 %3178
      %3180 = vrot.lane.b32.xlu0 %v2694, 12
      %v3181 = vpop.permute.xlu0 %3180
      %3182 = vrot.lane.b32.xlu0 %v2695, 12
      %v3183 = vpop.permute.xlu0 %3182
      %3184 = vrot.lane.b32.xlu0 %v2696, 12
      %v3185 = vpop.permute.xlu0 %3184
      %3186 = vrot.lane.b32.xlu0 %v2697, 12
      %v3187 = vpop.permute.xlu0 %3186
      %3188 = vrot.lane.b32.xlu0 %v2698, 12
      %v3189 = vpop.permute.xlu0 %3188
      %3190 = vrot.lane.b32.xlu0 %v2699, 12
      %v3191 = vpop.permute.xlu0 %3190
      %3192 = vrot.lane.b32.xlu0 %v2700, 12
      %v3193 = vpop.permute.xlu0 %3192
      %3194 = vrot.lane.b32.xlu0 %v2701, 12
      %v3195 = vpop.permute.xlu0 %3194
      %3196 = vrot.lane.b32.xlu0 %v2702, 12
      %v3197 = vpop.permute.xlu0 %3196
      %3198 = vrot.lane.b32.xlu0 %v2703, 12
      %v3199 = vpop.permute.xlu0 %3198
      %3200 = vrot.lane.b32.xlu0 %v2704, 12
      %v3201 = vpop.permute.xlu0 %3200
      %3202 = vrot.lane.b32.xlu0 %v2705, 12
      %v3203 = vpop.permute.xlu0 %3202
      %3204 = vrot.lane.b32.xlu0 %v2706, 12
      %v3205 = vpop.permute.xlu0 %3204
      %3206 = vrot.lane.b32.xlu0 %v2707, 12
      %v3207 = vpop.permute.xlu0 %3206
      %3208 = vrot.lane.b32.xlu0 %v2708, 12
      %v3209 = vpop.permute.xlu0 %3208
      %3210 = vrot.lane.b32.xlu0 %v2709, 12
      %v3211 = vpop.permute.xlu0 %3210
      %3212 = vrot.lane.b32.xlu0 %v2710, 12
      %v3213 = vpop.permute.xlu0 %3212
      %3214 = vrot.lane.b32.xlu0 %v2711, 12
      %v3215 = vpop.permute.xlu0 %3214
      %3216 = vrot.lane.b32.xlu0 %v2712, 12
      %v3217 = vpop.permute.xlu0 %3216
      %3218 = vrot.lane.b32.xlu0 %v2713, 12
      %v3219 = vpop.permute.xlu0 %3218
      %3220 = vrot.lane.b32.xlu0 %v2714, 12
      %v3221 = vpop.permute.xlu0 %3220
      %3222 = vrot.lane.b32.xlu0 %v2715, 12
      %v3223 = vpop.permute.xlu0 %3222
      %3224 = vrot.lane.b32.xlu0 %v2716, 12
      %v3225 = vpop.permute.xlu0 %3224
      %3226 = vrot.lane.b32.xlu0 %v2717, 12
      %v3227 = vpop.permute.xlu0 %3226
      %3228 = vrot.lane.b32.xlu0 %v2718, 12
      %v3229 = vpop.permute.xlu0 %3228
      %3230 = vrot.lane.b32.xlu0 %v2719, 12
      %v3231 = vpop.permute.xlu0 %3230
      %3232 = vrot.lane.b32.xlu0 %v2720, 12
      %v3233 = vpop.permute.xlu0 %3232
      %3298 = vrot.lane.b32.xlu0 %v2721, 16
      %v3299 = vpop.permute.xlu0 %3298
      %3300 = vrot.lane.b32.xlu0 %v2722, 16
      %v3301 = vpop.permute.xlu0 %3300
      %3302 = vrot.lane.b32.xlu0 %v2723, 16
      %v3303 = vpop.permute.xlu0 %3302
      %3304 = vrot.lane.b32.xlu0 %v2724, 16
      %v3305 = vpop.permute.xlu0 %3304
      %3306 = vrot.lane.b32.xlu0 %v2725, 16
      %v3307 = vpop.permute.xlu0 %3306
      %3308 = vrot.lane.b32.xlu0 %v2726, 16
      %v3309 = vpop.permute.xlu0 %3308
      %3310 = vrot.lane.b32.xlu0 %v2727, 16
      %v3311 = vpop.permute.xlu0 %3310
      %3312 = vrot.lane.b32.xlu0 %v2728, 16
      %v3313 = vpop.permute.xlu0 %3312
      %3314 = vrot.lane.b32.xlu0 %v2729, 16
      %v3315 = vpop.permute.xlu0 %3314
      %3316 = vrot.lane.b32.xlu0 %v2730, 16
      %v3317 = vpop.permute.xlu0 %3316
      %3318 = vrot.lane.b32.xlu0 %v2731, 16
      %v3319 = vpop.permute.xlu0 %3318
      %3320 = vrot.lane.b32.xlu0 %v2732, 16
      %v3321 = vpop.permute.xlu0 %3320
      %3322 = vrot.lane.b32.xlu0 %v2733, 16
      %v3323 = vpop.permute.xlu0 %3322
      %3324 = vrot.lane.b32.xlu0 %v2734, 16
      %v3325 = vpop.permute.xlu0 %3324
      %3326 = vrot.lane.b32.xlu0 %v2735, 16
      %v3327 = vpop.permute.xlu0 %3326
      %3328 = vrot.lane.b32.xlu0 %v2736, 16
      %v3329 = vpop.permute.xlu0 %3328
      %3330 = vrot.lane.b32.xlu0 %v2737, 16
      %v3331 = vpop.permute.xlu0 %3330
      %3332 = vrot.lane.b32.xlu0 %v2738, 16
      %v3333 = vpop.permute.xlu0 %3332
      %3334 = vrot.lane.b32.xlu0 %v2739, 16
      %v3335 = vpop.permute.xlu0 %3334
      %3336 = vrot.lane.b32.xlu0 %v2740, 16
      %v3337 = vpop.permute.xlu0 %3336
      %3338 = vrot.lane.b32.xlu0 %v2741, 16
      %v3339 = vpop.permute.xlu0 %3338
      %3340 = vrot.lane.b32.xlu0 %v2742, 16
      %v3341 = vpop.permute.xlu0 %3340
      %3342 = vrot.lane.b32.xlu0 %v2743, 16
      %v3343 = vpop.permute.xlu0 %3342
      %3344 = vrot.lane.b32.xlu0 %v2744, 16
      %v3345 = vpop.permute.xlu0 %3344
      %3346 = vrot.lane.b32.xlu0 %v2745, 16
      %v3347 = vpop.permute.xlu0 %3346
      %3348 = vrot.lane.b32.xlu0 %v2746, 16
      %v3349 = vpop.permute.xlu0 %3348
      %3350 = vrot.lane.b32.xlu0 %v2747, 16
      %v3351 = vpop.permute.xlu0 %3350
      %3352 = vrot.lane.b32.xlu0 %v2748, 16
      %v3353 = vpop.permute.xlu0 %3352
      %3354 = vrot.lane.b32.xlu0 %v2749, 16
      %v3355 = vpop.permute.xlu0 %3354
      %3356 = vrot.lane.b32.xlu0 %v2750, 16
      %v3357 = vpop.permute.xlu0 %3356
      %3358 = vrot.lane.b32.xlu0 %v2751, 16
      %v3359 = vpop.permute.xlu0 %3358
      %3360 = vrot.lane.b32.xlu0 %v2752, 16
      %v3361 = vpop.permute.xlu0 %3360
      %3426 = vrot.lane.b32.xlu0 %v2753, 20
      %v3427 = vpop.permute.xlu0 %3426
      %3428 = vrot.lane.b32.xlu0 %v2754, 20
      %v3429 = vpop.permute.xlu0 %3428
      %3430 = vrot.lane.b32.xlu0 %v2755, 20
      %v3431 = vpop.permute.xlu0 %3430
      %3432 = vrot.lane.b32.xlu0 %v2756, 20
      %v3433 = vpop.permute.xlu0 %3432
      %3434 = vrot.lane.b32.xlu0 %v2757, 20
      %v3435 = vpop.permute.xlu0 %3434
      %3436 = vrot.lane.b32.xlu0 %v2758, 20
      %v3437 = vpop.permute.xlu0 %3436
      %3438 = vrot.lane.b32.xlu0 %v2759, 20
      %v3439 = vpop.permute.xlu0 %3438
      %3440 = vrot.lane.b32.xlu0 %v2760, 20
      %v3441 = vpop.permute.xlu0 %3440
      %3442 = vrot.lane.b32.xlu0 %v2761, 20
      %v3443 = vpop.permute.xlu0 %3442
      %3444 = vrot.lane.b32.xlu0 %v2762, 20
      %v3445 = vpop.permute.xlu0 %3444
      %3446 = vrot.lane.b32.xlu0 %v2763, 20
      %v3447 = vpop.permute.xlu0 %3446
      %3448 = vrot.lane.b32.xlu0 %v2764, 20
      %v3449 = vpop.permute.xlu0 %3448
      %3450 = vrot.lane.b32.xlu0 %v2765, 20
      %v3451 = vpop.permute.xlu0 %3450
      %3452 = vrot.lane.b32.xlu0 %v2766, 20
      %v3453 = vpop.permute.xlu0 %3452
      %3454 = vrot.lane.b32.xlu0 %v2767, 20
      %v3455 = vpop.permute.xlu0 %3454
      %3456 = vrot.lane.b32.xlu0 %v2768, 20
      %v3457 = vpop.permute.xlu0 %3456
      %3458 = vrot.lane.b32.xlu0 %v2769, 20
      %v3459 = vpop.permute.xlu0 %3458
      %3460 = vrot.lane.b32.xlu0 %v2770, 20
      %v3461 = vpop.permute.xlu0 %3460
      %3462 = vrot.lane.b32.xlu0 %v2771, 20
      %v3463 = vpop.permute.xlu0 %3462
      %3464 = vrot.lane.b32.xlu0 %v2772, 20
      %v3465 = vpop.permute.xlu0 %3464
      %3466 = vrot.lane.b32.xlu0 %v2773, 20
      %v3467 = vpop.permute.xlu0 %3466
      %3468 = vrot.lane.b32.xlu0 %v2774, 20
      %v3469 = vpop.permute.xlu0 %3468
      %3470 = vrot.lane.b32.xlu0 %v2775, 20
      %v3471 = vpop.permute.xlu0 %3470
      %3472 = vrot.lane.b32.xlu0 %v2776, 20
      %v3473 = vpop.permute.xlu0 %3472
      %3474 = vrot.lane.b32.xlu0 %v2777, 20
      %v3475 = vpop.permute.xlu0 %3474
      %3476 = vrot.lane.b32.xlu0 %v2778, 20
      %v3477 = vpop.permute.xlu0 %3476
      %3478 = vrot.lane.b32.xlu0 %v2779, 20
      %v3479 = vpop.permute.xlu0 %3478
      %3480 = vrot.lane.b32.xlu0 %v2780, 20
      %v3481 = vpop.permute.xlu0 %3480
      %3482 = vrot.lane.b32.xlu0 %v2781, 20
      %v3483 = vpop.permute.xlu0 %3482
      %3484 = vrot.lane.b32.xlu0 %v2782, 20
      %v3485 = vpop.permute.xlu0 %3484
      %3486 = vrot.lane.b32.xlu0 %v2783, 20
      %v3487 = vpop.permute.xlu0 %3486
      %3488 = vrot.lane.b32.xlu0 %v2784, 20
      %v3489 = vpop.permute.xlu0 %3488
      %3554 = vrot.lane.b32.xlu0 %v2786, 24
      %v3555 = vpop.permute.xlu0 %3554
      %3556 = vrot.lane.b32.xlu0 %v2787, 24
      %v3557 = vpop.permute.xlu0 %3556
      %3558 = vrot.lane.b32.xlu0 %v2788, 24
      %v3559 = vpop.permute.xlu0 %3558
      %3560 = vrot.lane.b32.xlu0 %v2789, 24
      %v3561 = vpop.permute.xlu0 %3560
      %3562 = vrot.lane.b32.xlu0 %v2790, 24
      %v3563 = vpop.permute.xlu0 %3562
      %3564 = vrot.lane.b32.xlu0 %v2791, 24
      %v3565 = vpop.permute.xlu0 %3564
      %3566 = vrot.lane.b32.xlu0 %v2792, 24
      %v3567 = vpop.permute.xlu0 %3566
      %3568 = vrot.lane.b32.xlu0 %v2793, 24
      %v3569 = vpop.permute.xlu0 %3568
      %3570 = vrot.lane.b32.xlu0 %v2794, 24
      %v3571 = vpop.permute.xlu0 %3570
      %3572 = vrot.lane.b32.xlu0 %v2795, 24
      %v3573 = vpop.permute.xlu0 %3572
      %3574 = vrot.lane.b32.xlu0 %v2796, 24
      %v3575 = vpop.permute.xlu0 %3574
      %3576 = vrot.lane.b32.xlu0 %v2797, 24
      %v3577 = vpop.permute.xlu0 %3576
      %3578 = vrot.lane.b32.xlu0 %v2798, 24
      %v3579 = vpop.permute.xlu0 %3578
      %3580 = vrot.lane.b32.xlu0 %v2799, 24
      %v3581 = vpop.permute.xlu0 %3580
      %3582 = vrot.lane.b32.xlu0 %v2800, 24
      %v3583 = vpop.permute.xlu0 %3582
      %3584 = vrot.lane.b32.xlu0 %v2801, 24
      %v3585 = vpop.permute.xlu0 %3584
      %3586 = vrot.lane.b32.xlu0 %v2802, 24
      %v3587 = vpop.permute.xlu0 %3586
      %3588 = vrot.lane.b32.xlu0 %v2803, 24
      %v3589 = vpop.permute.xlu0 %3588
      %3590 = vrot.lane.b32.xlu0 %v2804, 24
      %v3591 = vpop.permute.xlu0 %3590
      %3592 = vrot.lane.b32.xlu0 %v2805, 24
      %v3593 = vpop.permute.xlu0 %3592
      %3594 = vrot.lane.b32.xlu0 %v2806, 24
      %v3595 = vpop.permute.xlu0 %3594
      %3596 = vrot.lane.b32.xlu0 %v2807, 24
      %v3597 = vpop.permute.xlu0 %3596
      %3598 = vrot.lane.b32.xlu0 %v2808, 24
      %v3599 = vpop.permute.xlu0 %3598
      %3600 = vrot.lane.b32.xlu0 %v2809, 24
      %v3601 = vpop.permute.xlu0 %3600
      %3602 = vrot.lane.b32.xlu0 %v2810, 24
      %v3603 = vpop.permute.xlu0 %3602
      %3604 = vrot.lane.b32.xlu0 %v2811, 24
      %v3605 = vpop.permute.xlu0 %3604
      %3606 = vrot.lane.b32.xlu0 %v2812, 24
      %v3607 = vpop.permute.xlu0 %3606
      %3608 = vrot.lane.b32.xlu0 %v2813, 24
      %v3609 = vpop.permute.xlu0 %3608
      %3610 = vrot.lane.b32.xlu0 %v2814, 24
      %v3611 = vpop.permute.xlu0 %3610
      %3612 = vrot.lane.b32.xlu0 %v2815, 24
      %v3613 = vpop.permute.xlu0 %3612
      %3614 = vrot.lane.b32.xlu0 %v2816, 24
      %v3615 = vpop.permute.xlu0 %3614
      %3616 = vrot.lane.b32.xlu0 %v2817, 24
      %v3617 = vpop.permute.xlu0 %3616
      %3682 = vrot.lane.b32.xlu0 %v2818, 28
      %v3683 = vpop.permute.xlu0 %3682
      %3684 = vrot.lane.b32.xlu0 %v2819, 28
      %v3685 = vpop.permute.xlu0 %3684
      %3686 = vrot.lane.b32.xlu0 %v2820, 28
      %v3687 = vpop.permute.xlu0 %3686
      %3688 = vrot.lane.b32.xlu0 %v2821, 28
      %v3689 = vpop.permute.xlu0 %3688
      %3690 = vrot.lane.b32.xlu0 %v2822, 28
      %v3691 = vpop.permute.xlu0 %3690
      %3692 = vrot.lane.b32.xlu0 %v2823, 28
      %v3693 = vpop.permute.xlu0 %3692
      %3694 = vrot.lane.b32.xlu0 %v2824, 28
      %v3695 = vpop.permute.xlu0 %3694
      %3696 = vrot.lane.b32.xlu0 %v2825, 28
      %v3697 = vpop.permute.xlu0 %3696
      %3698 = vrot.lane.b32.xlu0 %v2826, 28
      %v3699 = vpop.permute.xlu0 %3698
      %3700 = vrot.lane.b32.xlu0 %v2827, 28
      %v3701 = vpop.permute.xlu0 %3700
      %3702 = vrot.lane.b32.xlu0 %v2828, 28
      %v3703 = vpop.permute.xlu0 %3702
      %3704 = vrot.lane.b32.xlu0 %v2829, 28
      %v3705 = vpop.permute.xlu0 %3704
      %3706 = vrot.lane.b32.xlu0 %v2830, 28
      %v3707 = vpop.permute.xlu0 %3706
      %3708 = vrot.lane.b32.xlu0 %v2831, 28
      %v3709 = vpop.permute.xlu0 %3708
      %3710 = vrot.lane.b32.xlu0 %v2832, 28
      %v3711 = vpop.permute.xlu0 %3710
      %3712 = vrot.lane.b32.xlu0 %v2833, 28
      %v3713 = vpop.permute.xlu0 %3712
      %3714 = vrot.lane.b32.xlu0 %v2834, 28
      %v3715 = vpop.permute.xlu0 %3714
      %3716 = vrot.lane.b32.xlu0 %v2835, 28
      %v3717 = vpop.permute.xlu0 %3716
      %3718 = vrot.lane.b32.xlu0 %v2836, 28
      %v3719 = vpop.permute.xlu0 %3718
      %3720 = vrot.lane.b32.xlu0 %v2837, 28
      %v3721 = vpop.permute.xlu0 %3720
      %3722 = vrot.lane.b32.xlu0 %v2838, 28
      %v3723 = vpop.permute.xlu0 %3722
      %3724 = vrot.lane.b32.xlu0 %v2839, 28
      %v3725 = vpop.permute.xlu0 %3724
      %3726 = vrot.lane.b32.xlu0 %v2840, 28
      %v3727 = vpop.permute.xlu0 %3726
      %3728 = vrot.lane.b32.xlu0 %v2841, 28
      %v3729 = vpop.permute.xlu0 %3728
      %3730 = vrot.lane.b32.xlu0 %v2842, 28
      %v3731 = vpop.permute.xlu0 %3730
      %3732 = vrot.lane.b32.xlu0 %v2843, 28
      %v3733 = vpop.permute.xlu0 %3732
      %3734 = vrot.lane.b32.xlu0 %v2844, 28
      %v3735 = vpop.permute.xlu0 %3734
      %3736 = vrot.lane.b32.xlu0 %v2845, 28
      %v3737 = vpop.permute.xlu0 %3736
      %3738 = vrot.lane.b32.xlu0 %v2846, 28
      %v3739 = vpop.permute.xlu0 %3738
      %3740 = vrot.lane.b32.xlu0 %v2847, 28
      %v3741 = vpop.permute.xlu0 %3740
      %3742 = vrot.lane.b32.xlu0 %v2848, 28
      %v3743 = vpop.permute.xlu0 %3742
      %3744 = vrot.lane.b32.xlu0 %v2849, 28
      %v3745 = vpop.permute.xlu0 %3744
      %3810 = vrot.lane.b32.xlu0 %v2850, 32
      %v3811 = vpop.permute.xlu0 %3810
      %3812 = vrot.lane.b32.xlu0 %v2851, 32
      %v3813 = vpop.permute.xlu0 %3812
      %3814 = vrot.lane.b32.xlu0 %v2852, 32
      %v3815 = vpop.permute.xlu0 %3814
      %3816 = vrot.lane.b32.xlu0 %v2853, 32
      %v3817 = vpop.permute.xlu0 %3816
      %3818 = vrot.lane.b32.xlu0 %v2854, 32
      %v3819 = vpop.permute.xlu0 %3818
      %3820 = vrot.lane.b32.xlu0 %v2855, 32
      %v3821 = vpop.permute.xlu0 %3820
      %3822 = vrot.lane.b32.xlu0 %v2856, 32
      %v3823 = vpop.permute.xlu0 %3822
      %3824 = vrot.lane.b32.xlu0 %v2857, 32
      %v3825 = vpop.permute.xlu0 %3824
      %3826 = vrot.lane.b32.xlu0 %v2858, 32
      %v3827 = vpop.permute.xlu0 %3826
      %3828 = vrot.lane.b32.xlu0 %v2859, 32
      %v3829 = vpop.permute.xlu0 %3828
      %3830 = vrot.lane.b32.xlu0 %v2860, 32
      %v3831 = vpop.permute.xlu0 %3830
      %3832 = vrot.lane.b32.xlu0 %v2861, 32
      %v3833 = vpop.permute.xlu0 %3832
      %3834 = vrot.lane.b32.xlu0 %v2862, 32
      %v3835 = vpop.permute.xlu0 %3834
      %3836 = vrot.lane.b32.xlu0 %v2863, 32
      %v3837 = vpop.permute.xlu0 %3836
      %3838 = vrot.lane.b32.xlu0 %v2864, 32
      %v3839 = vpop.permute.xlu0 %3838
      %3840 = vrot.lane.b32.xlu0 %v2865, 32
      %v3841 = vpop.permute.xlu0 %3840
      %3842 = vrot.lane.b32.xlu0 %v2866, 32
      %v3843 = vpop.permute.xlu0 %3842
      %3844 = vrot.lane.b32.xlu0 %v2867, 32
      %v3845 = vpop.permute.xlu0 %3844
      %3846 = vrot.lane.b32.xlu0 %v2868, 32
      %v3847 = vpop.permute.xlu0 %3846
      %3848 = vrot.lane.b32.xlu0 %v2869, 32
      %v3849 = vpop.permute.xlu0 %3848
      %3850 = vrot.lane.b32.xlu0 %v2870, 32
      %v3851 = vpop.permute.xlu0 %3850
      %3852 = vrot.lane.b32.xlu0 %v2871, 32
      %v3853 = vpop.permute.xlu0 %3852
      %3854 = vrot.lane.b32.xlu0 %v2872, 32
      %v3855 = vpop.permute.xlu0 %3854
      %3856 = vrot.lane.b32.xlu0 %v2873, 32
      %v3857 = vpop.permute.xlu0 %3856
      %3858 = vrot.lane.b32.xlu0 %v2874, 32
      %v3859 = vpop.permute.xlu0 %3858
      %3860 = vrot.lane.b32.xlu0 %v2875, 32
      %v3861 = vpop.permute.xlu0 %3860
      %3862 = vrot.lane.b32.xlu0 %v2876, 32
      %v3863 = vpop.permute.xlu0 %3862
      %3864 = vrot.lane.b32.xlu0 %v2877, 32
      %v3865 = vpop.permute.xlu0 %3864
      %3866 = vrot.lane.b32.xlu0 %v2878, 32
      %v3867 = vpop.permute.xlu0 %3866
      %3868 = vrot.lane.b32.xlu0 %v2879, 32
      %v3869 = vpop.permute.xlu0 %3868
      %3870 = vrot.lane.b32.xlu0 %v2880, 32
      %v3871 = vpop.permute.xlu0 %3870
      %3872 = vrot.lane.b32.xlu0 %v2881, 32
      %v3873 = vpop.permute.xlu0 %3872
      %v3906 = vsel %vm307, %v2593, %v2915
      %v3907 = vsel %vm307, %v2594, %v2917
      %v3908 = vsel %vm307, %v2595, %v2919
      %v3909 = vsel %vm307, %v2596, %v2921
      %v3910 = vsel %vm307, %v2597, %v2923
      %v3911 = vsel %vm307, %v2598, %v2925
      %v3912 = vsel %vm307, %v2599, %v2927
      %v3913 = vsel %vm307, %v2600, %v2929
      %v3914 = vsel %vm307, %v2601, %v2931
      %v3915 = vsel %vm307, %v2602, %v2933
      %v3916 = vsel %vm307, %v2603, %v2935
      %v3917 = vsel %vm307, %v2604, %v2937
      %v3918 = vsel %vm307, %v2605, %v2939
      %v3919 = vsel %vm307, %v2606, %v2941
      %v3920 = vsel %vm307, %v2607, %v2943
      %v3921 = vsel %vm307, %v2608, %v2945
      %v3922 = vsel %vm307, %v2609, %v2947
      %v3923 = vsel %vm307, %v2610, %v2949
      %v3924 = vsel %vm307, %v2611, %v2951
      %v3925 = vsel %vm307, %v2612, %v2953
      %v3926 = vsel %vm307, %v2613, %v2955
      %v3927 = vsel %vm307, %v2614, %v2957
      %v3928 = vsel %vm307, %v2615, %v2959
      %v3929 = vsel %vm307, %v2616, %v2961
      %v3930 = vsel %vm307, %v2617, %v2963
      %v3931 = vsel %vm307, %v2618, %v2965
      %v3932 = vsel %vm307, %v2619, %v2967
      %v3933 = vsel %vm307, %v2620, %v2969
      %v3934 = vsel %vm307, %v2621, %v2971
      %v3935 = vsel %vm307, %v2622, %v2973
      %v3936 = vsel %vm307, %v2623, %v2975
      %v3937 = vsel %vm307, %v2624, %v2977
      %v3938 = vsel %vm1969, %v3906, %v3043
      %v3939 = vsel %vm1969, %v3907, %v3045
      %v3940 = vsel %vm1969, %v3908, %v3047
      %v3941 = vsel %vm1969, %v3909, %v3049
      %v3942 = vsel %vm1969, %v3910, %v3051
      %v3943 = vsel %vm1969, %v3911, %v3053
      %v3944 = vsel %vm1969, %v3912, %v3055
      %v3945 = vsel %vm1969, %v3913, %v3057
      %v3946 = vsel %vm1969, %v3914, %v3059
      %v3947 = vsel %vm1969, %v3915, %v3061
      %v3948 = vsel %vm1969, %v3916, %v3063
      %v3949 = vsel %vm1969, %v3917, %v3065
      %v3950 = vsel %vm1969, %v3918, %v3067
      %v3951 = vsel %vm1969, %v3919, %v3069
      %v3952 = vsel %vm1969, %v3920, %v3071
      %v3953 = vsel %vm1969, %v3921, %v3073
      %v3954 = vsel %vm1969, %v3922, %v3075
      %v3955 = vsel %vm1969, %v3923, %v3077
      %v3956 = vsel %vm1969, %v3924, %v3079
      %v3957 = vsel %vm1969, %v3925, %v3081
      %v3958 = vsel %vm1969, %v3926, %v3083
      %v3959 = vsel %vm1969, %v3927, %v3085
      %v3960 = vsel %vm1969, %v3928, %v3087
      %v3961 = vsel %vm1969, %v3929, %v3089
      %v3962 = vsel %vm1969, %v3930, %v3091
      %v3963 = vsel %vm1969, %v3931, %v3093
      %v3964 = vsel %vm1969, %v3932, %v3095
      %v3965 = vsel %vm1969, %v3933, %v3097
      %v3966 = vsel %vm1969, %v3934, %v3099
      %v3967 = vsel %vm1969, %v3935, %v3101
      %v3968 = vsel %vm1969, %v3936, %v3103
      %v3969 = vsel %vm1969, %v3937, %v3105
      %v3970 = vsel %vm2002, %v3938, %v3171
      %v3971 = vsel %vm2002, %v3939, %v3173
      %v3972 = vsel %vm2002, %v3940, %v3175
      %v3973 = vsel %vm2002, %v3941, %v3177
      %v3974 = vsel %vm2002, %v3942, %v3179
      %v3975 = vsel %vm2002, %v3943, %v3181
      %v3976 = vsel %vm2002, %v3944, %v3183
      %v3977 = vsel %vm2002, %v3945, %v3185
      %v3978 = vsel %vm2002, %v3946, %v3187
      %v3979 = vsel %vm2002, %v3947, %v3189
      %v3980 = vsel %vm2002, %v3948, %v3191
      %v3981 = vsel %vm2002, %v3949, %v3193
      %v3982 = vsel %vm2002, %v3950, %v3195
      %v3983 = vsel %vm2002, %v3951, %v3197
      %v3984 = vsel %vm2002, %v3952, %v3199
      %v3985 = vsel %vm2002, %v3953, %v3201
      %v3986 = vsel %vm2002, %v3954, %v3203
      %v3987 = vsel %vm2002, %v3955, %v3205
      %v3988 = vsel %vm2002, %v3956, %v3207
      %v3989 = vsel %vm2002, %v3957, %v3209
      %v3990 = vsel %vm2002, %v3958, %v3211
      %v3991 = vsel %vm2002, %v3959, %v3213
      %v3992 = vsel %vm2002, %v3960, %v3215
      %v3993 = vsel %vm2002, %v3961, %v3217
      %v3994 = vsel %vm2002, %v3962, %v3219
      %v3995 = vsel %vm2002, %v3963, %v3221
      %v3996 = vsel %vm2002, %v3964, %v3223
      %v3997 = vsel %vm2002, %v3965, %v3225
      %v3998 = vsel %vm2002, %v3966, %v3227
      %v3999 = vsel %vm2002, %v3967, %v3229
      %v4000 = vsel %vm2002, %v3968, %v3231
      %v4001 = vsel %vm2002, %v3969, %v3233
      %v4002 = vsel %vm2035, %v3970, %v3299
      %v4003 = vsel %vm2035, %v3971, %v3301
      %v4004 = vsel %vm2035, %v3972, %v3303
      %v4005 = vsel %vm2035, %v3973, %v3305
      %v4006 = vsel %vm2035, %v3974, %v3307
      %v4007 = vsel %vm2035, %v3975, %v3309
      %v4008 = vsel %vm2035, %v3976, %v3311
      %v4009 = vsel %vm2035, %v3977, %v3313
      %v4010 = vsel %vm2035, %v3978, %v3315
      %v4011 = vsel %vm2035, %v3979, %v3317
      %v4012 = vsel %vm2035, %v3980, %v3319
      %v4013 = vsel %vm2035, %v3981, %v3321
      %v4014 = vsel %vm2035, %v3982, %v3323
      %v4015 = vsel %vm2035, %v3983, %v3325
      %v4016 = vsel %vm2035, %v3984, %v3327
      %v4017 = vsel %vm2035, %v3985, %v3329
      %v4018 = vsel %vm2035, %v3986, %v3331
      %v4019 = vsel %vm2035, %v3987, %v3333
      %v4020 = vsel %vm2035, %v3988, %v3335
      %v4021 = vsel %vm2035, %v3989, %v3337
      %v4022 = vsel %vm2035, %v3990, %v3339
      %v4023 = vsel %vm2035, %v3991, %v3341
      %v4024 = vsel %vm2035, %v3992, %v3343
      %v4025 = vsel %vm2035, %v3993, %v3345
      %v4026 = vsel %vm2035, %v3994, %v3347
      %v4027 = vsel %vm2035, %v3995, %v3349
      %v4028 = vsel %vm2035, %v3996, %v3351
      %v4029 = vsel %vm2035, %v3997, %v3353
      %v4030 = vsel %vm2035, %v3998, %v3355
      %v4031 = vsel %vm2035, %v3999, %v3357
      %v4032 = vsel %vm2035, %v4000, %v3359
      %v4033 = vsel %vm2035, %v4001, %v3361
      %v4034 = vsel %vm2068, %v4002, %v3427
      %v4035 = vsel %vm2068, %v4003, %v3429
      %v4036 = vsel %vm2068, %v4004, %v3431
      %v4037 = vsel %vm2068, %v4005, %v3433
      %v4038 = vsel %vm2068, %v4006, %v3435
      %v4039 = vsel %vm2068, %v4007, %v3437
      %v4040 = vsel %vm2068, %v4008, %v3439
      %v4041 = vsel %vm2068, %v4009, %v3441
      %v4042 = vsel %vm2068, %v4010, %v3443
      %v4043 = vsel %vm2068, %v4011, %v3445
      %v4044 = vsel %vm2068, %v4012, %v3447
      %v4045 = vsel %vm2068, %v4013, %v3449
      %v4046 = vsel %vm2068, %v4014, %v3451
      %v4047 = vsel %vm2068, %v4015, %v3453
      %v4048 = vsel %vm2068, %v4016, %v3455
      %v4049 = vsel %vm2068, %v4017, %v3457
      %v4050 = vsel %vm2068, %v4018, %v3459
      %v4051 = vsel %vm2068, %v4019, %v3461
      %v4052 = vsel %vm2068, %v4020, %v3463
      %v4053 = vsel %vm2068, %v4021, %v3465
      %v4054 = vsel %vm2068, %v4022, %v3467
      %v4055 = vsel %vm2068, %v4023, %v3469
      %v4056 = vsel %vm2068, %v4024, %v3471
      %v4057 = vsel %vm2068, %v4025, %v3473
      %v4058 = vsel %vm2068, %v4026, %v3475
      %v4059 = vsel %vm2068, %v4027, %v3477
      %v4060 = vsel %vm2068, %v4028, %v3479
      %v4061 = vsel %vm2068, %v4029, %v3481
      %v4062 = vsel %vm2068, %v4030, %v3483
      %v4063 = vsel %vm2068, %v4031, %v3485
      %v4064 = vsel %vm2068, %v4032, %v3487
      %v4065 = vsel %vm2068, %v4033, %v3489
      %v4066 = vsel %vm2101, %v4034, %v3555
      %v4067 = vsel %vm2101, %v4035, %v3557
      %v4068 = vsel %vm2101, %v4036, %v3559
      %v4069 = vsel %vm2101, %v4037, %v3561
      %v4070 = vsel %vm2101, %v4038, %v3563
      %v4071 = vsel %vm2101, %v4039, %v3565
      %v4072 = vsel %vm2101, %v4040, %v3567
      %v4073 = vsel %vm2101, %v4041, %v3569
      %v4074 = vsel %vm2101, %v4042, %v3571
      %v4075 = vsel %vm2101, %v4043, %v3573
      %v4076 = vsel %vm2101, %v4044, %v3575
      %v4077 = vsel %vm2101, %v4045, %v3577
      %v4078 = vsel %vm2101, %v4046, %v3579
      %v4079 = vsel %vm2101, %v4047, %v3581
      %v4080 = vsel %vm2101, %v4048, %v3583
      %v4081 = vsel %vm2101, %v4049, %v3585
      %v4082 = vsel %vm2101, %v4050, %v3587
      %v4083 = vsel %vm2101, %v4051, %v3589
      %v4084 = vsel %vm2101, %v4052, %v3591
      %v4085 = vsel %vm2101, %v4053, %v3593
      %v4086 = vsel %vm2101, %v4054, %v3595
      %v4087 = vsel %vm2101, %v4055, %v3597
      %v4088 = vsel %vm2101, %v4056, %v3599
      %v4089 = vsel %vm2101, %v4057, %v3601
      %v4090 = vsel %vm2101, %v4058, %v3603
      %v4091 = vsel %vm2101, %v4059, %v3605
      %v4092 = vsel %vm2101, %v4060, %v3607
      %v4093 = vsel %vm2101, %v4061, %v3609
      %v4094 = vsel %vm2101, %v4062, %v3611
      %v4095 = vsel %vm2101, %v4063, %v3613
      %v4096 = vsel %vm2101, %v4064, %v3615
      %v4097 = vsel %vm2101, %v4065, %v3617
      %v4098 = vsel %vm2134, %v4066, %v3683
      %v4099 = vsel %vm2134, %v4067, %v3685
      %v4100 = vsel %vm2134, %v4068, %v3687
      %v4101 = vsel %vm2134, %v4069, %v3689
      %v4102 = vsel %vm2134, %v4070, %v3691
      %v4103 = vsel %vm2134, %v4071, %v3693
      %v4104 = vsel %vm2134, %v4072, %v3695
      %v4105 = vsel %vm2134, %v4073, %v3697
      %v4106 = vsel %vm2134, %v4074, %v3699
      %v4107 = vsel %vm2134, %v4075, %v3701
      %v4108 = vsel %vm2134, %v4076, %v3703
      %v4109 = vsel %vm2134, %v4077, %v3705
      %v4110 = vsel %vm2134, %v4078, %v3707
      %v4111 = vsel %vm2134, %v4079, %v3709
      %v4112 = vsel %vm2134, %v4080, %v3711
      %v4113 = vsel %vm2134, %v4081, %v3713
      %v4114 = vsel %vm2134, %v4082, %v3715
      %v4115 = vsel %vm2134, %v4083, %v3717
      %v4116 = vsel %vm2134, %v4084, %v3719
      %v4117 = vsel %vm2134, %v4085, %v3721
      %v4118 = vsel %vm2134, %v4086, %v3723
      %v4119 = vsel %vm2134, %v4087, %v3725
      %v4120 = vsel %vm2134, %v4088, %v3727
      %v4121 = vsel %vm2134, %v4089, %v3729
      %v4122 = vsel %vm2134, %v4090, %v3731
      %v4123 = vsel %vm2134, %v4091, %v3733
      %v4124 = vsel %vm2134, %v4092, %v3735
      %v4125 = vsel %vm2134, %v4093, %v3737
      %v4126 = vsel %vm2134, %v4094, %v3739
      %v4127 = vsel %vm2134, %v4095, %v3741
      %v4128 = vsel %vm2134, %v4096, %v3743
      %v4129 = vsel %vm2134, %v4097, %v3745
      %v4130 = vsel %vm2167, %v4098, %v3811
      %v4131 = vsel %vm2167, %v4099, %v3813
      %v4132 = vsel %vm2167, %v4100, %v3815
      %v4133 = vsel %vm2167, %v4101, %v3817
      %v4134 = vsel %vm2167, %v4102, %v3819
      %v4135 = vsel %vm2167, %v4103, %v3821
      %v4136 = vsel %vm2167, %v4104, %v3823
      %v4137 = vsel %vm2167, %v4105, %v3825
      %v4138 = vsel %vm2167, %v4106, %v3827
      %v4139 = vsel %vm2167, %v4107, %v3829
      %v4140 = vsel %vm2167, %v4108, %v3831
      %v4141 = vsel %vm2167, %v4109, %v3833
      %v4142 = vsel %vm2167, %v4110, %v3835
      %v4143 = vsel %vm2167, %v4111, %v3837
      %v4144 = vsel %vm2167, %v4112, %v3839
      %v4145 = vsel %vm2167, %v4113, %v3841
      %v4146 = vsel %vm2167, %v4114, %v3843
      %v4147 = vsel %vm2167, %v4115, %v3845
      %v4148 = vsel %vm2167, %v4116, %v3847
      %v4149 = vsel %vm2167, %v4117, %v3849
      %v4150 = vsel %vm2167, %v4118, %v3851
      %v4151 = vsel %vm2167, %v4119, %v3853
      %v4152 = vsel %vm2167, %v4120, %v3855
      %v4153 = vsel %vm2167, %v4121, %v3857
      %v4154 = vsel %vm2167, %v4122, %v3859
      %v4155 = vsel %vm2167, %v4123, %v3861
      %v4156 = vsel %vm2167, %v4124, %v3863
      %v4157 = vsel %vm2167, %v4125, %v3865
      %v4158 = vsel %vm2167, %v4126, %v3867
      %v4159 = vsel %vm2167, %v4127, %v3869
      %v4160 = vsel %vm2167, %v4128, %v3871
      %v4161 = vsel %vm2167, %v4129, %v3873
      %v4162 = vpack.c.bf16 %v4131, %v4130
      %v4163 = vpack.c.bf16 %v4133, %v4132
      %v4164 = vpack.c.bf16 %v4135, %v4134
      %v4165 = vpack.c.bf16 %v4137, %v4136
      %v4166 = vpack.c.bf16 %v4139, %v4138
      %v4167 = vpack.c.bf16 %v4141, %v4140
      %v4168 = vpack.c.bf16 %v4143, %v4142
      %v4169 = vpack.c.bf16 %v4145, %v4144
      %v4170 = vpack.c.bf16 %v4147, %v4146
      %v4171 = vpack.c.bf16 %v4149, %v4148
      %v4172 = vpack.c.bf16 %v4151, %v4150
      %v4173 = vpack.c.bf16 %v4153, %v4152
      %v4174 = vpack.c.bf16 %v4155, %v4154
      %v4175 = vpack.c.bf16 %v4157, %v4156
      %v4176 = vpack.c.bf16 %v4159, %v4158
      %v4177 = vpack.c.bf16 %v4161, %v4160
      %v4178 = vld [vmem:[%s2] sm:$0xf]
      %v4179 = vld [vmem:[%s2 + $0x4] sm:$0xf]
      %v4180 = vld [vmem:[%s2 + $0x8] sm:$0xf]
      %v4181 = vld [vmem:[%s2 + $0xc] sm:$0xf]
      %v4182 = vld [vmem:[%s2 + $0x10] sm:$0x3]
      %v4183 = vld [vmem:[%s7] sm:$0x1]
      %v4185 = vlaneseq
      %v4186 = vshrl.u32 %v4185, 7
      %v4187 = vsub.s32 0, %v4186
      %v4188 = vrot.slane %v4183, %v4187
      %v4195 = vunpack.c.l.b16 %v4178
      %v4196 = vunpack.c.l.b16 %v4179
      %v4197 = vunpack.c.l.b16 %v4180
      %v4198 = vunpack.c.l.b16 %v4181
      %v4199 = vunpack.c.l.b16 %v4182
      %v4200 = vpack.c.b16 %v4196, %v4195
      %v4201 = vpack.c.b16 %v4198, %v4197
      %v4202 = vpack.c.b16 %v4199, %v4199
      %v4206 = vsel %vm2236, %v4162, 0
      %v4209 = vsel %vm2236, %v4163, 0
      %v4212 = vsel %vm2236, %v4164, 0
      %v4215 = vsel %vm2236, %v4165, 0
      %v4218 = vsel %vm2236, %v4166, 0
      %v4221 = vsel %vm2236, %v4167, 0
      %v4224 = vsel %vm2236, %v4168, 0
      %v4227 = vsel %vm2236, %v4169, 0
      %v4230 = vsel %vm2236, %v4170, 0
      %v4233 = vsel %vm2236, %v4171, 0
      %v4236 = vsel %vm2236, %v4172, 0
      %v4239 = vsel %vm2236, %v4173, 0
      %v4242 = vsel %vm2236, %v4174, 0
      %v4245 = vsel %vm2236, %v4175, 0
      %v4248 = vsel %vm2236, %v4176, 0
      %v4251 = vsel %vm2236, %v4177, 0
      %v4254 = vsel %vm2285, %v4202, 0
      %4256 = vmatprep.subr.bf16.mxu0 0
      %4257 = vmatpush1.bf16.msra.mxu0 %v4200
      %4258 = vmatprep.subr.bf16.mxu0 0
      %4259 = vmatpush1.bf16.msra.mxu0 %v4201
      %4260 = vmatprep.subr.bf16.mxu0 0
      %4261 = vmatpush1.bf16.msra.mxu0 %v4254
      %4262 = vmatprep.subr.bf16.mxu0 0
      %4263 = vmatpush1.bf16.msra.mxu0 0
      %4264 = vmatprep.subr.bf16.mxu0 0
      %4265 = vmatpush1.bf16.msra.mxu0 0
      %4266 = vmatprep.subr.bf16.mxu0 0
      %4267 = vmatpush1.bf16.msra.mxu0 0
      %4268 = vmatprep.subr.bf16.mxu0 0
      %4269 = vmatpush1.bf16.msra.mxu0 0
      %4270 = vmatprep.subr.bf16.mxu0 0
      %4271 = vmatpush1.bf16.msra.mxu0 0
      %4272 = vmatprep.subr.bf16.mxu0 0
      %4273 = vmatpush1.bf16.msra.mxu0 0
      %4274 = vmatprep.subr.bf16.mxu0 0
      %4275 = vmatpush1.bf16.msra.mxu0 0
      %4276 = vmatprep.subr.bf16.mxu0 0
      %4277 = vmatpush1.bf16.msra.mxu0 0
      %4278 = vmatprep.subr.bf16.mxu0 0
      %4279 = vmatpush1.bf16.msra.mxu0 0
      %4280 = vmatprep.subr.bf16.mxu0 0
      %4281 = vmatpush1.bf16.msra.mxu0 0
      %4282 = vmatprep.subr.bf16.mxu0 0
      %4283 = vmatpush1.bf16.msra.mxu0 0
      %4284 = vmatprep.subr.bf16.mxu0 0
      %4285 = vmatpush1.bf16.msra.mxu0 0
      %4286 = vmatprep.subr.bf16.mxu0 0
      %4287 = vmatpush1.bf16.msra.mxu0 0
      %4288 = vmatprep.mubr.bf16.mxu0 0
      %4289 = vmatmul.mubr.bf16.gmra.mrb[0].mxu0 %v4206
      %v4290 = vpop.f32.mrb[0].mxu0
      %v4291 = vadd.f32 %v4188, %v4290
      %v4292 = vpop.f32.mrb[0].mxu0
      %v4293 = vpop.f32.mrb[0].mxu0
      %v4294 = vadd.f32 %v4188, %v4293
      %v4295 = vpop.f32.mrb[0].mxu0
      %4296 = vmatprep.mubr.bf16.mxu0 0
      %4297 = vmatmul.mubr.bf16.gmra.mrb[0].mxu0 %v4209
      %v4298 = vpop.f32.mrb[0].mxu0
      %v4299 = vadd.f32 %v4188, %v4298
      %v4300 = vpop.f32.mrb[0].mxu0
      %v4301 = vpop.f32.mrb[0].mxu0
      %v4302 = vadd.f32 %v4188, %v4301
      %v4303 = vpop.f32.mrb[0].mxu0
      %4304 = vmatprep.mubr.bf16.mxu0 0
      %4305 = vmatmul.mubr.bf16.gmra.mrb[0].mxu0 %v4212
      %v4306 = vpop.f32.mrb[0].mxu0
      %v4307 = vadd.f32 %v4188, %v4306
      %v4308 = vpop.f32.mrb[0].mxu0
      %v4309 = vpop.f32.mrb[0].mxu0
      %v4310 = vadd.f32 %v4188, %v4309
      %v4311 = vpop.f32.mrb[0].mxu0
      %4312 = vmatprep.mubr.bf16.mxu0 0
      %4313 = vmatmul.mubr.bf16.gmra.mrb[0].mxu0 %v4215
      %v4314 = vpop.f32.mrb[0].mxu0
      %v4315 = vadd.f32 %v4188, %v4314
      %v4316 = vpop.f32.mrb[0].mxu0
      %v4317 = vpop.f32.mrb[0].mxu0
      %v4318 = vadd.f32 %v4188, %v4317
      %v4319 = vpop.f32.mrb[0].mxu0
      %4320 = vmatprep.mubr.bf16.mxu0 0
      %4321 = vmatmul.mubr.bf16.gmra.mrb[0].mxu0 %v4218
      %v4322 = vpop.f32.mrb[0].mxu0
      %v4323 = vadd.f32 %v4188, %v4322
      %v4324 = vpop.f32.mrb[0].mxu0
      %v4325 = vpop.f32.mrb[0].mxu0
      %v4326 = vadd.f32 %v4188, %v4325
      %v4327 = vpop.f32.mrb[0].mxu0
      %4328 = vmatprep.mubr.bf16.mxu0 0
      %4329 = vmatmul.mubr.bf16.gmra.mrb[0].mxu0 %v4221
      %v4330 = vpop.f32.mrb[0].mxu0
      %v4331 = vadd.f32 %v4188, %v4330
      %v4332 = vpop.f32.mrb[0].mxu0
      %v4333 = vpop.f32.mrb[0].mxu0
      %v4334 = vadd.f32 %v4188, %v4333
      %v4335 = vpop.f32.mrb[0].mxu0
      %4336 = vmatprep.mubr.bf16.mxu0 0
      %4337 = vmatmul.mubr.bf16.gmra.mrb[0].mxu0 %v4224
      %v4338 = vpop.f32.mrb[0].mxu0
      %v4339 = vadd.f32 %v4188, %v4338
      %v4340 = vpop.f32.mrb[0].mxu0
      %v4341 = vpop.f32.mrb[0].mxu0
      %v4342 = vadd.f32 %v4188, %v4341
      %v4343 = vpop.f32.mrb[0].mxu0
      %4344 = vmatprep.mubr.bf16.mxu0 0
      %4345 = vmatmul.mubr.bf16.gmra.mrb[0].mxu0 %v4227
      %v4346 = vpop.f32.mrb[0].mxu0
      %v4347 = vadd.f32 %v4188, %v4346
      %v4348 = vpop.f32.mrb[0].mxu0
      %v4349 = vpop.f32.mrb[0].mxu0
      %v4350 = vadd.f32 %v4188, %v4349
      %v4351 = vpop.f32.mrb[0].mxu0
      %4352 = vmatprep.mubr.bf16.mxu0 0
      %4353 = vmatmul.mubr.bf16.gmra.mrb[0].mxu0 %v4230
      %v4354 = vpop.f32.mrb[0].mxu0
      %v4355 = vadd.f32 %v4188, %v4354
      %v4356 = vpop.f32.mrb[0].mxu0
      %v4357 = vpop.f32.mrb[0].mxu0
      %v4358 = vadd.f32 %v4188, %v4357
      %v4359 = vpop.f32.mrb[0].mxu0
      %4360 = vmatprep.mubr.bf16.mxu0 0
      %4361 = vmatmul.mubr.bf16.gmra.mrb[0].mxu0 %v4233
      %v4362 = vpop.f32.mrb[0].mxu0
      %v4363 = vadd.f32 %v4188, %v4362
      %v4364 = vpop.f32.mrb[0].mxu0
      %v4365 = vpop.f32.mrb[0].mxu0
      %v4366 = vadd.f32 %v4188, %v4365
      %v4367 = vpop.f32.mrb[0].mxu0
      %4368 = vmatprep.mubr.bf16.mxu0 0
      %4369 = vmatmul.mubr.bf16.gmra.mrb[0].mxu0 %v4236
      %v4370 = vpop.f32.mrb[0].mxu0
      %v4371 = vadd.f32 %v4188, %v4370
      %v4372 = vpop.f32.mrb[0].mxu0
      %v4373 = vpop.f32.mrb[0].mxu0
      %v4374 = vadd.f32 %v4188, %v4373
      %v4375 = vpop.f32.mrb[0].mxu0
      %4376 = vmatprep.mubr.bf16.mxu0 0
      %4377 = vmatmul.mubr.bf16.gmra.mrb[0].mxu0 %v4239
      %v4378 = vpop.f32.mrb[0].mxu0
      %v4379 = vadd.f32 %v4188, %v4378
      %v4380 = vpop.f32.mrb[0].mxu0
      %v4381 = vpop.f32.mrb[0].mxu0
      %v4382 = vadd.f32 %v4188, %v4381
      %v4383 = vpop.f32.mrb[0].mxu0
      %4384 = vmatprep.mubr.bf16.mxu0 0
      %4385 = vmatmul.mubr.bf16.gmra.mrb[0].mxu0 %v4242
      %v4386 = vpop.f32.mrb[0].mxu0
      %v4387 = vadd.f32 %v4188, %v4386
      %v4388 = vpop.f32.mrb[0].mxu0
      %v4389 = vpop.f32.mrb[0].mxu0
      %v4390 = vadd.f32 %v4188, %v4389
      %v4391 = vpop.f32.mrb[0].mxu0
      %4392 = vmatprep.mubr.bf16.mxu0 0
      %4393 = vmatmul.mubr.bf16.gmra.mrb[0].mxu0 %v4245
      %v4394 = vpop.f32.mrb[0].mxu0
      %v4395 = vadd.f32 %v4188, %v4394
      %v4396 = vpop.f32.mrb[0].mxu0
      %v4397 = vpop.f32.mrb[0].mxu0
      %v4398 = vadd.f32 %v4188, %v4397
      %v4399 = vpop.f32.mrb[0].mxu0
      %4400 = vmatprep.mubr.bf16.mxu0 0
      %4401 = vmatmul.mubr.bf16.gmra.mrb[0].mxu0 %v4248
      %v4402 = vpop.f32.mrb[0].mxu0
      %v4403 = vadd.f32 %v4188, %v4402
      %v4404 = vpop.f32.mrb[0].mxu0
      %v4405 = vpop.f32.mrb[0].mxu0
      %v4406 = vadd.f32 %v4188, %v4405
      %v4407 = vpop.f32.mrb[0].mxu0
      %4408 = vmatprep.mubr.bf16.mxu0 0
      %4409 = vmatmul.mubr.bf16.gmra.mrb[0].mxu0 %v4251
      %v4410 = vpop.f32.mrb[0].mxu0
      %v4411 = vadd.f32 %v4188, %v4410
      %v4412 = vpop.f32.mrb[0].mxu0
      %v4413 = vpop.f32.mrb[0].mxu0
      %v4414 = vadd.f32 %v4188, %v4413
      %v4415 = vpop.f32.mrb[0].mxu0
      %4416 = vdwg.mxu0
      %4417 = vst.msk [vmem:[%s305] sm:$0xff] %vm307, %v4291
      %4418 = vst.msk [vmem:[%s305 + $0x8] sm:$0xff] %vm307, %v4294
      %4419 = vst.msk [vmem:[%s305 + $0x10] sm:$0xff] %vm307, %v4299
      %4420 = vst.msk [vmem:[%s305 + $0x18] sm:$0xff] %vm307, %v4302
      %4421 = vst.msk [vmem:[%s305 + $0x20] sm:$0xff] %vm307, %v4307
      %4422 = vst.msk [vmem:[%s305 + $0x28] sm:$0xff] %vm307, %v4310
      %4423 = vst.msk [vmem:[%s305 + $0x30] sm:$0xff] %vm307, %v4315
      %4424 = vst.msk [vmem:[%s305 + $0x38] sm:$0xff] %vm307, %v4318
      %4425 = vst.msk [vmem:[%s305 + $0x40] sm:$0xff] %vm307, %v4323
      %4426 = vst.msk [vmem:[%s305 + $0x48] sm:$0xff] %vm307, %v4326
      %4427 = vst.msk [vmem:[%s305 + $0x50] sm:$0xff] %vm307, %v4331
      %4428 = vst.msk [vmem:[%s305 + $0x58] sm:$0xff] %vm307, %v4334
      %4429 = vst.msk [vmem:[%s305 + $0x60] sm:$0xff] %vm307, %v4339
      %4430 = vst.msk [vmem:[%s305 + $0x68] sm:$0xff] %vm307, %v4342
      %4431 = vst.msk [vmem:[%s305 + $0x70] sm:$0xff] %vm307, %v4347
      %4432 = vst.msk [vmem:[%s305 + $0x78] sm:$0xff] %vm307, %v4350
      %4433 = vst.msk [vmem:[%s305 + $0x80] sm:$0xff] %vm307, %v4355
      %4434 = vst.msk [vmem:[%s305 + $0x88] sm:$0xff] %vm307, %v4358
      %4435 = vst.msk [vmem:[%s305 + $0x90] sm:$0xff] %vm307, %v4363
      %4436 = vst.msk [vmem:[%s305 + $0x98] sm:$0xff] %vm307, %v4366
      %4437 = vst.msk [vmem:[%s305 + $0xa0] sm:$0xff] %vm307, %v4371
      %4438 = vst.msk [vmem:[%s305 + $0xa8] sm:$0xff] %vm307, %v4374
      %4439 = vst.msk [vmem:[%s305 + $0xb0] sm:$0xff] %vm307, %v4379
      %4440 = vst.msk [vmem:[%s305 + $0xb8] sm:$0xff] %vm307, %v4382
      %4441 = vst.msk [vmem:[%s305 + $0xc0] sm:$0xff] %vm307, %v4387
      %4442 = vst.msk [vmem:[%s305 + $0xc8] sm:$0xff] %vm307, %v4390
      %4443 = vst.msk [vmem:[%s305 + $0xd0] sm:$0xff] %vm307, %v4395
      %4444 = vst.msk [vmem:[%s305 + $0xd8] sm:$0xff] %vm307, %v4398
      %4445 = vst.msk [vmem:[%s305 + $0xe0] sm:$0xff] %vm307, %v4403
      %4446 = vst.msk [vmem:[%s305 + $0xe8] sm:$0xff] %vm307, %v4406
      %4447 = vst.msk [vmem:[%s305 + $0xf0] sm:$0xff] %vm307, %v4411
      %4448 = vst.msk [vmem:[%s305 + $0xf8] sm:$0xff] %vm307, %v4414
      %p4449 = scmp.lt.s32.totalorder %s19, 1
      %s4450 = scalar_select %p4449, %s19, 1
      %s4451 = smul.addr %s4450, 32
      %s4452 = smul.addr %s4451, 8
      %s4453 = scalar_lea.vmem %s8, %s4452
      // Predicated region
      $region53: #{convblock_forward.1} parent=51 // pred_check
        %p4454 = pneg %p210
      $region54: #{convblock_forward.1} parent=51 // pred_check_branch
        %4456 = sbr.rel (%p4454) target = $region56
      $region55: #{convblock_forward.1} parent=51 // pred_region
        _
      $region56: #{convblock_forward.1} parent=51 // pred_fallthru
        _
    $region52: #{convblock_forward.1} parent=5 // pred_fallthru
      _
    %p4457 = scmp.le.s32.totalorder 2, %s14
    // Predicated region
    $region57: #{convblock_forward.1} parent=5 // pred_check
      %p4458 = pneg %p4457
    $region58: #{convblock_forward.1} parent=5 // pred_check_branch
      %4460 = sbr.rel (%p4458) target = $region60
    $region59: #{convblock_forward.1} parent=5 // pred_region
      %s4461 = ssub.s32 %s14, 2
      // Predicated region
      $region61: #{convblock_forward.1} parent=59 // pred_check
        %p4462 = pneg %p216
      $region62: #{convblock_forward.1} parent=59 // pred_check_branch
        %4464 = sbr.rel (%p4462) target = $region64
      $region63: #{convblock_forward.1} parent=59 // pred_region
        %p4465 = scmp.lt.s32.totalorder %s20, 1
        %s4466 = scalar_select %p4465, %s20, 1
        %s4467 = smul.addr %s4466, 32
        %s4468 = smul.addr %s4467, 8
        %s4469 = scalar_lea.vmem %s8, %s4468
      $region64: #{convblock_forward.1} parent=59 // pred_fallthru
        _
    $region60: #{convblock_forward.1} parent=5 // pred_fallthru
      _
  $region6: #{convblock_forward.1} parent=0 // loop_footer
    %s18 = sadd.s32 1, %s14
  $region7: #{convblock_forward.1} parent=0 // loop_footer_branch
    %13 = sbr.rel target = $region3
  $region8: #{convblock_forward.1} parent=0 // loop_exit
    _

</llo_original>
